<compile_context>
chip_gen: v6e
topology: v6e:2x2x1
jax: 0.10.0
libtpu: 0.0.40
codegen_flags: <defaults>
</compile_context>

<pallas_src>
import functools

import jax
import jax.numpy as jnp
from jax import lax
from jax.experimental import pallas as pl
from jax.experimental.pallas import tpu as pltpu

K = 5     # conv kernel size
PAD = 2   # padding=2, stride=1 -> "same" spatial size


def _round_up(x, m):
    return (x + m - 1) // m * m


def res_block1_kernel(x_ref, w1_ref, b1_ref, w2_ref, b2_ref, o_ref, y1s_ref,
                      *, H, W, Wp, Cp, lead, alpha):
    """One batch element per grid step.

    x_ref  : (1, Cp, L) bf16 — zero-bordered image flattened with row stride Wp;
             padded-pixel (0,0) is at flat offset `lead`, real pixel (0,0) at `head`
             (head = lead + PAD*Wp + PAD, chosen 128-aligned by the wrapper).
    w*_ref : (Cp, 25*Cp) bf16 — tap t = dh*K+dw lives in columns [t*Cp, (t+1)*Cp).
    b*_ref : (Cp, 128) f32 — per-output-channel bias replicated along lanes.
    o_ref  : (1, Cp, H*Wp) f32 — lane-dense output (columns j >= W are junk,
             sliced off in the wrapper).
    y1s_ref: (Cp, L) bf16 VMEM scratch — padded conv1 output, reused every step.
    """
    HWp = H * Wp
    L = x_ref.shape[-1]
    head = lead + PAD * Wp + PAD          # 128-aligned flat offset of real pixel (0,0)

    xflat = x_ref[0]                      # (Cp, L) bf16

    def conv_taps(flat, w):
        # 25 per-tap matmuls accumulated in f32; no im2col concat is materialized.
        acc = jnp.zeros((Cp, HWp), jnp.float32)
        for dh in range(K):
            for dw in range(K):
                t = dh * K + dw
                w_tap = w[:, t * Cp:(t + 1) * Cp]                         # (Cout_p, Cin_p)
                s = lead + dh * Wp + dw
                piece = flat[:, s:s + HWp]                                # (Cin_p, HWp)
                acc = acc + jnp.dot(w_tap, piece,
                                    preferred_element_type=jnp.float32)
        return acc

    # Lane-validity mask: column o (relative to pixel (0,0)) is a real pixel iff
    # (o % Wp) < W.  Junk columns double as conv2's horizontal zero padding.
    lane = lax.broadcasted_iota(jnp.int32, (1, HWp), 1)
    valid = (lane % Wp) < W

    # ---- conv1 + bias, PReLU(alpha), zero the junk columns ----
    y1 = conv_taps(xflat, w1_ref[...]) + b1_ref[:, 0:1]
    y1 = jnp.where(y1 > 0, y1, alpha * y1)
    y1 = jnp.where(valid, y1, 0.0)

    # ---- re-pad y1 into the persistent scratch (aligned interior store + border fill) ----
    y1s_ref[:, 0:head] = jnp.zeros((Cp, head), y1s_ref.dtype)
    y1s_ref[:, head + HWp:L] = jnp.zeros((Cp, L - head - HWp), y1s_ref.dtype)
    y1s_ref[:, head:head + HWp] = y1.astype(y1s_ref.dtype)

    # ---- conv2 + bias ----
    y2 = conv_taps(y1s_ref[...], w2_ref[...]) + b2_ref[:, 0:1]

    # ---- residual add + ReLU; residual read from the interior of the loaded input ----
    x_res = xflat[:, head:head + HWp].astype(jnp.float32)
    o_ref[0] = jnp.maximum(x_res + y2, 0.0).astype(o_ref.dtype)


def _pack_weights(w, Cp):
    """(K,K,Cin,Cout) conv weight -> (Cp, K*K*Cp) bf16 per-tap matrices."""
    kh, kw, cin, cout = w.shape
    wk = jnp.transpose(w, (3, 0, 1, 2))                                 # (Cout, K, K, Cin)
    wk = jnp.pad(wk, ((0, Cp - cout), (0, 0), (0, 0), (0, Cp - cin)))   # (Cp, K, K, Cp)
    return wk.reshape(Cp, kh * kw * Cp).astype(jnp.bfloat16)


def _pack_bias(b, Cp):
    """(Cout,) bias -> (Cp, 128) f32, replicated along lanes."""
    bp = jnp.pad(b.astype(jnp.float32), (0, Cp - b.shape[0]))
    return jnp.tile(bp[:, None], (1, 128))


def res_block1_forward(x_nchw, w1, b1, alpha, w2, b2):
    """x_nchw: (N, C, H, W) f32.  w1/w2: (5, 5, Cin, Cout).  b1/b2: (Cout,)."""
    N, C, H, W = x_nchw.shape
    Cout = w1.shape[3]
    assert C == Cout, "residual add requires in_channels == out_channels"

    Cp = _round_up(C, 8)                       # channel pad -> full sublane tiles
    Wp = _round_up(W + 2 * PAD, 8)             # row stride in the flat layout
    HWp = H * Wp
    rows = H + 2 * PAD + 1                     # 2 top pad rows, >=2 bottom pad rows (+slack)
    lead = (-(PAD * Wp + PAD)) % 128           # leading zeros so pixel (0,0) is 128-aligned
    L = _round_up(lead + rows * Wp, 128)       # flat length (lane-aligned)

    # Zero-bordered, channel-padded, flattened bf16 input (no transposes).
    xp = jnp.zeros((N, Cp, rows, Wp), jnp.float32)
    xp = xp.at[:, :C, PAD:PAD + H, PAD:PAD + W].set(x_nchw)
    xflat = jnp.zeros((N, Cp, L), jnp.bfloat16)
    xflat = xflat.at[:, :, lead:lead + rows * Wp].set(
        xp.reshape(N, Cp, rows * Wp).astype(jnp.bfloat16))

    w1m = _pack_weights(w1, Cp)
    w2m = _pack_weights(w2, Cp)
    b1m = _pack_bias(b1, Cp)
    b2m = _pack_bias(b2, Cp)

    kern = functools.partial(res_block1_kernel, H=H, W=W, Wp=Wp, Cp=Cp,
                             lead=lead, alpha=float(alpha))
    out_flat = pl.pallas_call(
        kern,
        out_shape=jax.ShapeDtypeStruct((N, Cp, HWp), jnp.float32),
        grid=(N,),
        in_specs=[
            pl.BlockSpec((1, Cp, L), lambda n: (n, 0, 0)),           # padded flat input (bf16)
            pl.BlockSpec((Cp, K * K * Cp), lambda n: (0, 0)),        # conv1 tap weights (bf16)
            pl.BlockSpec((Cp, 128), lambda n: (0, 0)),               # conv1 bias (f32)
            pl.BlockSpec((Cp, K * K * Cp), lambda n: (0, 0)),        # conv2 tap weights (bf16)
            pl.BlockSpec((Cp, 128), lambda n: (0, 0)),               # conv2 bias (f32)
        ],
        out_specs=pl.BlockSpec((1, Cp, HWp), lambda n: (n, 0, 0)),
        scratch_shapes=[pltpu.VMEM((Cp, L), jnp.bfloat16)],          # padded y1 image
        compiler_params=pltpu.CompilerParams(
            dimension_semantics=("parallel",),
            vmem_limit_bytes=32 * 1024 * 1024),
    )(xflat, w1m, b1m, w2m, b2m)

    # Lane-dense kernel output -> NCHW via reshape + slice only (no transpose).
    # TODO(synk): for a fused pipeline, keep the lane-dense (N, Cp, H*Wp) layout as the
    # interchange format instead of paying this HBM reshape/slice round trip.
    return out_flat.reshape(N, Cp, H, Wp)[:, :Cout, :, :W]


def ref_forward(x, w1, b1, alpha, w2, b2):
    """Pure-JAX NCHW reference mirroring the kernel's bf16-input / f32-accumulate numerics."""
    q = lambda a: a.astype(jnp.bfloat16).astype(jnp.float32)

    def conv(v, w, b):
        w_oihw = jnp.transpose(w, (3, 2, 0, 1))
        y = lax.conv_general_dilated(
            v, w_oihw, window_strides=(1, 1), padding=((PAD, PAD), (PAD, PAD)),
            dimension_numbers=("NCHW", "OIHW", "NCHW"))
        return y + b.reshape(1, -1, 1, 1)

    xq = q(x)
    y = conv(xq, q(w1), b1)
    y = jnp.where(y > 0, y, alpha * y)   # PReLU (shared slope)
    y = conv(q(y), q(w2), b2)            # kernel stores y1 as bf16 before conv2
    return jnp.maximum(xq + y, 0.0)


if __name__ == "__main__":
    N, C, H, W = 2, 4, 16, 16   # in_channels == out_channels so the residual add is valid
    Cout = C

    key = jax.random.PRNGKey(0)
    kx, kw1, kb1, kw2, kb2 = jax.random.split(key, 5)

    x = jax.random.normal(kx, (N, C, H, W), dtype=jnp.float32)
    # Conv weights stored as (kh, kw, Cin, Cout).
    w1 = 0.1 * jax.random.normal(kw1, (K, K, C, Cout), dtype=jnp.float32)
    b1 = 0.05 * jax.random.normal(kb1, (Cout,), dtype=jnp.float32)
    w2 = 0.1 * jax.random.normal(kw2, (K, K, Cout, Cout), dtype=jnp.float32)
    b2 = 0.05 * jax.random.normal(kb2, (Cout,), dtype=jnp.float32)
    alpha = 0.25  # nn.PReLU default slope

    out = jax.block_until_ready(res_block1_forward(x, w1, b1, alpha, w2, b2))
    ref = jax.block_until_ready(ref_forward(x, w1, b1, alpha, w2, b2))

    assert out.shape == (N, Cout, H, W)
    err = float(jnp.max(jnp.abs(out - ref)))
    assert jnp.allclose(out, ref, atol=2e-3, rtol=2e-3), err

    print("KERNEL_OK")
</pallas_src>

<mosaic_0001>
module attributes {stable_mosaic.version = 11 : i64} {
  func.func @res_block1_kernel(%arg0: i32, %arg1: memref<1x8x640xbf16, #tpu.memory_space<vmem>>, %arg2: memref<8x200xbf16, #tpu.memory_space<vmem>>, %arg3: memref<8x128xf32, #tpu.memory_space<vmem>>, %arg4: memref<8x200xbf16, #tpu.memory_space<vmem>>, %arg5: memref<8x128xf32, #tpu.memory_space<vmem>>, %arg6: memref<1x8x384xf32, #tpu.memory_space<vmem>>, %arg7: memref<8x640xbf16, #tpu.memory_space<vmem>>) attributes {dimension_semantics = [#tpu.dimension_semantics<parallel>], iteration_bounds = array<i64: 2>, scalar_prefetch = 0 : i64, scratch_operands = 1 : i64, tpu.core_type = #tpu.core_type<tc>, window_params = [{transform_indices = @transform_0, window_bounds = array<i64: 1, 8, 640>}, {pipeline_mode = #tpu.pipeline_mode<synchronous>, transform_indices = @transform_1, window_bounds = array<i64: 8, 200>}, {pipeline_mode = #tpu.pipeline_mode<synchronous>, transform_indices = @transform_2, window_bounds = array<i64: 8, 128>}, {pipeline_mode = #tpu.pipeline_mode<synchronous>, transform_indices = @transform_3, window_bounds = array<i64: 8, 200>}, {pipeline_mode = #tpu.pipeline_mode<synchronous>, transform_indices = @transform_4, window_bounds = array<i64: 8, 128>}, {transform_indices = @transform_5, window_bounds = array<i64: 1, 8, 384>}]} {
    %c0 = arith.constant 0 : index
    %c0_0 = arith.constant 0 : index
    %c0_1 = arith.constant 0 : index
    %0 = vector.load %arg1[%c0, %c0_0, %c0_1] : memref<1x8x640xbf16, #tpu.memory_space<vmem>>, vector<1x8x640xbf16>
    %1 = vector.shape_cast %0 : vector<1x8x640xbf16> to vector<8x640xbf16>
    %2 = tpu.iota {dimensions = array<i32: 1>} : vector<1x384xi32>
    %c24_i32 = arith.constant 24 : i32
    %c0_i32 = arith.constant 0 : i32
    %3 = arith.cmpi eq, %c24_i32, %c0_i32 : i32
    %c1_i32 = arith.constant 1 : i32
    %4 = arith.select %3, %c1_i32, %c24_i32 : i32
    %5 = vector.broadcast %4 : i32 to vector<1x384xi32>
    %6 = arith.remsi %2, %5 : vector<1x384xi32>
    %c0_i32_2 = arith.constant 0 : i32
    %7 = vector.broadcast %c0_i32_2 : i32 to vector<1x384xi32>
    %8 = arith.cmpi ne, %6, %7 : vector<1x384xi32>
    %c0_i32_3 = arith.constant 0 : i32
    %9 = vector.broadcast %c0_i32_3 : i32 to vector<1x384xi32>
    %10 = arith.cmpi slt, %6, %9 : vector<1x384xi32>
    %c0_i32_4 = arith.constant 0 : i32
    %11 = arith.cmpi slt, %4, %c0_i32_4 : i32
    %12 = vector.broadcast %11 : i1 to vector<1x384xi1>
    %13 = vector.broadcast %12 : vector<1x384xi1> to vector<1x384xi1>
    %14 = arith.xori %10, %13 : vector<1x384xi1>
    %15 = arith.andi %14, %8 : vector<1x384xi1>
    %16 = vector.broadcast %4 : i32 to vector<1x384xi32>
    %17 = arith.addi %6, %16 : vector<1x384xi32>
    %18 = arith.select %15, %17, %6 : vector<1x384xi1>, vector<1x384xi32>
    %c16_i32 = arith.constant 16 : i32
    %19 = vector.broadcast %c16_i32 : i32 to vector<1x384xi32>
    %20 = arith.cmpi slt, %18, %19 : vector<1x384xi32>
    %c0_5 = arith.constant 0 : index
    %c0_6 = arith.constant 0 : index
    %21 = vector.load %arg2[%c0_5, %c0_6] : memref<8x200xbf16, #tpu.memory_space<vmem>>, vector<8x200xbf16>
    %cst = arith.constant 0.000000e+00 : f32
    %22 = vector.broadcast %cst : f32 to vector<8x384xf32>
    %23 = vector.extract_strided_slice %21 {offsets = [0, 0], sizes = [8, 8], strides = [1, 1]} : vector<8x200xbf16> to vector<8x8xbf16>
    %24 = vector.extract_strided_slice %1 {offsets = [0, 78], sizes = [8, 384], strides = [1, 1]} : vector<8x640xbf16> to vector<8x384xbf16>
    %cst_7 = arith.constant dense<0.000000e+00> : vector<8x384xf32>
    %25 = tpu.matmul %23, %24, %cst_7 {dimension_numbers = #tpu.dot_dimension_numbers<[1], [0], [0], [1], [0, 0, 1, 1], [], []>} : vector<8x8xbf16>, vector<8x384xbf16>, vector<8x384xf32> -> vector<8x384xf32>
    %26 = arith.addf %22, %25 : vector<8x384xf32>
    %27 = vector.extract_strided_slice %21 {offsets = [0, 8], sizes = [8, 8], strides = [1, 1]} : vector<8x200xbf16> to vector<8x8xbf16>
    %28 = vector.extract_strided_slice %1 {offsets = [0, 79], sizes = [8, 384], strides = [1, 1]} : vector<8x640xbf16> to vector<8x384xbf16>
    %cst_8 = arith.constant dense<0.000000e+00> : vector<8x384xf32>
    %29 = tpu.matmul %27, %28, %cst_8 {dimension_numbers = #tpu.dot_dimension_numbers<[1], [0], [0], [1], [0, 0, 1, 1], [], []>} : vector<8x8xbf16>, vector<8x384xbf16>, vector<8x384xf32> -> vector<8x384xf32>
    %30 = arith.addf %26, %29 : vector<8x384xf32>
    %31 = vector.extract_strided_slice %21 {offsets = [0, 16], sizes = [8, 8], strides = [1, 1]} : vector<8x200xbf16> to vector<8x8xbf16>
    %32 = vector.extract_strided_slice %1 {offsets = [0, 80], sizes = [8, 384], strides = [1, 1]} : vector<8x640xbf16> to vector<8x384xbf16>
    %cst_9 = arith.constant dense<0.000000e+00> : vector<8x384xf32>
    %33 = tpu.matmul %31, %32, %cst_9 {dimension_numbers = #tpu.dot_dimension_numbers<[1], [0], [0], [1], [0, 0, 1, 1], [], []>} : vector<8x8xbf16>, vector<8x384xbf16>, vector<8x384xf32> -> vector<8x384xf32>
    %34 = arith.addf %30, %33 : vector<8x384xf32>
    %35 = vector.extract_strided_slice %21 {offsets = [0, 24], sizes = [8, 8], strides = [1, 1]} : vector<8x200xbf16> to vector<8x8xbf16>
    %36 = vector.extract_strided_slice %1 {offsets = [0, 81], sizes = [8, 384], strides = [1, 1]} : vector<8x640xbf16> to vector<8x384xbf16>
    %cst_10 = arith.constant dense<0.000000e+00> : vector<8x384xf32>
    %37 = tpu.matmul %35, %36, %cst_10 {dimension_numbers = #tpu.dot_dimension_numbers<[1], [0], [0], [1], [0, 0, 1, 1], [], []>} : vector<8x8xbf16>, vector<8x384xbf16>, vector<8x384xf32> -> vector<8x384xf32>
    %38 = arith.addf %34, %37 : vector<8x384xf32>
    %39 = vector.extract_strided_slice %21 {offsets = [0, 32], sizes = [8, 8], strides = [1, 1]} : vector<8x200xbf16> to vector<8x8xbf16>
    %40 = vector.extract_strided_slice %1 {offsets = [0, 82], sizes = [8, 384], strides = [1, 1]} : vector<8x640xbf16> to vector<8x384xbf16>
    %cst_11 = arith.constant dense<0.000000e+00> : vector<8x384xf32>
    %41 = tpu.matmul %39, %40, %cst_11 {dimension_numbers = #tpu.dot_dimension_numbers<[1], [0], [0], [1], [0, 0, 1, 1], [], []>} : vector<8x8xbf16>, vector<8x384xbf16>, vector<8x384xf32> -> vector<8x384xf32>
    %42 = arith.addf %38, %41 : vector<8x384xf32>
    %43 = vector.extract_strided_slice %21 {offsets = [0, 40], sizes = [8, 8], strides = [1, 1]} : vector<8x200xbf16> to vector<8x8xbf16>
    %44 = vector.extract_strided_slice %1 {offsets = [0, 102], sizes = [8, 384], strides = [1, 1]} : vector<8x640xbf16> to vector<8x384xbf16>
    %cst_12 = arith.constant dense<0.000000e+00> : vector<8x384xf32>
    %45 = tpu.matmul %43, %44, %cst_12 {dimension_numbers = #tpu.dot_dimension_numbers<[1], [0], [0], [1], [0, 0, 1, 1], [], []>} : vector<8x8xbf16>, vector<8x384xbf16>, vector<8x384xf32> -> vector<8x384xf32>
    %46 = arith.addf %42, %45 : vector<8x384xf32>
    %47 = vector.extract_strided_slice %21 {offsets = [0, 48], sizes = [8, 8], strides = [1, 1]} : vector<8x200xbf16> to vector<8x8xbf16>
    %48 = vector.extract_strided_slice %1 {offsets = [0, 103], sizes = [8, 384], strides = [1, 1]} : vector<8x640xbf16> to vector<8x384xbf16>
    %cst_13 = arith.constant dense<0.000000e+00> : vector<8x384xf32>
    %49 = tpu.matmul %47, %48, %cst_13 {dimension_numbers = #tpu.dot_dimension_numbers<[1], [0], [0], [1], [0, 0, 1, 1], [], []>} : vector<8x8xbf16>, vector<8x384xbf16>, vector<8x384xf32> -> vector<8x384xf32>
    %50 = arith.addf %46, %49 : vector<8x384xf32>
    %51 = vector.extract_strided_slice %21 {offsets = [0, 56], sizes = [8, 8], strides = [1, 1]} : vector<8x200xbf16> to vector<8x8xbf16>
    %52 = vector.extract_strided_slice %1 {offsets = [0, 104], sizes = [8, 384], strides = [1, 1]} : vector<8x640xbf16> to vector<8x384xbf16>
    %cst_14 = arith.constant dense<0.000000e+00> : vector<8x384xf32>
    %53 = tpu.matmul %51, %52, %cst_14 {dimension_numbers = #tpu.dot_dimension_numbers<[1], [0], [0], [1], [0, 0, 1, 1], [], []>} : vector<8x8xbf16>, vector<8x384xbf16>, vector<8x384xf32> -> vector<8x384xf32>
    %54 = arith.addf %50, %53 : vector<8x384xf32>
    %55 = vector.extract_strided_slice %21 {offsets = [0, 64], sizes = [8, 8], strides = [1, 1]} : vector<8x200xbf16> to vector<8x8xbf16>
    %56 = vector.extract_strided_slice %1 {offsets = [0, 105], sizes = [8, 384], strides = [1, 1]} : vector<8x640xbf16> to vector<8x384xbf16>
    %cst_15 = arith.constant dense<0.000000e+00> : vector<8x384xf32>
    %57 = tpu.matmul %55, %56, %cst_15 {dimension_numbers = #tpu.dot_dimension_numbers<[1], [0], [0], [1], [0, 0, 1, 1], [], []>} : vector<8x8xbf16>, vector<8x384xbf16>, vector<8x384xf32> -> vector<8x384xf32>
    %58 = arith.addf %54, %57 : vector<8x384xf32>
    %59 = vector.extract_strided_slice %21 {offsets = [0, 72], sizes = [8, 8], strides = [1, 1]} : vector<8x200xbf16> to vector<8x8xbf16>
    %60 = vector.extract_strided_slice %1 {offsets = [0, 106], sizes = [8, 384], strides = [1, 1]} : vector<8x640xbf16> to vector<8x384xbf16>
    %cst_16 = arith.constant dense<0.000000e+00> : vector<8x384xf32>
    %61 = tpu.matmul %59, %60, %cst_16 {dimension_numbers = #tpu.dot_dimension_numbers<[1], [0], [0], [1], [0, 0, 1, 1], [], []>} : vector<8x8xbf16>, vector<8x384xbf16>, vector<8x384xf32> -> vector<8x384xf32>
    %62 = arith.addf %58, %61 : vector<8x384xf32>
    %63 = vector.extract_strided_slice %21 {offsets = [0, 80], sizes = [8, 8], strides = [1, 1]} : vector<8x200xbf16> to vector<8x8xbf16>
    %64 = vector.extract_strided_slice %1 {offsets = [0, 126], sizes = [8, 384], strides = [1, 1]} : vector<8x640xbf16> to vector<8x384xbf16>
    %cst_17 = arith.constant dense<0.000000e+00> : vector<8x384xf32>
    %65 = tpu.matmul %63, %64, %cst_17 {dimension_numbers = #tpu.dot_dimension_numbers<[1], [0], [0], [1], [0, 0, 1, 1], [], []>} : vector<8x8xbf16>, vector<8x384xbf16>, vector<8x384xf32> -> vector<8x384xf32>
    %66 = arith.addf %62, %65 : vector<8x384xf32>
    %67 = vector.extract_strided_slice %21 {offsets = [0, 88], sizes = [8, 8], strides = [1, 1]} : vector<8x200xbf16> to vector<8x8xbf16>
    %68 = vector.extract_strided_slice %1 {offsets = [0, 127], sizes = [8, 384], strides = [1, 1]} : vector<8x640xbf16> to vector<8x384xbf16>
    %cst_18 = arith.constant dense<0.000000e+00> : vector<8x384xf32>
    %69 = tpu.matmul %67, %68, %cst_18 {dimension_numbers = #tpu.dot_dimension_numbers<[1], [0], [0], [1], [0, 0, 1, 1], [], []>} : vector<8x8xbf16>, vector<8x384xbf16>, vector<8x384xf32> -> vector<8x384xf32>
    %70 = arith.addf %66, %69 : vector<8x384xf32>
    %71 = vector.extract_strided_slice %21 {offsets = [0, 96], sizes = [8, 8], strides = [1, 1]} : vector<8x200xbf16> to vector<8x8xbf16>
    %72 = vector.extract_strided_slice %1 {offsets = [0, 128], sizes = [8, 384], strides = [1, 1]} : vector<8x640xbf16> to vector<8x384xbf16>
    %cst_19 = arith.constant dense<0.000000e+00> : vector<8x384xf32>
    %73 = tpu.matmul %71, %72, %cst_19 {dimension_numbers = #tpu.dot_dimension_numbers<[1], [0], [0], [1], [0, 0, 1, 1], [], []>} : vector<8x8xbf16>, vector<8x384xbf16>, vector<8x384xf32> -> vector<8x384xf32>
    %74 = arith.addf %70, %73 : vector<8x384xf32>
    %75 = vector.extract_strided_slice %21 {offsets = [0, 104], sizes = [8, 8], strides = [1, 1]} : vector<8x200xbf16> to vector<8x8xbf16>
    %76 = vector.extract_strided_slice %1 {offsets = [0, 129], sizes = [8, 384], strides = [1, 1]} : vector<8x640xbf16> to vector<8x384xbf16>
    %cst_20 = arith.constant dense<0.000000e+00> : vector<8x384xf32>
    %77 = tpu.matmul %75, %76, %cst_20 {dimension_numbers = #tpu.dot_dimension_numbers<[1], [0], [0], [1], [0, 0, 1, 1], [], []>} : vector<8x8xbf16>, vector<8x384xbf16>, vector<8x384xf32> -> vector<8x384xf32>
    %78 = arith.addf %74, %77 : vector<8x384xf32>
    %79 = vector.extract_strided_slice %21 {offsets = [0, 112], sizes = [8, 8], strides = [1, 1]} : vector<8x200xbf16> to vector<8x8xbf16>
    %80 = vector.extract_strided_slice %1 {offsets = [0, 130], sizes = [8, 384], strides = [1, 1]} : vector<8x640xbf16> to vector<8x384xbf16>
    %cst_21 = arith.constant dense<0.000000e+00> : vector<8x384xf32>
    %81 = tpu.matmul %79, %80, %cst_21 {dimension_numbers = #tpu.dot_dimension_numbers<[1], [0], [0], [1], [0, 0, 1, 1], [], []>} : vector<8x8xbf16>, vector<8x384xbf16>, vector<8x384xf32> -> vector<8x384xf32>
    %82 = arith.addf %78, %81 : vector<8x384xf32>
    %83 = vector.extract_strided_slice %21 {offsets = [0, 120], sizes = [8, 8], strides = [1, 1]} : vector<8x200xbf16> to vector<8x8xbf16>
    %84 = vector.extract_strided_slice %1 {offsets = [0, 150], sizes = [8, 384], strides = [1, 1]} : vector<8x640xbf16> to vector<8x384xbf16>
    %cst_22 = arith.constant dense<0.000000e+00> : vector<8x384xf32>
    %85 = tpu.matmul %83, %84, %cst_22 {dimension_numbers = #tpu.dot_dimension_numbers<[1], [0], [0], [1], [0, 0, 1, 1], [], []>} : vector<8x8xbf16>, vector<8x384xbf16>, vector<8x384xf32> -> vector<8x384xf32>
    %86 = arith.addf %82, %85 : vector<8x384xf32>
    %87 = vector.extract_strided_slice %21 {offsets = [0, 128], sizes = [8, 8], strides = [1, 1]} : vector<8x200xbf16> to vector<8x8xbf16>
    %88 = vector.extract_strided_slice %1 {offsets = [0, 151], sizes = [8, 384], strides = [1, 1]} : vector<8x640xbf16> to vector<8x384xbf16>
    %cst_23 = arith.constant dense<0.000000e+00> : vector<8x384xf32>
    %89 = tpu.matmul %87, %88, %cst_23 {dimension_numbers = #tpu.dot_dimension_numbers<[1], [0], [0], [1], [0, 0, 1, 1], [], []>} : vector<8x8xbf16>, vector<8x384xbf16>, vector<8x384xf32> -> vector<8x384xf32>
    %90 = arith.addf %86, %89 : vector<8x384xf32>
    %91 = vector.extract_strided_slice %21 {offsets = [0, 136], sizes = [8, 8], strides = [1, 1]} : vector<8x200xbf16> to vector<8x8xbf16>
    %92 = vector.extract_strided_slice %1 {offsets = [0, 152], sizes = [8, 384], strides = [1, 1]} : vector<8x640xbf16> to vector<8x384xbf16>
    %cst_24 = arith.constant dense<0.000000e+00> : vector<8x384xf32>
    %93 = tpu.matmul %91, %92, %cst_24 {dimension_numbers = #tpu.dot_dimension_numbers<[1], [0], [0], [1], [0, 0, 1, 1], [], []>} : vector<8x8xbf16>, vector<8x384xbf16>, vector<8x384xf32> -> vector<8x384xf32>
    %94 = arith.addf %90, %93 : vector<8x384xf32>
    %95 = vector.extract_strided_slice %21 {offsets = [0, 144], sizes = [8, 8], strides = [1, 1]} : vector<8x200xbf16> to vector<8x8xbf16>
    %96 = vector.extract_strided_slice %1 {offsets = [0, 153], sizes = [8, 384], strides = [1, 1]} : vector<8x640xbf16> to vector<8x384xbf16>
    %cst_25 = arith.constant dense<0.000000e+00> : vector<8x384xf32>
    %97 = tpu.matmul %95, %96, %cst_25 {dimension_numbers = #tpu.dot_dimension_numbers<[1], [0], [0], [1], [0, 0, 1, 1], [], []>} : vector<8x8xbf16>, vector<8x384xbf16>, vector<8x384xf32> -> vector<8x384xf32>
    %98 = arith.addf %94, %97 : vector<8x384xf32>
    %99 = vector.extract_strided_slice %21 {offsets = [0, 152], sizes = [8, 8], strides = [1, 1]} : vector<8x200xbf16> to vector<8x8xbf16>
    %100 = vector.extract_strided_slice %1 {offsets = [0, 154], sizes = [8, 384], strides = [1, 1]} : vector<8x640xbf16> to vector<8x384xbf16>
    %cst_26 = arith.constant dense<0.000000e+00> : vector<8x384xf32>
    %101 = tpu.matmul %99, %100, %cst_26 {dimension_numbers = #tpu.dot_dimension_numbers<[1], [0], [0], [1], [0, 0, 1, 1], [], []>} : vector<8x8xbf16>, vector<8x384xbf16>, vector<8x384xf32> -> vector<8x384xf32>
    %102 = arith.addf %98, %101 : vector<8x384xf32>
    %103 = vector.extract_strided_slice %21 {offsets = [0, 160], sizes = [8, 8], strides = [1, 1]} : vector<8x200xbf16> to vector<8x8xbf16>
    %104 = vector.extract_strided_slice %1 {offsets = [0, 174], sizes = [8, 384], strides = [1, 1]} : vector<8x640xbf16> to vector<8x384xbf16>
    %cst_27 = arith.constant dense<0.000000e+00> : vector<8x384xf32>
    %105 = tpu.matmul %103, %104, %cst_27 {dimension_numbers = #tpu.dot_dimension_numbers<[1], [0], [0], [1], [0, 0, 1, 1], [], []>} : vector<8x8xbf16>, vector<8x384xbf16>, vector<8x384xf32> -> vector<8x384xf32>
    %106 = arith.addf %102, %105 : vector<8x384xf32>
    %107 = vector.extract_strided_slice %21 {offsets = [0, 168], sizes = [8, 8], strides = [1, 1]} : vector<8x200xbf16> to vector<8x8xbf16>
    %108 = vector.extract_strided_slice %1 {offsets = [0, 175], sizes = [8, 384], strides = [1, 1]} : vector<8x640xbf16> to vector<8x384xbf16>
    %cst_28 = arith.constant dense<0.000000e+00> : vector<8x384xf32>
    %109 = tpu.matmul %107, %108, %cst_28 {dimension_numbers = #tpu.dot_dimension_numbers<[1], [0], [0], [1], [0, 0, 1, 1], [], []>} : vector<8x8xbf16>, vector<8x384xbf16>, vector<8x384xf32> -> vector<8x384xf32>
    %110 = arith.addf %106, %109 : vector<8x384xf32>
    %111 = vector.extract_strided_slice %21 {offsets = [0, 176], sizes = [8, 8], strides = [1, 1]} : vector<8x200xbf16> to vector<8x8xbf16>
    %112 = vector.extract_strided_slice %1 {offsets = [0, 176], sizes = [8, 384], strides = [1, 1]} : vector<8x640xbf16> to vector<8x384xbf16>
    %cst_29 = arith.constant dense<0.000000e+00> : vector<8x384xf32>
    %113 = tpu.matmul %111, %112, %cst_29 {dimension_numbers = #tpu.dot_dimension_numbers<[1], [0], [0], [1], [0, 0, 1, 1], [], []>} : vector<8x8xbf16>, vector<8x384xbf16>, vector<8x384xf32> -> vector<8x384xf32>
    %114 = arith.addf %110, %113 : vector<8x384xf32>
    %115 = vector.extract_strided_slice %21 {offsets = [0, 184], sizes = [8, 8], strides = [1, 1]} : vector<8x200xbf16> to vector<8x8xbf16>
    %116 = vector.extract_strided_slice %1 {offsets = [0, 177], sizes = [8, 384], strides = [1, 1]} : vector<8x640xbf16> to vector<8x384xbf16>
    %cst_30 = arith.constant dense<0.000000e+00> : vector<8x384xf32>
    %117 = tpu.matmul %115, %116, %cst_30 {dimension_numbers = #tpu.dot_dimension_numbers<[1], [0], [0], [1], [0, 0, 1, 1], [], []>} : vector<8x8xbf16>, vector<8x384xbf16>, vector<8x384xf32> -> vector<8x384xf32>
    %118 = arith.addf %114, %117 : vector<8x384xf32>
    %119 = vector.extract_strided_slice %21 {offsets = [0, 192], sizes = [8, 8], strides = [1, 1]} : vector<8x200xbf16> to vector<8x8xbf16>
    %120 = vector.extract_strided_slice %1 {offsets = [0, 178], sizes = [8, 384], strides = [1, 1]} : vector<8x640xbf16> to vector<8x384xbf16>
    %cst_31 = arith.constant dense<0.000000e+00> : vector<8x384xf32>
    %121 = tpu.matmul %119, %120, %cst_31 {dimension_numbers = #tpu.dot_dimension_numbers<[1], [0], [0], [1], [0, 0, 1, 1], [], []>} : vector<8x8xbf16>, vector<8x384xbf16>, vector<8x384xf32> -> vector<8x384xf32>
    %122 = arith.addf %118, %121 : vector<8x384xf32>
    %c0_32 = arith.constant 0 : index
    %c0_33 = arith.constant 0 : index
    %123 = vector.load %arg3[%c0_32, %c0_33] : memref<8x128xf32, #tpu.memory_space<vmem>>, vector<8x1xf32>
    %124 = vector.broadcast %123 : vector<8x1xf32> to vector<8x384xf32>
    %125 = arith.addf %122, %124 : vector<8x384xf32>
    %cst_34 = arith.constant 0.000000e+00 : f32
    %126 = vector.broadcast %cst_34 : f32 to vector<8x384xf32>
    %127 = arith.cmpf ogt, %125, %126 : vector<8x384xf32>
    %cst_35 = arith.constant 2.500000e-01 : f32
    %128 = vector.broadcast %cst_35 : f32 to vector<8x384xf32>
    %129 = arith.mulf %128, %125 : vector<8x384xf32>
    %130 = arith.select %127, %125, %129 : vector<8x384xi1>, vector<8x384xf32>
    %cst_36 = arith.constant 0.000000e+00 : f32
    %131 = vector.shape_cast %20 : vector<1x384xi1> to vector<1x384xi1>
    %132 = vector.broadcast %131 : vector<1x384xi1> to vector<8x384xi1>
    %133 = vector.broadcast %cst_36 : f32 to vector<8x384xf32>
    %134 = arith.select %132, %130, %133 : vector<8x384xi1>, vector<8x384xf32>
    %cst_37 = arith.constant 0.000000e+00 : bf16
    %135 = vector.broadcast %cst_37 : bf16 to vector<8x128xbf16>
    %c0_38 = arith.constant 0 : index
    %c0_39 = arith.constant 0 : index
    %136 = vector.load %arg7[%c0_38, %c0_39] : memref<8x640xbf16, #tpu.memory_space<vmem>>, vector<8x128xbf16>
    tpu.vector_store %arg7[%c0_38, %c0_39], %135 {strides = array<i32>} : memref<8x640xbf16, #tpu.memory_space<vmem>>, vector<8x128xbf16>,
    %cst_40 = arith.constant 0.000000e+00 : bf16
    %137 = vector.broadcast %cst_40 : bf16 to vector<8x128xbf16>
    %c0_41 = arith.constant 0 : index
    %c512 = arith.constant 512 : index
    %138 = vector.load %arg7[%c0_41, %c512] : memref<8x640xbf16, #tpu.memory_space<vmem>>, vector<8x128xbf16>
    tpu.vector_store %arg7[%c0_41, %c512], %137 {strides = array<i32>} : memref<8x640xbf16, #tpu.memory_space<vmem>>, vector<8x128xbf16>,
    %139 = arith.truncf %134 : vector<8x384xf32> to vector<8x384xbf16>
    %c0_42 = arith.constant 0 : index
    %c128 = arith.constant 128 : index
    %140 = vector.load %arg7[%c0_42, %c128] : memref<8x640xbf16, #tpu.memory_space<vmem>>, vector<8x384xbf16>
    tpu.vector_store %arg7[%c0_42, %c128], %139 {strides = array<i32>} : memref<8x640xbf16, #tpu.memory_space<vmem>>, vector<8x384xbf16>,
    %c0_43 = arith.constant 0 : index
    %c0_44 = arith.constant 0 : index
    %141 = vector.load %arg7[%c0_43, %c0_44] : memref<8x640xbf16, #tpu.memory_space<vmem>>, vector<8x640xbf16>
    %c0_45 = arith.constant 0 : index
    %c0_46 = arith.constant 0 : index
    %142 = vector.load %arg4[%c0_45, %c0_46] : memref<8x200xbf16, #tpu.memory_space<vmem>>, vector<8x200xbf16>
    %cst_47 = arith.constant 0.000000e+00 : f32
    %143 = vector.broadcast %cst_47 : f32 to vector<8x384xf32>
    %144 = vector.extract_strided_slice %142 {offsets = [0, 0], sizes = [8, 8], strides = [1, 1]} : vector<8x200xbf16> to vector<8x8xbf16>
    %145 = vector.extract_strided_slice %141 {offsets = [0, 78], sizes = [8, 384], strides = [1, 1]} : vector<8x640xbf16> to vector<8x384xbf16>
    %cst_48 = arith.constant dense<0.000000e+00> : vector<8x384xf32>
    %146 = tpu.matmul %144, %145, %cst_48 {dimension_numbers = #tpu.dot_dimension_numbers<[1], [0], [0], [1], [0, 0, 1, 1], [], []>} : vector<8x8xbf16>, vector<8x384xbf16>, vector<8x384xf32> -> vector<8x384xf32>
    %147 = arith.addf %143, %146 : vector<8x384xf32>
    %148 = vector.extract_strided_slice %142 {offsets = [0, 8], sizes = [8, 8], strides = [1, 1]} : vector<8x200xbf16> to vector<8x8xbf16>
    %149 = vector.extract_strided_slice %141 {offsets = [0, 79], sizes = [8, 384], strides = [1, 1]} : vector<8x640xbf16> to vector<8x384xbf16>
    %cst_49 = arith.constant dense<0.000000e+00> : vector<8x384xf32>
    %150 = tpu.matmul %148, %149, %cst_49 {dimension_numbers = #tpu.dot_dimension_numbers<[1], [0], [0], [1], [0, 0, 1, 1], [], []>} : vector<8x8xbf16>, vector<8x384xbf16>, vector<8x384xf32> -> vector<8x384xf32>
    %151 = arith.addf %147, %150 : vector<8x384xf32>
    %152 = vector.extract_strided_slice %142 {offsets = [0, 16], sizes = [8, 8], strides = [1, 1]} : vector<8x200xbf16> to vector<8x8xbf16>
    %153 = vector.extract_strided_slice %141 {offsets = [0, 80], sizes = [8, 384], strides = [1, 1]} : vector<8x640xbf16> to vector<8x384xbf16>
    %cst_50 = arith.constant dense<0.000000e+00> : vector<8x384xf32>
    %154 = tpu.matmul %152, %153, %cst_50 {dimension_numbers = #tpu.dot_dimension_numbers<[1], [0], [0], [1], [0, 0, 1, 1], [], []>} : vector<8x8xbf16>, vector<8x384xbf16>, vector<8x384xf32> -> vector<8x384xf32>
    %155 = arith.addf %151, %154 : vector<8x384xf32>
    %156 = vector.extract_strided_slice %142 {offsets = [0, 24], sizes = [8, 8], strides = [1, 1]} : vector<8x200xbf16> to vector<8x8xbf16>
    %157 = vector.extract_strided_slice %141 {offsets = [0, 81], sizes = [8, 384], strides = [1, 1]} : vector<8x640xbf16> to vector<8x384xbf16>
    %cst_51 = arith.constant dense<0.000000e+00> : vector<8x384xf32>
    %158 = tpu.matmul %156, %157, %cst_51 {dimension_numbers = #tpu.dot_dimension_numbers<[1], [0], [0], [1], [0, 0, 1, 1], [], []>} : vector<8x8xbf16>, vector<8x384xbf16>, vector<8x384xf32> -> vector<8x384xf32>
    %159 = arith.addf %155, %158 : vector<8x384xf32>
    %160 = vector.extract_strided_slice %142 {offsets = [0, 32], sizes = [8, 8], strides = [1, 1]} : vector<8x200xbf16> to vector<8x8xbf16>
    %161 = vector.extract_strided_slice %141 {offsets = [0, 82], sizes = [8, 384], strides = [1, 1]} : vector<8x640xbf16> to vector<8x384xbf16>
    %cst_52 = arith.constant dense<0.000000e+00> : vector<8x384xf32>
    %162 = tpu.matmul %160, %161, %cst_52 {dimension_numbers = #tpu.dot_dimension_numbers<[1], [0], [0], [1], [0, 0, 1, 1], [], []>} : vector<8x8xbf16>, vector<8x384xbf16>, vector<8x384xf32> -> vector<8x384xf32>
    %163 = arith.addf %159, %162 : vector<8x384xf32>
    %164 = vector.extract_strided_slice %142 {offsets = [0, 40], sizes = [8, 8], strides = [1, 1]} : vector<8x200xbf16> to vector<8x8xbf16>
    %165 = vector.extract_strided_slice %141 {offsets = [0, 102], sizes = [8, 384], strides = [1, 1]} : vector<8x640xbf16> to vector<8x384xbf16>
    %cst_53 = arith.constant dense<0.000000e+00> : vector<8x384xf32>
    %166 = tpu.matmul %164, %165, %cst_53 {dimension_numbers = #tpu.dot_dimension_numbers<[1], [0], [0], [1], [0, 0, 1, 1], [], []>} : vector<8x8xbf16>, vector<8x384xbf16>, vector<8x384xf32> -> vector<8x384xf32>
    %167 = arith.addf %163, %166 : vector<8x384xf32>
    %168 = vector.extract_strided_slice %142 {offsets = [0, 48], sizes = [8, 8], strides = [1, 1]} : vector<8x200xbf16> to vector<8x8xbf16>
    %169 = vector.extract_strided_slice %141 {offsets = [0, 103], sizes = [8, 384], strides = [1, 1]} : vector<8x640xbf16> to vector<8x384xbf16>
    %cst_54 = arith.constant dense<0.000000e+00> : vector<8x384xf32>
    %170 = tpu.matmul %168, %169, %cst_54 {dimension_numbers = #tpu.dot_dimension_numbers<[1], [0], [0], [1], [0, 0, 1, 1], [], []>} : vector<8x8xbf16>, vector<8x384xbf16>, vector<8x384xf32> -> vector<8x384xf32>
    %171 = arith.addf %167, %170 : vector<8x384xf32>
    %172 = vector.extract_strided_slice %142 {offsets = [0, 56], sizes = [8, 8], strides = [1, 1]} : vector<8x200xbf16> to vector<8x8xbf16>
    %173 = vector.extract_strided_slice %141 {offsets = [0, 104], sizes = [8, 384], strides = [1, 1]} : vector<8x640xbf16> to vector<8x384xbf16>
    %cst_55 = arith.constant dense<0.000000e+00> : vector<8x384xf32>
    %174 = tpu.matmul %172, %173, %cst_55 {dimension_numbers = #tpu.dot_dimension_numbers<[1], [0], [0], [1], [0, 0, 1, 1], [], []>} : vector<8x8xbf16>, vector<8x384xbf16>, vector<8x384xf32> -> vector<8x384xf32>
    %175 = arith.addf %171, %174 : vector<8x384xf32>
    %176 = vector.extract_strided_slice %142 {offsets = [0, 64], sizes = [8, 8], strides = [1, 1]} : vector<8x200xbf16> to vector<8x8xbf16>
    %177 = vector.extract_strided_slice %141 {offsets = [0, 105], sizes = [8, 384], strides = [1, 1]} : vector<8x640xbf16> to vector<8x384xbf16>
    %cst_56 = arith.constant dense<0.000000e+00> : vector<8x384xf32>
    %178 = tpu.matmul %176, %177, %cst_56 {dimension_numbers = #tpu.dot_dimension_numbers<[1], [0], [0], [1], [0, 0, 1, 1], [], []>} : vector<8x8xbf16>, vector<8x384xbf16>, vector<8x384xf32> -> vector<8x384xf32>
    %179 = arith.addf %175, %178 : vector<8x384xf32>
    %180 = vector.extract_strided_slice %142 {offsets = [0, 72], sizes = [8, 8], strides = [1, 1]} : vector<8x200xbf16> to vector<8x8xbf16>
    %181 = vector.extract_strided_slice %141 {offsets = [0, 106], sizes = [8, 384], strides = [1, 1]} : vector<8x640xbf16> to vector<8x384xbf16>
    %cst_57 = arith.constant dense<0.000000e+00> : vector<8x384xf32>
    %182 = tpu.matmul %180, %181, %cst_57 {dimension_numbers = #tpu.dot_dimension_numbers<[1], [0], [0], [1], [0, 0, 1, 1], [], []>} : vector<8x8xbf16>, vector<8x384xbf16>, vector<8x384xf32> -> vector<8x384xf32>
    %183 = arith.addf %179, %182 : vector<8x384xf32>
    %184 = vector.extract_strided_slice %142 {offsets = [0, 80], sizes = [8, 8], strides = [1, 1]} : vector<8x200xbf16> to vector<8x8xbf16>
    %185 = vector.extract_strided_slice %141 {offsets = [0, 126], sizes = [8, 384], strides = [1, 1]} : vector<8x640xbf16> to vector<8x384xbf16>
    %cst_58 = arith.constant dense<0.000000e+00> : vector<8x384xf32>
    %186 = tpu.matmul %184, %185, %cst_58 {dimension_numbers = #tpu.dot_dimension_numbers<[1], [0], [0], [1], [0, 0, 1, 1], [], []>} : vector<8x8xbf16>, vector<8x384xbf16>, vector<8x384xf32> -> vector<8x384xf32>
    %187 = arith.addf %183, %186 : vector<8x384xf32>
    %188 = vector.extract_strided_slice %142 {offsets = [0, 88], sizes = [8, 8], strides = [1, 1]} : vector<8x200xbf16> to vector<8x8xbf16>
    %189 = vector.extract_strided_slice %141 {offsets = [0, 127], sizes = [8, 384], strides = [1, 1]} : vector<8x640xbf16> to vector<8x384xbf16>
    %cst_59 = arith.constant dense<0.000000e+00> : vector<8x384xf32>
    %190 = tpu.matmul %188, %189, %cst_59 {dimension_numbers = #tpu.dot_dimension_numbers<[1], [0], [0], [1], [0, 0, 1, 1], [], []>} : vector<8x8xbf16>, vector<8x384xbf16>, vector<8x384xf32> -> vector<8x384xf32>
    %191 = arith.addf %187, %190 : vector<8x384xf32>
    %192 = vector.extract_strided_slice %142 {offsets = [0, 96], sizes = [8, 8], strides = [1, 1]} : vector<8x200xbf16> to vector<8x8xbf16>
    %193 = vector.extract_strided_slice %141 {offsets = [0, 128], sizes = [8, 384], strides = [1, 1]} : vector<8x640xbf16> to vector<8x384xbf16>
    %cst_60 = arith.constant dense<0.000000e+00> : vector<8x384xf32>
    %194 = tpu.matmul %192, %193, %cst_60 {dimension_numbers = #tpu.dot_dimension_numbers<[1], [0], [0], [1], [0, 0, 1, 1], [], []>} : vector<8x8xbf16>, vector<8x384xbf16>, vector<8x384xf32> -> vector<8x384xf32>
    %195 = arith.addf %191, %194 : vector<8x384xf32>
    %196 = vector.extract_strided_slice %142 {offsets = [0, 104], sizes = [8, 8], strides = [1, 1]} : vector<8x200xbf16> to vector<8x8xbf16>
    %197 = vector.extract_strided_slice %141 {offsets = [0, 129], sizes = [8, 384], strides = [1, 1]} : vector<8x640xbf16> to vector<8x384xbf16>
    %cst_61 = arith.constant dense<0.000000e+00> : vector<8x384xf32>
    %198 = tpu.matmul %196, %197, %cst_61 {dimension_numbers = #tpu.dot_dimension_numbers<[1], [0], [0], [1], [0, 0, 1, 1], [], []>} : vector<8x8xbf16>, vector<8x384xbf16>, vector<8x384xf32> -> vector<8x384xf32>
    %199 = arith.addf %195, %198 : vector<8x384xf32>
    %200 = vector.extract_strided_slice %142 {offsets = [0, 112], sizes = [8, 8], strides = [1, 1]} : vector<8x200xbf16> to vector<8x8xbf16>
    %201 = vector.extract_strided_slice %141 {offsets = [0, 130], sizes = [8, 384], strides = [1, 1]} : vector<8x640xbf16> to vector<8x384xbf16>
    %cst_62 = arith.constant dense<0.000000e+00> : vector<8x384xf32>
    %202 = tpu.matmul %200, %201, %cst_62 {dimension_numbers = #tpu.dot_dimension_numbers<[1], [0], [0], [1], [0, 0, 1, 1], [], []>} : vector<8x8xbf16>, vector<8x384xbf16>, vector<8x384xf32> -> vector<8x384xf32>
    %203 = arith.addf %199, %202 : vector<8x384xf32>
    %204 = vector.extract_strided_slice %142 {offsets = [0, 120], sizes = [8, 8], strides = [1, 1]} : vector<8x200xbf16> to vector<8x8xbf16>
    %205 = vector.extract_strided_slice %141 {offsets = [0, 150], sizes = [8, 384], strides = [1, 1]} : vector<8x640xbf16> to vector<8x384xbf16>
    %cst_63 = arith.constant dense<0.000000e+00> : vector<8x384xf32>
    %206 = tpu.matmul %204, %205, %cst_63 {dimension_numbers = #tpu.dot_dimension_numbers<[1], [0], [0], [1], [0, 0, 1, 1], [], []>} : vector<8x8xbf16>, vector<8x384xbf16>, vector<8x384xf32> -> vector<8x384xf32>
    %207 = arith.addf %203, %206 : vector<8x384xf32>
    %208 = vector.extract_strided_slice %142 {offsets = [0, 128], sizes = [8, 8], strides = [1, 1]} : vector<8x200xbf16> to vector<8x8xbf16>
    %209 = vector.extract_strided_slice %141 {offsets = [0, 151], sizes = [8, 384], strides = [1, 1]} : vector<8x640xbf16> to vector<8x384xbf16>
    %cst_64 = arith.constant dense<0.000000e+00> : vector<8x384xf32>
    %210 = tpu.matmul %208, %209, %cst_64 {dimension_numbers = #tpu.dot_dimension_numbers<[1], [0], [0], [1], [0, 0, 1, 1], [], []>} : vector<8x8xbf16>, vector<8x384xbf16>, vector<8x384xf32> -> vector<8x384xf32>
    %211 = arith.addf %207, %210 : vector<8x384xf32>
    %212 = vector.extract_strided_slice %142 {offsets = [0, 136], sizes = [8, 8], strides = [1, 1]} : vector<8x200xbf16> to vector<8x8xbf16>
    %213 = vector.extract_strided_slice %141 {offsets = [0, 152], sizes = [8, 384], strides = [1, 1]} : vector<8x640xbf16> to vector<8x384xbf16>
    %cst_65 = arith.constant dense<0.000000e+00> : vector<8x384xf32>
    %214 = tpu.matmul %212, %213, %cst_65 {dimension_numbers = #tpu.dot_dimension_numbers<[1], [0], [0], [1], [0, 0, 1, 1], [], []>} : vector<8x8xbf16>, vector<8x384xbf16>, vector<8x384xf32> -> vector<8x384xf32>
    %215 = arith.addf %211, %214 : vector<8x384xf32>
    %216 = vector.extract_strided_slice %142 {offsets = [0, 144], sizes = [8, 8], strides = [1, 1]} : vector<8x200xbf16> to vector<8x8xbf16>
    %217 = vector.extract_strided_slice %141 {offsets = [0, 153], sizes = [8, 384], strides = [1, 1]} : vector<8x640xbf16> to vector<8x384xbf16>
    %cst_66 = arith.constant dense<0.000000e+00> : vector<8x384xf32>
    %218 = tpu.matmul %216, %217, %cst_66 {dimension_numbers = #tpu.dot_dimension_numbers<[1], [0], [0], [1], [0, 0, 1, 1], [], []>} : vector<8x8xbf16>, vector<8x384xbf16>, vector<8x384xf32> -> vector<8x384xf32>
    %219 = arith.addf %215, %218 : vector<8x384xf32>
    %220 = vector.extract_strided_slice %142 {offsets = [0, 152], sizes = [8, 8], strides = [1, 1]} : vector<8x200xbf16> to vector<8x8xbf16>
    %221 = vector.extract_strided_slice %141 {offsets = [0, 154], sizes = [8, 384], strides = [1, 1]} : vector<8x640xbf16> to vector<8x384xbf16>
    %cst_67 = arith.constant dense<0.000000e+00> : vector<8x384xf32>
    %222 = tpu.matmul %220, %221, %cst_67 {dimension_numbers = #tpu.dot_dimension_numbers<[1], [0], [0], [1], [0, 0, 1, 1], [], []>} : vector<8x8xbf16>, vector<8x384xbf16>, vector<8x384xf32> -> vector<8x384xf32>
    %223 = arith.addf %219, %222 : vector<8x384xf32>
    %224 = vector.extract_strided_slice %142 {offsets = [0, 160], sizes = [8, 8], strides = [1, 1]} : vector<8x200xbf16> to vector<8x8xbf16>
    %225 = vector.extract_strided_slice %141 {offsets = [0, 174], sizes = [8, 384], strides = [1, 1]} : vector<8x640xbf16> to vector<8x384xbf16>
    %cst_68 = arith.constant dense<0.000000e+00> : vector<8x384xf32>
    %226 = tpu.matmul %224, %225, %cst_68 {dimension_numbers = #tpu.dot_dimension_numbers<[1], [0], [0], [1], [0, 0, 1, 1], [], []>} : vector<8x8xbf16>, vector<8x384xbf16>, vector<8x384xf32> -> vector<8x384xf32>
    %227 = arith.addf %223, %226 : vector<8x384xf32>
    %228 = vector.extract_strided_slice %142 {offsets = [0, 168], sizes = [8, 8], strides = [1, 1]} : vector<8x200xbf16> to vector<8x8xbf16>
    %229 = vector.extract_strided_slice %141 {offsets = [0, 175], sizes = [8, 384], strides = [1, 1]} : vector<8x640xbf16> to vector<8x384xbf16>
    %cst_69 = arith.constant dense<0.000000e+00> : vector<8x384xf32>
    %230 = tpu.matmul %228, %229, %cst_69 {dimension_numbers = #tpu.dot_dimension_numbers<[1], [0], [0], [1], [0, 0, 1, 1], [], []>} : vector<8x8xbf16>, vector<8x384xbf16>, vector<8x384xf32> -> vector<8x384xf32>
    %231 = arith.addf %227, %230 : vector<8x384xf32>
    %232 = vector.extract_strided_slice %142 {offsets = [0, 176], sizes = [8, 8], strides = [1, 1]} : vector<8x200xbf16> to vector<8x8xbf16>
    %233 = vector.extract_strided_slice %141 {offsets = [0, 176], sizes = [8, 384], strides = [1, 1]} : vector<8x640xbf16> to vector<8x384xbf16>
    %cst_70 = arith.constant dense<0.000000e+00> : vector<8x384xf32>
    %234 = tpu.matmul %232, %233, %cst_70 {dimension_numbers = #tpu.dot_dimension_numbers<[1], [0], [0], [1], [0, 0, 1, 1], [], []>} : vector<8x8xbf16>, vector<8x384xbf16>, vector<8x384xf32> -> vector<8x384xf32>
    %235 = arith.addf %231, %234 : vector<8x384xf32>
    %236 = vector.extract_strided_slice %142 {offsets = [0, 184], sizes = [8, 8], strides = [1, 1]} : vector<8x200xbf16> to vector<8x8xbf16>
    %237 = vector.extract_strided_slice %141 {offsets = [0, 177], sizes = [8, 384], strides = [1, 1]} : vector<8x640xbf16> to vector<8x384xbf16>
    %cst_71 = arith.constant dense<0.000000e+00> : vector<8x384xf32>
    %238 = tpu.matmul %236, %237, %cst_71 {dimension_numbers = #tpu.dot_dimension_numbers<[1], [0], [0], [1], [0, 0, 1, 1], [], []>} : vector<8x8xbf16>, vector<8x384xbf16>, vector<8x384xf32> -> vector<8x384xf32>
    %239 = arith.addf %235, %238 : vector<8x384xf32>
    %240 = vector.extract_strided_slice %142 {offsets = [0, 192], sizes = [8, 8], strides = [1, 1]} : vector<8x200xbf16> to vector<8x8xbf16>
    %241 = vector.extract_strided_slice %141 {offsets = [0, 178], sizes = [8, 384], strides = [1, 1]} : vector<8x640xbf16> to vector<8x384xbf16>
    %cst_72 = arith.constant dense<0.000000e+00> : vector<8x384xf32>
    %242 = tpu.matmul %240, %241, %cst_72 {dimension_numbers = #tpu.dot_dimension_numbers<[1], [0], [0], [1], [0, 0, 1, 1], [], []>} : vector<8x8xbf16>, vector<8x384xbf16>, vector<8x384xf32> -> vector<8x384xf32>
    %243 = arith.addf %239, %242 : vector<8x384xf32>
    %c0_73 = arith.constant 0 : index
    %c0_74 = arith.constant 0 : index
    %244 = vector.load %arg5[%c0_73, %c0_74] : memref<8x128xf32, #tpu.memory_space<vmem>>, vector<8x1xf32>
    %245 = vector.broadcast %244 : vector<8x1xf32> to vector<8x384xf32>
    %246 = arith.addf %243, %245 : vector<8x384xf32>
    %247 = vector.extract_strided_slice %1 {offsets = [0, 128], sizes = [8, 384], strides = [1, 1]} : vector<8x640xbf16> to vector<8x384xbf16>
    %248 = arith.extf %247 : vector<8x384xbf16> to vector<8x384xf32>
    %249 = arith.addf %248, %246 : vector<8x384xf32>
    %cst_75 = arith.constant 0.000000e+00 : f32
    %250 = vector.broadcast %cst_75 : f32 to vector<8x384xf32>
    %251 = arith.maximumf %249, %250 : vector<8x384xf32>
    %c0_76 = arith.constant 0 : index
    %c0_77 = arith.constant 0 : index
    %c0_78 = arith.constant 0 : index
    %252 = vector.load %arg6[%c0_76, %c0_77, %c0_78] : memref<1x8x384xf32, #tpu.memory_space<vmem>>, vector<1x8x384xf32>
    %253 = vector.shape_cast %252 : vector<1x8x384xf32> to vector<8x384xf32>
    %254 = vector.shape_cast %251 : vector<8x384xf32> to vector<1x8x384xf32>
    tpu.vector_store %arg6[%c0_76, %c0_77, %c0_78], %254 {strides = array<i32>} : memref<1x8x384xf32, #tpu.memory_space<vmem>>, vector<1x8x384xf32>,
    return
  }
  func.func @transform_0(%arg0: i32) -> (i32, i32, i32) {
    %c0_i32 = arith.constant 0 : i32
    %c0_i32_0 = arith.constant 0 : i32
    %c0_i32_1 = arith.constant 0 : i32
    return %arg0, %c0_i32, %c0_i32_0 : i32, i32, i32
  }
  func.func @transform_1(%arg0: i32) -> (i32, i32) {
    %c0_i32 = arith.constant 0 : i32
    %c0_i32_0 = arith.constant 0 : i32
    %c0_i32_1 = arith.constant 0 : i32
    return %c0_i32, %c0_i32_0 : i32, i32
  }
  func.func @transform_2(%arg0: i32) -> (i32, i32) {
    %c0_i32 = arith.constant 0 : i32
    %c0_i32_0 = arith.constant 0 : i32
    %c0_i32_1 = arith.constant 0 : i32
    return %c0_i32, %c0_i32_0 : i32, i32
  }
  func.func @transform_3(%arg0: i32) -> (i32, i32) {
    %c0_i32 = arith.constant 0 : i32
    %c0_i32_0 = arith.constant 0 : i32
    %c0_i32_1 = arith.constant 0 : i32
    return %c0_i32, %c0_i32_0 : i32, i32
  }
  func.func @transform_4(%arg0: i32) -> (i32, i32) {
    %c0_i32 = arith.constant 0 : i32
    %c0_i32_0 = arith.constant 0 : i32
    %c0_i32_1 = arith.constant 0 : i32
    return %c0_i32, %c0_i32_0 : i32, i32
  }
  func.func @transform_5(%arg0: i32) -> (i32, i32, i32) {
    %c0_i32 = arith.constant 0 : i32
    %c0_i32_0 = arith.constant 0 : i32
    %c0_i32_1 = arith.constant 0 : i32
    return %arg0, %c0_i32, %c0_i32_0 : i32, i32, i32
  }
}

</mosaic_0001>

<llo_original>
// kernel: tpu_custom_call.1
$region0: #{tpu_custom_call.1}
  #allocation0 [shape = 'u32[]', space=smem, size = 0x4, offset = 0x4, fixed_abs, tag = 'smem constant byte address 0x4 - core index']
  #allocation1 [shape = 'u32[144,128]{1,0:T(1,128)}', space=vmem, size = 0x12000, scoped, tag = 'internal scratch']
  #allocation2 [shape = 'bf16[8,640]{1,0:T(8,128)(2,1)}', space=vmem, size = 0x2800, scoped, tag = 'scratch operand']
  %s0 = inlined_call_operand.hbm [shape: bf16[2,8,640], index: 0, kind: input, shape index: {}]
  %s1 = inlined_call_operand.hbm [shape: bf16[8,200], index: 1, kind: input, shape index: {}]
  %s2 = inlined_call_operand.hbm [shape: f32[8,128], index: 2, kind: input, shape index: {}]
  %s3 = inlined_call_operand.hbm [shape: bf16[8,200], index: 3, kind: input, shape index: {}]
  %s4 = inlined_call_operand.hbm [shape: f32[8,128], index: 4, kind: input, shape index: {}]
  %s5 = inlined_call_operand.hbm [shape: f32[2,8,384], index: 5, kind: output, shape index: {}]
  %s6 = sld [smem:[#allocation0]]
  $region73: #{tpu_custom_call.1} parent=0
    _
  %s8 = ssub.s32 1, %s6
  %s9 = scalar_select 0, %s8, %s6
  $region1: #{tpu_custom_call.1} parent=0
    #allocation3 [shape = 'u8[20480]{0}', space=vmem, size = 0x5000, scoped, tag = 'input window, operand 0']
    #allocation4 [shape = 's32[2]{0}', space=sflag, size = 0x8, scoped, tag = 'scoped memory for tpu_custom_call.1']
    #allocation5 [shape = 's32[2]{0}', space=sflag, size = 0x8, scoped, tag = 'scoped memory for tpu_custom_call.1']
    #allocation6 [shape = 'u8[4096]{0}', space=vmem, size = 0x1000, scoped, tag = 'input window, operand 1, single buffered']
    #allocation7 [shape = 's32[1]{0}', space=sflag, size = 0x4, scoped, tag = 'scoped memory for tpu_custom_call.1']
    #allocation8 [shape = 'u8[4096]{0}', space=vmem, size = 0x1000, scoped, tag = 'input window, operand 2, single buffered']
    #allocation9 [shape = 'u8[4096]{0}', space=vmem, size = 0x1000, scoped, tag = 'input window, operand 3, single buffered']
    #allocation10 [shape = 's32[1]{0}', space=sflag, size = 0x4, scoped, tag = 'scoped memory for tpu_custom_call.1']
    #allocation11 [shape = 'u8[4096]{0}', space=vmem, size = 0x1000, scoped, tag = 'input window, operand 4, single buffered']
    #allocation12 [shape = 'u8[24576]{0}', space=vmem, size = 0x6000, scoped, tag = 'output window, operand 0']
    %10 = vsyncpa [#allocation4], 0
    %s11 = scalar_lea.sflag [#allocation4], 1
    %12 = vsyncpa %s11, 0
    %13 = vsyncpa [#allocation7], 0
    %14 = vsyncpa [#allocation10], 0
    %15 = vsyncpa [#allocation5], 0
    %s16 = scalar_lea.sflag [#allocation5], 1
    %17 = vsyncpa %s16, 0
    loop: start=0, step=1, limit=4
    $region2: #{tpu_custom_call.1} parent=1 // loop_pre_header
      _
    $region3: #{tpu_custom_call.1} parent=1 // loop_header
      %s19 = sphi 0, %s23
      %p20 = scmp.ge.s32.totalorder %s19, 4
      %s29 = sphi 0, %s31
      %s32 = sphi 0, %s29
      %s33 = sphi 0, %s32
      %s49 = sphi 0, %s33
      %s53 = sphi 0, %s53
      %s55 = sphi 0, %s53
      %s56 = sphi 0, %s55
      %s70 = sphi 0, %s56
      %s74 = sphi 0, %s74
      %s76 = sphi 0, %s74
      %s77 = sphi 0, %s76
      %s91 = sphi 0, %s77
      %s95 = sphi 0, %s95
      %s97 = sphi 0, %s95
      %s98 = sphi 0, %s97
      %s112 = sphi 0, %s98
      %s116 = sphi 0, %s116
      %s118 = sphi 0, %s116
      %s119 = sphi 0, %s118
      %s133 = sphi 0, %s119
      %s139 = sphi 0, %s141
      %s142 = sphi 0, %s139
      %s143 = sphi 0, %s142
      %s159 = sphi 0, %s143
    $region4: #{tpu_custom_call.1} parent=1 // loop_header_branch
      %22 = sbr.rel (%p20) target = $region8
    $region5: #{tpu_custom_call.1} parent=1 // loop_body
      %s24 = ssub.s32 %s19, 1
      %s25 = ssub.s32 %s19, 2
      %s26 = sadd.s32 %s19, 1
      %s27 = ssub.s32 %s19, %s26
      %p28 = scmp.eq.s32.totalorder %s27, 0
      %s30 = sadd.s32 %s29, 1
      %s31 = scalar_select %p28, %s29, %s30
      %p34 = pneg %p28
      %p35 = scmp.eq.s32.totalorder %s19, 1
      %p36 = por %p34, %p35
      %p37 = scmp.ne.s32.totalorder %s29, %s32
      %p38 = scmp.eq.s32.totalorder %s19, 0
      %p39 = por %p37, %p38
      %p40 = scmp.ne.s32.totalorder %s29, %s32
      %p41 = scmp.eq.s32.totalorder %s24, 1
      %p42 = por %p40, %p41
      %p43 = scmp.ne.s32.totalorder %s32, %s33
      %p44 = scmp.eq.s32.totalorder %s24, 0
      %p45 = por %p43, %p44
      %p46 = scmp.ne.s32.totalorder %s32, %s33
      %p47 = scmp.eq.s32.totalorder %s25, 1
      %p48 = por %p46, %p47
      %p50 = scmp.ne.s32.totalorder %s33, %s49
      %p51 = scmp.eq.s32.totalorder %s25, 0
      %p52 = por %p50, %p51
      %s54 = sadd.s32 %s53, 1
      %p57 = scmp.eq.s32.totalorder %s19, 1
      %p58 = scmp.ne.s32.totalorder %s53, %s55
      %p59 = scmp.eq.s32.totalorder %s19, 0
      %p60 = por %p58, %p59
      %p61 = scmp.ne.s32.totalorder %s53, %s55
      %p62 = scmp.eq.s32.totalorder %s24, 1
      %p63 = por %p61, %p62
      %p64 = scmp.ne.s32.totalorder %s55, %s56
      %p65 = scmp.eq.s32.totalorder %s24, 0
      %p66 = por %p64, %p65
      %p67 = scmp.ne.s32.totalorder %s55, %s56
      %p68 = scmp.eq.s32.totalorder %s25, 1
      %p69 = por %p67, %p68
      %p71 = scmp.ne.s32.totalorder %s56, %s70
      %p72 = scmp.eq.s32.totalorder %s25, 0
      %p73 = por %p71, %p72
      %s75 = sadd.s32 %s74, 1
      %p78 = scmp.eq.s32.totalorder %s19, 1
      %p79 = scmp.ne.s32.totalorder %s74, %s76
      %p80 = scmp.eq.s32.totalorder %s19, 0
      %p81 = por %p79, %p80
      %p82 = scmp.ne.s32.totalorder %s74, %s76
      %p83 = scmp.eq.s32.totalorder %s24, 1
      %p84 = por %p82, %p83
      %p85 = scmp.ne.s32.totalorder %s76, %s77
      %p86 = scmp.eq.s32.totalorder %s24, 0
      %p87 = por %p85, %p86
      %p88 = scmp.ne.s32.totalorder %s76, %s77
      %p89 = scmp.eq.s32.totalorder %s25, 1
      %p90 = por %p88, %p89
      %p92 = scmp.ne.s32.totalorder %s77, %s91
      %p93 = scmp.eq.s32.totalorder %s25, 0
      %p94 = por %p92, %p93
      %s96 = sadd.s32 %s95, 1
      %p99 = scmp.eq.s32.totalorder %s19, 1
      %p100 = scmp.ne.s32.totalorder %s95, %s97
      %p101 = scmp.eq.s32.totalorder %s19, 0
      %p102 = por %p100, %p101
      %p103 = scmp.ne.s32.totalorder %s95, %s97
      %p104 = scmp.eq.s32.totalorder %s24, 1
      %p105 = por %p103, %p104
      %p106 = scmp.ne.s32.totalorder %s97, %s98
      %p107 = scmp.eq.s32.totalorder %s24, 0
      %p108 = por %p106, %p107
      %p109 = scmp.ne.s32.totalorder %s97, %s98
      %p110 = scmp.eq.s32.totalorder %s25, 1
      %p111 = por %p109, %p110
      %p113 = scmp.ne.s32.totalorder %s98, %s112
      %p114 = scmp.eq.s32.totalorder %s25, 0
      %p115 = por %p113, %p114
      %s117 = sadd.s32 %s116, 1
      %p120 = scmp.eq.s32.totalorder %s19, 1
      %p121 = scmp.ne.s32.totalorder %s116, %s118
      %p122 = scmp.eq.s32.totalorder %s19, 0
      %p123 = por %p121, %p122
      %p124 = scmp.ne.s32.totalorder %s116, %s118
      %p125 = scmp.eq.s32.totalorder %s24, 1
      %p126 = por %p124, %p125
      %p127 = scmp.ne.s32.totalorder %s118, %s119
      %p128 = scmp.eq.s32.totalorder %s24, 0
      %p129 = por %p127, %p128
      %p130 = scmp.ne.s32.totalorder %s118, %s119
      %p131 = scmp.eq.s32.totalorder %s25, 1
      %p132 = por %p130, %p131
      %p134 = scmp.ne.s32.totalorder %s119, %s133
      %p135 = scmp.eq.s32.totalorder %s25, 0
      %p136 = por %p134, %p135
      %s137 = ssub.s32 %s19, %s26
      %p138 = scmp.eq.s32.totalorder %s137, 0
      %s140 = sadd.s32 %s139, 1
      %s141 = scalar_select %p138, %s139, %s140
      %p144 = pneg %p138
      %p145 = scmp.eq.s32.totalorder %s19, 1
      %p146 = por %p144, %p145
      %p147 = scmp.ne.s32.totalorder %s139, %s142
      %p148 = scmp.eq.s32.totalorder %s19, 0
      %p149 = por %p147, %p148
      %p150 = scmp.ne.s32.totalorder %s139, %s142
      %p151 = scmp.eq.s32.totalorder %s24, 1
      %p152 = por %p150, %p151
      %p153 = scmp.ne.s32.totalorder %s142, %s143
      %p154 = scmp.eq.s32.totalorder %s24, 0
      %p155 = por %p153, %p154
      %p156 = scmp.ne.s32.totalorder %s142, %s143
      %p157 = scmp.eq.s32.totalorder %s25, 1
      %p158 = por %p156, %p157
      %p160 = scmp.ne.s32.totalorder %s143, %s159
      %p161 = scmp.eq.s32.totalorder %s25, 0
      %p162 = por %p160, %p161
      %p163 = scmp.le.s32.totalorder 1, %s19
      %p164 = scmp.lt.s32.totalorder %s19, 3
      %p165 = pnand %p163, %p164
      %p166 = pneg %p165
      // Predicated region
      $region9: #{tpu_custom_call.1} parent=5 // pred_check
        _
      $region10: #{tpu_custom_call.1} parent=5 // pred_check_branch
        %168 = sbr.rel (%p165) target = $region12
      $region11: #{tpu_custom_call.1} parent=5 // pred_region
        %s169 = ssub.s32 %s19, 1
        // Predicated region
        $region13: #{tpu_custom_call.1} parent=11 // pred_check
          %p170 = pneg %p66
        $region14: #{tpu_custom_call.1} parent=11 // pred_check_branch
          %172 = sbr.rel (%p170) target = $region16
        $region15: #{tpu_custom_call.1} parent=11 // pred_region
          %s174 = ssub.s32 128, 128
          %175 = vsyncadd [#allocation7], %s174
          %s177 = sshll.u32 [#allocation6], 4
          %s178 = int_to_ptr.vmem [resolvable:$true] %s177
          %180 = dma.hbm_to_vmem [thread:$0]  %s1, 128, %s178, [#allocation7]
        $region16: #{tpu_custom_call.1} parent=11 // pred_fallthru
          _
        // Predicated region
        $region17: #{tpu_custom_call.1} parent=11 // pred_check
          %p181 = pneg %p87
        $region18: #{tpu_custom_call.1} parent=11 // pred_check_branch
          %183 = sbr.rel (%p181) target = $region20
        $region19: #{tpu_custom_call.1} parent=11 // pred_region
          %s185 = ssub.s32 128, 128
          %186 = vsyncadd [#allocation7], %s185
          %s188 = sshll.u32 [#allocation8], 4
          %s189 = int_to_ptr.vmem [resolvable:$true] %s188
          %191 = dma.hbm_to_vmem [thread:$0]  %s2, 128, %s189, [#allocation7]
        $region20: #{tpu_custom_call.1} parent=11 // pred_fallthru
          _
        // Predicated region
        $region21: #{tpu_custom_call.1} parent=11 // pred_check
          %p192 = pneg %p108
        $region22: #{tpu_custom_call.1} parent=11 // pred_check_branch
          %194 = sbr.rel (%p192) target = $region24
        $region23: #{tpu_custom_call.1} parent=11 // pred_region
          %s196 = ssub.s32 128, 128
          %197 = vsyncadd [#allocation10], %s196
          %s199 = sshll.u32 [#allocation9], 4
          %s200 = int_to_ptr.vmem [resolvable:$true] %s199
          %202 = dma.hbm_to_vmem [thread:$0]  %s3, 128, %s200, [#allocation10]
        $region24: #{tpu_custom_call.1} parent=11 // pred_fallthru
          _
        // Predicated region
        $region25: #{tpu_custom_call.1} parent=11 // pred_check
          %p203 = pneg %p129
        $region26: #{tpu_custom_call.1} parent=11 // pred_check_branch
          %205 = sbr.rel (%p203) target = $region28
        $region27: #{tpu_custom_call.1} parent=11 // pred_region
          %s207 = ssub.s32 128, 128
          %208 = vsyncadd [#allocation10], %s207
          %s210 = sshll.u32 [#allocation11], 4
          %s211 = int_to_ptr.vmem [resolvable:$true] %s210
          %213 = dma.hbm_to_vmem [thread:$0]  %s4, 128, %s211, [#allocation10]
        $region28: #{tpu_custom_call.1} parent=11 // pred_fallthru
          _
      $region12: #{tpu_custom_call.1} parent=5 // pred_fallthru
        _
      %p214 = scmp.lt.s32.totalorder %s19, 2
      // Predicated region
      $region29: #{tpu_custom_call.1} parent=5 // pred_check
        %p215 = pneg %p214
      $region30: #{tpu_custom_call.1} parent=5 // pred_check_branch
        %217 = sbr.rel (%p215) target = $region32
      $region31: #{tpu_custom_call.1} parent=5 // pred_region
        // Predicated region
        $region33: #{tpu_custom_call.1} parent=31 // pred_check
          %p218 = pneg %p39
        $region34: #{tpu_custom_call.1} parent=31 // pred_check_branch
          %220 = sbr.rel (%p218) target = $region36
        $region35: #{tpu_custom_call.1} parent=31 // pred_region
          %s221 = sand.u32 %s29, 1
          %s222 = scalar_lea.sflag [#allocation4], %s221
          %s223 = sand.u32 %s29, 1
          %s224 = smul.addr %s223, 20
          %s225 = scalar_lea.vmem [#allocation3], %s224
          %s227 = ssub.s32 320, 320
          %228 = vsyncadd %s222, %s227
          %s229 = smul.addr %s19, 5
          %s230 = smul.addr %s229, 64
          %s231 = scalar_lea.hbm %s0, %s230
          %s233 = sshll.u32 %s225, 4
          %s234 = int_to_ptr.vmem [resolvable:$true] %s233
          %236 = dma.hbm_to_vmem [thread:$0]  %s231, 320, %s234, %s222
        $region36: #{tpu_custom_call.1} parent=31 // pred_fallthru
          _
      $region32: #{tpu_custom_call.1} parent=5 // pred_fallthru
        _
      %p237 = scmp.le.s32.totalorder 1, %s19
      %p238 = scmp.lt.s32.totalorder %s19, 3
      %p239 = pnand %p237, %p238
      %p240 = pneg %p239
      // Predicated region
      $region37: #{tpu_custom_call.1} parent=5 // pred_check
        _
      $region38: #{tpu_custom_call.1} parent=5 // pred_check_branch
        %242 = sbr.rel (%p239) target = $region40
      $region39: #{tpu_custom_call.1} parent=5 // pred_region
        %s243 = ssub.s32 %s19, 1
        %s244 = sand.u32 %s32, 1
        %s245 = scalar_lea.sflag [#allocation4], %s244
        %s246 = sand.u32 %s32, 1
        %s247 = smul.addr %s246, 20
        %s248 = scalar_lea.vmem [#allocation3], %s247
        // Predicated region
        $region41: #{tpu_custom_call.1} parent=39 // pred_check
          %p249 = pneg %p45
        $region42: #{tpu_custom_call.1} parent=39 // pred_check_branch
          %251 = sbr.rel (%p249) target = $region44
        $region43: #{tpu_custom_call.1} parent=39 // pred_region
          %252 = dma.done %s245, 320
        $region44: #{tpu_custom_call.1} parent=39 // pred_fallthru
          _
        // Predicated region
        $region45: #{tpu_custom_call.1} parent=39 // pred_check
          %p253 = pneg %p66
        $region46: #{tpu_custom_call.1} parent=39 // pred_check_branch
          %255 = sbr.rel (%p253) target = $region48
        $region47: #{tpu_custom_call.1} parent=39 // pred_region
          %256 = dma.done [#allocation7], 128
        $region48: #{tpu_custom_call.1} parent=39 // pred_fallthru
          _
        // Predicated region
        $region49: #{tpu_custom_call.1} parent=39 // pred_check
          %p257 = pneg %p87
        $region50: #{tpu_custom_call.1} parent=39 // pred_check_branch
          %259 = sbr.rel (%p257) target = $region52
        $region51: #{tpu_custom_call.1} parent=39 // pred_region
          %260 = dma.done [#allocation7], 128
        $region52: #{tpu_custom_call.1} parent=39 // pred_fallthru
          _
        // Predicated region
        $region53: #{tpu_custom_call.1} parent=39 // pred_check
          %p261 = pneg %p108
        $region54: #{tpu_custom_call.1} parent=39 // pred_check_branch
          %263 = sbr.rel (%p261) target = $region56
        $region55: #{tpu_custom_call.1} parent=39 // pred_region
          %264 = dma.done [#allocation10], 128
        $region56: #{tpu_custom_call.1} parent=39 // pred_fallthru
          _
        // Predicated region
        $region57: #{tpu_custom_call.1} parent=39 // pred_check
          %p265 = pneg %p129
        $region58: #{tpu_custom_call.1} parent=39 // pred_check_branch
          %267 = sbr.rel (%p265) target = $region60
        $region59: #{tpu_custom_call.1} parent=39 // pred_region
          %268 = dma.done [#allocation10], 128
        $region60: #{tpu_custom_call.1} parent=39 // pred_fallthru
          _
        %s269 = sand.u32 %s32, 1
        %s270 = scalar_lea.sflag [#allocation4], %s269
        %s271 = sand.u32 %s32, 1
        %s272 = smul.addr %s271, 20
        %s273 = scalar_lea.vmem [#allocation3], %s272
        %p274 = pneg %p45
        %p275 = pneg %p42
        %p276 = pneg %p66
        %p277 = pneg %p63
        %p278 = pneg %p87
        %p279 = pneg %p84
        %p280 = pneg %p108
        %p281 = pneg %p105
        %p282 = pneg %p129
        %p283 = pneg %p126
        %p284 = pneg %p155
        %p285 = pneg %p152
        %s286 = sand.u32 %s142, 1
        %s287 = scalar_lea.sflag [#allocation5], %s286
        %s288 = sand.u32 %s142, 1
        %s289 = smul.addr %s288, 24
        %s290 = scalar_lea.vmem [#allocation12], %s289
        %v292 = vld [vmem:[%s248] sm:$0xff]
        %v293 = vld [vmem:[%s248 + $0x8] sm:$0xff]
        %v294 = vld [vmem:[%s248 + $0x10] sm:$0xf]
        %v295 = vlaneseq
        %v296 = vand.u32 %v295, 127
        %v297 = vadd.s32 %v296, 128
        %v298 = vadd.s32 %v296, 256
        %vm299 = vcmp.lt.s32.totalorder %v296, 0
        %v300 = vsub.s32 0, %v296
        %v301 = vsel %vm299, %v300, %v296
        %v302 = vmul.u32.u64.compose %v301, 2863311531
        %v303 = vextract.low.u32 %v302
        %v304 = vextract.high.u32 %v302
        %v305 = vshrl.u32 %v304, 4
        %v306 = vmul.u32 %v305, 24
        %v307 = vsub.s32 %v301, %v306
        %v308 = vsub.s32 0, %v307
        %v309 = vsel %vm299, %v308, %v307
        %vm310 = vcmp.lt.s32.totalorder %v297, 0
        %v311 = vsub.s32 0, %v297
        %v312 = vsel %vm310, %v311, %v297
        %v313 = vmul.u32.u64.compose %v312, 2863311531
        %v314 = vextract.low.u32 %v313
        %v315 = vextract.high.u32 %v313
        %v316 = vshrl.u32 %v315, 4
        %v317 = vmul.u32 %v316, 24
        %v318 = vsub.s32 %v312, %v317
        %v319 = vsub.s32 0, %v318
        %v320 = vsel %vm310, %v319, %v318
        %vm321 = vcmp.lt.s32.totalorder %v298, 0
        %v322 = vsub.s32 0, %v298
        %v323 = vsel %vm321, %v322, %v298
        %v324 = vmul.u32.u64.compose %v323, 2863311531
        %v325 = vextract.low.u32 %v324
        %v326 = vextract.high.u32 %v324
        %v327 = vshrl.u32 %v326, 4
        %v328 = vmul.u32 %v327, 24
        %v329 = vsub.s32 %v323, %v328
        %v330 = vsub.s32 0, %v329
        %v331 = vsel %vm321, %v330, %v329
        %vm332 = vcmp.ne.s32.totalorder %v309, 0
        %vm333 = vcmp.ne.s32.totalorder %v320, 0
        %vm334 = vcmp.ne.s32.totalorder %v331, 0
        %vm335 = vcmp.lt.s32.totalorder %v309, 0
        %vm336 = vcmp.lt.s32.totalorder %v320, 0
        %vm337 = vcmp.lt.s32.totalorder %v331, 0
        %vm338 = vmand %vm335, %vm332
        %vm339 = vmand %vm336, %vm333
        %vm340 = vmand %vm337, %vm334
        %v341 = vadd.s32 %v309, 24
        %v342 = vadd.s32 %v320, 24
        %v343 = vadd.s32 %v331, 24
        %v344 = vsel %vm338, %v341, %v309
        %v345 = vsel %vm339, %v342, %v320
        %v346 = vsel %vm340, %v343, %v331
        %vm347 = vcmp.lt.s32.totalorder %v344, 16
        %vm348 = vcmp.lt.s32.totalorder %v345, 16
        %vm349 = vcmp.lt.s32.totalorder %v346, 16
        %v350 = vld [vmem:[#allocation6] sm:$0xff]
        %v352 = vunpack.c.l.b16 %v350
        %v353 = vpack.c.b16 %v352, %v352
        %354 = vrot.lane.b32.xlu0 %v353, 120
        %v355 = vpop.permute.xlu0 %354
        %v358 = vunpack.c.l.b16 %v292
        %v359 = vunpack.c.h.b16 %v292
        %v360 = vunpack.c.l.b16 %v293
        %v361 = vunpack.c.h.b16 %v293
        %v362 = vpack.c.b16 %v358, %v358
        %v363 = vpack.c.b16 %v359, %v359
        %v364 = vpack.c.b16 %v360, %v360
        %v365 = vpack.c.b16 %v361, %v361
        %366 = vrot.lane.b32.xlu0 %v362, 49
        %v367 = vpop.permute.xlu0 %366
        %368 = vrot.lane.b32.xlu0 %v363, 49
        %v369 = vpop.permute.xlu0 %368
        %370 = vrot.lane.b32.xlu0 %v364, 49
        %v371 = vpop.permute.xlu0 %370
        %372 = vrot.lane.b32.xlu0 %v365, 49
        %v373 = vpop.permute.xlu0 %372
        %vm374 = vcmask 400384
        %v375 = vsel %vm374, %v367, %v369
        %v376 = vsel %vm374, %v369, %v371
        %v377 = vsel %vm374, %v371, %v373
        %vm378 = vcmask 64512
        %v380 = vsel %vm378, %v355, 0
        %vm382 = vcmask 1043456
        %v384 = vsel %vm382, %v375, 0
        %v387 = vsel %vm382, %v376, 0
        %v390 = vsel %vm382, %v377, 0
        %392 = vmatprep.subr.bf16.mxu0 0
        %393 = vmatpush1.bf16.msra.mxu0 0
        %394 = vmatprep.subr.bf16.mxu0 0
        %395 = vmatpush1.bf16.msra.mxu0 0
        %396 = vmatprep.subr.bf16.mxu0 0
        %397 = vmatpush1.bf16.msra.mxu0 0
        %398 = vmatprep.subr.bf16.mxu0 0
        %399 = vmatpush1.bf16.msra.mxu0 0
        %400 = vmatprep.subr.bf16.mxu0 0
        %401 = vmatpush1.bf16.msra.mxu0 0
        %402 = vmatprep.subr.bf16.mxu0 0
        %403 = vmatpush1.bf16.msra.mxu0 0
        %404 = vmatprep.subr.bf16.mxu0 0
        %405 = vmatpush1.bf16.msra.mxu0 0
        %406 = vmatprep.subr.bf16.mxu0 %v387
        %407 = vmatpush1.bf16.msra.mxu0 %v384
        %408 = vmatprep.subr.bf16.mxu0 0
        %409 = vmatpush2.bf16.msra.mxu0 0
        %410 = vmatprep.subr.bf16.mxu0 0
        %411 = vmatpush2.bf16.msra.mxu0 0
        %412 = vmatprep.subr.bf16.mxu0 0
        %413 = vmatpush2.bf16.msra.mxu0 0
        %414 = vmatprep.subr.bf16.mxu0 0
        %415 = vmatpush2.bf16.msra.mxu0 0
        %416 = vmatprep.subr.bf16.mxu0 0
        %417 = vmatpush2.bf16.msra.mxu0 0
        %418 = vmatprep.subr.bf16.mxu0 0
        %419 = vmatpush2.bf16.msra.mxu0 0
        %420 = vmatprep.subr.bf16.mxu0 0
        %421 = vmatpush2.bf16.msra.mxu0 0
        %422 = vmatprep.subr.bf16.mxu0 0
        %423 = vmatpush2.bf16.msra.mxu0 0
        %424 = vmatprep.mubr.bf16.mxu0 0
        %425 = vmatmul.mubr.bf16.gmra.mxu0 %v380
        %v426 = vpop.f32.mrf.mxu0
        %v427 = vadd.f32 0.0, %v426
        %v428 = vpop.f32.mrf.mxu0
        %v429 = vadd.f32 0.0, %v428
        %v430 = vpop.f32.mrf.mxu0
        %v431 = vpop.f32.mrf.mxu0
        %432 = vdwg.mxu0
        %433 = vmatprep.subr.bf16.mxu0 0
        %434 = vmatpush1.bf16.msra.mxu0 0
        %435 = vmatprep.subr.bf16.mxu0 0
        %436 = vmatpush1.bf16.msra.mxu0 0
        %437 = vmatprep.subr.bf16.mxu0 0
        %438 = vmatpush1.bf16.msra.mxu0 0
        %439 = vmatprep.subr.bf16.mxu0 0
        %440 = vmatpush1.bf16.msra.mxu0 0
        %441 = vmatprep.subr.bf16.mxu0 0
        %442 = vmatpush1.bf16.msra.mxu0 0
        %443 = vmatprep.subr.bf16.mxu0 0
        %444 = vmatpush1.bf16.msra.mxu0 0
        %445 = vmatprep.subr.bf16.mxu0 0
        %446 = vmatpush1.bf16.msra.mxu0 0
        %447 = vmatprep.subr.bf16.mxu0 0
        %448 = vmatpush1.bf16.msra.mxu0 %v390
        %449 = vmatprep.subr.bf16.mxu0 0
        %450 = vmatpush2.bf16.msra.mxu0 0
        %451 = vmatprep.subr.bf16.mxu0 0
        %452 = vmatpush2.bf16.msra.mxu0 0
        %453 = vmatprep.subr.bf16.mxu0 0
        %454 = vmatpush2.bf16.msra.mxu0 0
        %455 = vmatprep.subr.bf16.mxu0 0
        %456 = vmatpush2.bf16.msra.mxu0 0
        %457 = vmatprep.subr.bf16.mxu0 0
        %458 = vmatpush2.bf16.msra.mxu0 0
        %459 = vmatprep.subr.bf16.mxu0 0
        %460 = vmatpush2.bf16.msra.mxu0 0
        %461 = vmatprep.subr.bf16.mxu0 0
        %462 = vmatpush2.bf16.msra.mxu0 0
        %463 = vmatprep.subr.bf16.mxu0 0
        %464 = vmatpush2.bf16.msra.mxu0 0
        %465 = vmatprep.mubr.bf16.mxu0 0
        %466 = vmatmul.mubr.bf16.gmra.mxu0 %v380
        %v467 = vpop.f32.mrf.mxu0
        %v468 = vadd.f32 0.0, %v467
        %v469 = vpop.f32.mrf.mxu0
        %v470 = vpop.f32.mrf.mxu0
        %v471 = vpop.f32.mrf.mxu0
        %472 = vdwg.mxu0
        %473 = vrot.lane.b32.xlu0 %v362, 50
        %v474 = vpop.permute.xlu0 %473
        %475 = vrot.lane.b32.xlu0 %v363, 50
        %v476 = vpop.permute.xlu0 %475
        %477 = vrot.lane.b32.xlu0 %v364, 50
        %v478 = vpop.permute.xlu0 %477
        %479 = vrot.lane.b32.xlu0 %v365, 50
        %v480 = vpop.permute.xlu0 %479
        %vm481 = vcmask 408576
        %v482 = vsel %vm481, %v474, %v476
        %v483 = vsel %vm481, %v476, %v478
        %v484 = vsel %vm481, %v478, %v480
        %v486 = vsel %vm378, %v350, 0
        %v489 = vsel %vm382, %v482, 0
        %v492 = vsel %vm382, %v483, 0
        %v495 = vsel %vm382, %v484, 0
        %497 = vmatprep.subr.bf16.mxu0 0
        %498 = vmatpush1.bf16.msra.mxu0 0
        %499 = vmatprep.subr.bf16.mxu0 0
        %500 = vmatpush1.bf16.msra.mxu0 0
        %501 = vmatprep.subr.bf16.mxu0 0
        %502 = vmatpush1.bf16.msra.mxu0 0
        %503 = vmatprep.subr.bf16.mxu0 0
        %504 = vmatpush1.bf16.msra.mxu0 0
        %505 = vmatprep.subr.bf16.mxu0 0
        %506 = vmatpush1.bf16.msra.mxu0 0
        %507 = vmatprep.subr.bf16.mxu0 0
        %508 = vmatpush1.bf16.msra.mxu0 0
        %509 = vmatprep.subr.bf16.mxu0 0
        %510 = vmatpush1.bf16.msra.mxu0 0
        %511 = vmatprep.subr.bf16.mxu0 %v492
        %512 = vmatpush1.bf16.msra.mxu0 %v489
        %513 = vmatprep.subr.bf16.mxu0 0
        %514 = vmatpush2.bf16.msra.mxu0 0
        %515 = vmatprep.subr.bf16.mxu0 0
        %516 = vmatpush2.bf16.msra.mxu0 0
        %517 = vmatprep.subr.bf16.mxu0 0
        %518 = vmatpush2.bf16.msra.mxu0 0
        %519 = vmatprep.subr.bf16.mxu0 0
        %520 = vmatpush2.bf16.msra.mxu0 0
        %521 = vmatprep.subr.bf16.mxu0 0
        %522 = vmatpush2.bf16.msra.mxu0 0
        %523 = vmatprep.subr.bf16.mxu0 0
        %524 = vmatpush2.bf16.msra.mxu0 0
        %525 = vmatprep.subr.bf16.mxu0 0
        %526 = vmatpush2.bf16.msra.mxu0 0
        %527 = vmatprep.subr.bf16.mxu0 0
        %528 = vmatpush2.bf16.msra.mxu0 0
        %529 = vmatprep.mubr.bf16.mxu0 0
        %530 = vmatmul.mubr.bf16.gmra.mxu0 %v486
        %v531 = vpop.f32.mrf.mxu0
        %v532 = vadd.f32 %v427, %v531
        %v533 = vpop.f32.mrf.mxu0
        %v534 = vadd.f32 %v429, %v533
        %v535 = vpop.f32.mrf.mxu0
        %v536 = vpop.f32.mrf.mxu0
        %537 = vdwg.mxu0
        %538 = vmatprep.subr.bf16.mxu0 0
        %539 = vmatpush1.bf16.msra.mxu0 0
        %540 = vmatprep.subr.bf16.mxu0 0
        %541 = vmatpush1.bf16.msra.mxu0 0
        %542 = vmatprep.subr.bf16.mxu0 0
        %543 = vmatpush1.bf16.msra.mxu0 0
        %544 = vmatprep.subr.bf16.mxu0 0
        %545 = vmatpush1.bf16.msra.mxu0 0
        %546 = vmatprep.subr.bf16.mxu0 0
        %547 = vmatpush1.bf16.msra.mxu0 0
        %548 = vmatprep.subr.bf16.mxu0 0
        %549 = vmatpush1.bf16.msra.mxu0 0
        %550 = vmatprep.subr.bf16.mxu0 0
        %551 = vmatpush1.bf16.msra.mxu0 0
        %552 = vmatprep.subr.bf16.mxu0 0
        %553 = vmatpush1.bf16.msra.mxu0 %v495
        %554 = vmatprep.subr.bf16.mxu0 0
        %555 = vmatpush2.bf16.msra.mxu0 0
        %556 = vmatprep.subr.bf16.mxu0 0
        %557 = vmatpush2.bf16.msra.mxu0 0
        %558 = vmatprep.subr.bf16.mxu0 0
        %559 = vmatpush2.bf16.msra.mxu0 0
        %560 = vmatprep.subr.bf16.mxu0 0
        %561 = vmatpush2.bf16.msra.mxu0 0
        %562 = vmatprep.subr.bf16.mxu0 0
        %563 = vmatpush2.bf16.msra.mxu0 0
        %564 = vmatprep.subr.bf16.mxu0 0
        %565 = vmatpush2.bf16.msra.mxu0 0
        %566 = vmatprep.subr.bf16.mxu0 0
        %567 = vmatpush2.bf16.msra.mxu0 0
        %568 = vmatprep.subr.bf16.mxu0 0
        %569 = vmatpush2.bf16.msra.mxu0 0
        %570 = vmatprep.mubr.bf16.mxu0 0
        %571 = vmatmul.mubr.bf16.gmra.mxu0 %v486
        %v572 = vpop.f32.mrf.mxu0
        %v573 = vadd.f32 %v468, %v572
        %v574 = vpop.f32.mrf.mxu0
        %v575 = vpop.f32.mrf.mxu0
        %v576 = vpop.f32.mrf.mxu0
        %577 = vdwg.mxu0
        %578 = vrot.lane.b32.xlu0 %v353, 112
        %v579 = vpop.permute.xlu0 %578
        %580 = vrot.lane.b32.xlu0 %v362, 48
        %v581 = vpop.permute.xlu0 %580
        %582 = vrot.lane.b32.xlu0 %v363, 48
        %v583 = vpop.permute.xlu0 %582
        %584 = vrot.lane.b32.xlu0 %v364, 48
        %v585 = vpop.permute.xlu0 %584
        %586 = vrot.lane.b32.xlu0 %v365, 48
        %v587 = vpop.permute.xlu0 %586
        %vm588 = vcmask 392192
        %v589 = vsel %vm588, %v581, %v583
        %v590 = vsel %vm588, %v583, %v585
        %v591 = vsel %vm588, %v585, %v587
        %v593 = vsel %vm378, %v579, 0
        %v596 = vsel %vm382, %v589, 0
        %v599 = vsel %vm382, %v590, 0
        %v602 = vsel %vm382, %v591, 0
        %604 = vmatprep.subr.bf16.mxu0 0
        %605 = vmatpush1.bf16.msra.mxu0 0
        %606 = vmatprep.subr.bf16.mxu0 0
        %607 = vmatpush1.bf16.msra.mxu0 0
        %608 = vmatprep.subr.bf16.mxu0 0
        %609 = vmatpush1.bf16.msra.mxu0 0
        %610 = vmatprep.subr.bf16.mxu0 0
        %611 = vmatpush1.bf16.msra.mxu0 0
        %612 = vmatprep.subr.bf16.mxu0 0
        %613 = vmatpush1.bf16.msra.mxu0 0
        %614 = vmatprep.subr.bf16.mxu0 0
        %615 = vmatpush1.bf16.msra.mxu0 0
        %616 = vmatprep.subr.bf16.mxu0 0
        %617 = vmatpush1.bf16.msra.mxu0 0
        %618 = vmatprep.subr.bf16.mxu0 %v599
        %619 = vmatpush1.bf16.msra.mxu0 %v596
        %620 = vmatprep.subr.bf16.mxu0 0
        %621 = vmatpush2.bf16.msra.mxu0 0
        %622 = vmatprep.subr.bf16.mxu0 0
        %623 = vmatpush2.bf16.msra.mxu0 0
        %624 = vmatprep.subr.bf16.mxu0 0
        %625 = vmatpush2.bf16.msra.mxu0 0
        %626 = vmatprep.subr.bf16.mxu0 0
        %627 = vmatpush2.bf16.msra.mxu0 0
        %628 = vmatprep.subr.bf16.mxu0 0
        %629 = vmatpush2.bf16.msra.mxu0 0
        %630 = vmatprep.subr.bf16.mxu0 0
        %631 = vmatpush2.bf16.msra.mxu0 0
        %632 = vmatprep.subr.bf16.mxu0 0
        %633 = vmatpush2.bf16.msra.mxu0 0
        %634 = vmatprep.subr.bf16.mxu0 0
        %635 = vmatpush2.bf16.msra.mxu0 0
        %636 = vmatprep.mubr.bf16.mxu0 0
        %637 = vmatmul.mubr.bf16.gmra.mxu0 %v593
        %v638 = vpop.f32.mrf.mxu0
        %v639 = vadd.f32 0.0, %v638
        %v640 = vpop.f32.mrf.mxu0
        %v641 = vadd.f32 0.0, %v640
        %v642 = vpop.f32.mrf.mxu0
        %v643 = vpop.f32.mrf.mxu0
        %644 = vdwg.mxu0
        %645 = vmatprep.subr.bf16.mxu0 0
        %646 = vmatpush1.bf16.msra.mxu0 0
        %647 = vmatprep.subr.bf16.mxu0 0
        %648 = vmatpush1.bf16.msra.mxu0 0
        %649 = vmatprep.subr.bf16.mxu0 0
        %650 = vmatpush1.bf16.msra.mxu0 0
        %651 = vmatprep.subr.bf16.mxu0 0
        %652 = vmatpush1.bf16.msra.mxu0 0
        %653 = vmatprep.subr.bf16.mxu0 0
        %654 = vmatpush1.bf16.msra.mxu0 0
        %655 = vmatprep.subr.bf16.mxu0 0
        %656 = vmatpush1.bf16.msra.mxu0 0
        %657 = vmatprep.subr.bf16.mxu0 0
        %658 = vmatpush1.bf16.msra.mxu0 0
        %659 = vmatprep.subr.bf16.mxu0 0
        %660 = vmatpush1.bf16.msra.mxu0 %v602
        %661 = vmatprep.subr.bf16.mxu0 0
        %662 = vmatpush2.bf16.msra.mxu0 0
        %663 = vmatprep.subr.bf16.mxu0 0
        %664 = vmatpush2.bf16.msra.mxu0 0
        %665 = vmatprep.subr.bf16.mxu0 0
        %666 = vmatpush2.bf16.msra.mxu0 0
        %667 = vmatprep.subr.bf16.mxu0 0
        %668 = vmatpush2.bf16.msra.mxu0 0
        %669 = vmatprep.subr.bf16.mxu0 0
        %670 = vmatpush2.bf16.msra.mxu0 0
        %671 = vmatprep.subr.bf16.mxu0 0
        %672 = vmatpush2.bf16.msra.mxu0 0
        %673 = vmatprep.subr.bf16.mxu0 0
        %674 = vmatpush2.bf16.msra.mxu0 0
        %675 = vmatprep.subr.bf16.mxu0 0
        %676 = vmatpush2.bf16.msra.mxu0 0
        %677 = vmatprep.mubr.bf16.mxu0 0
        %678 = vmatmul.mubr.bf16.gmra.mxu0 %v593
        %v679 = vpop.f32.mrf.mxu0
        %v680 = vadd.f32 0.0, %v679
        %v681 = vpop.f32.mrf.mxu0
        %v682 = vpop.f32.mrf.mxu0
        %v683 = vpop.f32.mrf.mxu0
        %684 = vdwg.mxu0
        %v685 = vadd.f32 %v532, %v639
        %v686 = vadd.f32 %v534, %v641
        %v687 = vadd.f32 %v573, %v680
        %688 = vrot.lane.b32.xlu0 %v353, 104
        %v689 = vpop.permute.xlu0 %688
        %690 = vrot.lane.b32.xlu0 %v362, 47
        %v691 = vpop.permute.xlu0 %690
        %692 = vrot.lane.b32.xlu0 %v363, 47
        %v693 = vpop.permute.xlu0 %692
        %694 = vrot.lane.b32.xlu0 %v364, 47
        %v695 = vpop.permute.xlu0 %694
        %696 = vrot.lane.b32.xlu0 %v365, 47
        %v697 = vpop.permute.xlu0 %696
        %vm698 = vcmask 384000
        %v699 = vsel %vm698, %v691, %v693
        %v700 = vsel %vm698, %v693, %v695
        %v701 = vsel %vm698, %v695, %v697
        %v703 = vsel %vm378, %v689, 0
        %v706 = vsel %vm382, %v699, 0
        %v709 = vsel %vm382, %v700, 0
        %v712 = vsel %vm382, %v701, 0
        %714 = vmatprep.subr.bf16.mxu0 0
        %715 = vmatpush1.bf16.msra.mxu0 0
        %716 = vmatprep.subr.bf16.mxu0 0
        %717 = vmatpush1.bf16.msra.mxu0 0
        %718 = vmatprep.subr.bf16.mxu0 0
        %719 = vmatpush1.bf16.msra.mxu0 0
        %720 = vmatprep.subr.bf16.mxu0 0
        %721 = vmatpush1.bf16.msra.mxu0 0
        %722 = vmatprep.subr.bf16.mxu0 0
        %723 = vmatpush1.bf16.msra.mxu0 0
        %724 = vmatprep.subr.bf16.mxu0 0
        %725 = vmatpush1.bf16.msra.mxu0 0
        %726 = vmatprep.subr.bf16.mxu0 0
        %727 = vmatpush1.bf16.msra.mxu0 0
        %728 = vmatprep.subr.bf16.mxu0 %v709
        %729 = vmatpush1.bf16.msra.mxu0 %v706
        %730 = vmatprep.subr.bf16.mxu0 0
        %731 = vmatpush2.bf16.msra.mxu0 0
        %732 = vmatprep.subr.bf16.mxu0 0
        %733 = vmatpush2.bf16.msra.mxu0 0
        %734 = vmatprep.subr.bf16.mxu0 0
        %735 = vmatpush2.bf16.msra.mxu0 0
        %736 = vmatprep.subr.bf16.mxu0 0
        %737 = vmatpush2.bf16.msra.mxu0 0
        %738 = vmatprep.subr.bf16.mxu0 0
        %739 = vmatpush2.bf16.msra.mxu0 0
        %740 = vmatprep.subr.bf16.mxu0 0
        %741 = vmatpush2.bf16.msra.mxu0 0
        %742 = vmatprep.subr.bf16.mxu0 0
        %743 = vmatpush2.bf16.msra.mxu0 0
        %744 = vmatprep.subr.bf16.mxu0 0
        %745 = vmatpush2.bf16.msra.mxu0 0
        %746 = vmatprep.mubr.bf16.mxu0 0
        %747 = vmatmul.mubr.bf16.gmra.mxu0 %v703
        %v748 = vpop.f32.mrf.mxu0
        %v749 = vadd.f32 0.0, %v748
        %v750 = vpop.f32.mrf.mxu0
        %v751 = vadd.f32 0.0, %v750
        %v752 = vpop.f32.mrf.mxu0
        %v753 = vpop.f32.mrf.mxu0
        %754 = vdwg.mxu0
        %755 = vmatprep.subr.bf16.mxu0 0
        %756 = vmatpush1.bf16.msra.mxu0 0
        %757 = vmatprep.subr.bf16.mxu0 0
        %758 = vmatpush1.bf16.msra.mxu0 0
        %759 = vmatprep.subr.bf16.mxu0 0
        %760 = vmatpush1.bf16.msra.mxu0 0
        %761 = vmatprep.subr.bf16.mxu0 0
        %762 = vmatpush1.bf16.msra.mxu0 0
        %763 = vmatprep.subr.bf16.mxu0 0
        %764 = vmatpush1.bf16.msra.mxu0 0
        %765 = vmatprep.subr.bf16.mxu0 0
        %766 = vmatpush1.bf16.msra.mxu0 0
        %767 = vmatprep.subr.bf16.mxu0 0
        %768 = vmatpush1.bf16.msra.mxu0 0
        %769 = vmatprep.subr.bf16.mxu0 0
        %770 = vmatpush1.bf16.msra.mxu0 %v712
        %771 = vmatprep.subr.bf16.mxu0 0
        %772 = vmatpush2.bf16.msra.mxu0 0
        %773 = vmatprep.subr.bf16.mxu0 0
        %774 = vmatpush2.bf16.msra.mxu0 0
        %775 = vmatprep.subr.bf16.mxu0 0
        %776 = vmatpush2.bf16.msra.mxu0 0
        %777 = vmatprep.subr.bf16.mxu0 0
        %778 = vmatpush2.bf16.msra.mxu0 0
        %779 = vmatprep.subr.bf16.mxu0 0
        %780 = vmatpush2.bf16.msra.mxu0 0
        %781 = vmatprep.subr.bf16.mxu0 0
        %782 = vmatpush2.bf16.msra.mxu0 0
        %783 = vmatprep.subr.bf16.mxu0 0
        %784 = vmatpush2.bf16.msra.mxu0 0
        %785 = vmatprep.subr.bf16.mxu0 0
        %786 = vmatpush2.bf16.msra.mxu0 0
        %787 = vmatprep.mubr.bf16.mxu0 0
        %788 = vmatmul.mubr.bf16.gmra.mxu0 %v703
        %v789 = vpop.f32.mrf.mxu0
        %v790 = vadd.f32 0.0, %v789
        %v791 = vpop.f32.mrf.mxu0
        %v792 = vpop.f32.mrf.mxu0
        %v793 = vpop.f32.mrf.mxu0
        %794 = vdwg.mxu0
        %v795 = vadd.f32 %v685, %v749
        %v796 = vadd.f32 %v686, %v751
        %v797 = vadd.f32 %v687, %v790
        %798 = vrot.lane.b32.xlu0 %v353, 96
        %v799 = vpop.permute.xlu0 %798
        %800 = vrot.lane.b32.xlu0 %v362, 46
        %v801 = vpop.permute.xlu0 %800
        %802 = vrot.lane.b32.xlu0 %v363, 46
        %v803 = vpop.permute.xlu0 %802
        %804 = vrot.lane.b32.xlu0 %v364, 46
        %v805 = vpop.permute.xlu0 %804
        %806 = vrot.lane.b32.xlu0 %v365, 46
        %v807 = vpop.permute.xlu0 %806
        %vm808 = vcmask 375808
        %v809 = vsel %vm808, %v801, %v803
        %v810 = vsel %vm808, %v803, %v805
        %v811 = vsel %vm808, %v805, %v807
        %v813 = vsel %vm378, %v799, 0
        %v816 = vsel %vm382, %v809, 0
        %v819 = vsel %vm382, %v810, 0
        %v822 = vsel %vm382, %v811, 0
        %824 = vmatprep.subr.bf16.mxu0 0
        %825 = vmatpush1.bf16.msra.mxu0 0
        %826 = vmatprep.subr.bf16.mxu0 0
        %827 = vmatpush1.bf16.msra.mxu0 0
        %828 = vmatprep.subr.bf16.mxu0 0
        %829 = vmatpush1.bf16.msra.mxu0 0
        %830 = vmatprep.subr.bf16.mxu0 0
        %831 = vmatpush1.bf16.msra.mxu0 0
        %832 = vmatprep.subr.bf16.mxu0 0
        %833 = vmatpush1.bf16.msra.mxu0 0
        %834 = vmatprep.subr.bf16.mxu0 0
        %835 = vmatpush1.bf16.msra.mxu0 0
        %836 = vmatprep.subr.bf16.mxu0 0
        %837 = vmatpush1.bf16.msra.mxu0 0
        %838 = vmatprep.subr.bf16.mxu0 %v819
        %839 = vmatpush1.bf16.msra.mxu0 %v816
        %840 = vmatprep.subr.bf16.mxu0 0
        %841 = vmatpush2.bf16.msra.mxu0 0
        %842 = vmatprep.subr.bf16.mxu0 0
        %843 = vmatpush2.bf16.msra.mxu0 0
        %844 = vmatprep.subr.bf16.mxu0 0
        %845 = vmatpush2.bf16.msra.mxu0 0
        %846 = vmatprep.subr.bf16.mxu0 0
        %847 = vmatpush2.bf16.msra.mxu0 0
        %848 = vmatprep.subr.bf16.mxu0 0
        %849 = vmatpush2.bf16.msra.mxu0 0
        %850 = vmatprep.subr.bf16.mxu0 0
        %851 = vmatpush2.bf16.msra.mxu0 0
        %852 = vmatprep.subr.bf16.mxu0 0
        %853 = vmatpush2.bf16.msra.mxu0 0
        %854 = vmatprep.subr.bf16.mxu0 0
        %855 = vmatpush2.bf16.msra.mxu0 0
        %856 = vmatprep.mubr.bf16.mxu0 0
        %857 = vmatmul.mubr.bf16.gmra.mxu0 %v813
        %v858 = vpop.f32.mrf.mxu0
        %v859 = vadd.f32 0.0, %v858
        %v860 = vpop.f32.mrf.mxu0
        %v861 = vadd.f32 0.0, %v860
        %v862 = vpop.f32.mrf.mxu0
        %v863 = vpop.f32.mrf.mxu0
        %864 = vdwg.mxu0
        %865 = vmatprep.subr.bf16.mxu0 0
        %866 = vmatpush1.bf16.msra.mxu0 0
        %867 = vmatprep.subr.bf16.mxu0 0
        %868 = vmatpush1.bf16.msra.mxu0 0
        %869 = vmatprep.subr.bf16.mxu0 0
        %870 = vmatpush1.bf16.msra.mxu0 0
        %871 = vmatprep.subr.bf16.mxu0 0
        %872 = vmatpush1.bf16.msra.mxu0 0
        %873 = vmatprep.subr.bf16.mxu0 0
        %874 = vmatpush1.bf16.msra.mxu0 0
        %875 = vmatprep.subr.bf16.mxu0 0
        %876 = vmatpush1.bf16.msra.mxu0 0
        %877 = vmatprep.subr.bf16.mxu0 0
        %878 = vmatpush1.bf16.msra.mxu0 0
        %879 = vmatprep.subr.bf16.mxu0 0
        %880 = vmatpush1.bf16.msra.mxu0 %v822
        %881 = vmatprep.subr.bf16.mxu0 0
        %882 = vmatpush2.bf16.msra.mxu0 0
        %883 = vmatprep.subr.bf16.mxu0 0
        %884 = vmatpush2.bf16.msra.mxu0 0
        %885 = vmatprep.subr.bf16.mxu0 0
        %886 = vmatpush2.bf16.msra.mxu0 0
        %887 = vmatprep.subr.bf16.mxu0 0
        %888 = vmatpush2.bf16.msra.mxu0 0
        %889 = vmatprep.subr.bf16.mxu0 0
        %890 = vmatpush2.bf16.msra.mxu0 0
        %891 = vmatprep.subr.bf16.mxu0 0
        %892 = vmatpush2.bf16.msra.mxu0 0
        %893 = vmatprep.subr.bf16.mxu0 0
        %894 = vmatpush2.bf16.msra.mxu0 0
        %895 = vmatprep.subr.bf16.mxu0 0
        %896 = vmatpush2.bf16.msra.mxu0 0
        %897 = vmatprep.mubr.bf16.mxu0 0
        %898 = vmatmul.mubr.bf16.gmra.mxu0 %v813
        %v899 = vpop.f32.mrf.mxu0
        %v900 = vadd.f32 0.0, %v899
        %v901 = vpop.f32.mrf.mxu0
        %v902 = vpop.f32.mrf.mxu0
        %v903 = vpop.f32.mrf.mxu0
        %904 = vdwg.mxu0
        %v905 = vadd.f32 %v795, %v859
        %v906 = vadd.f32 %v796, %v861
        %v907 = vadd.f32 %v797, %v900
        %908 = vrot.lane.b32.xlu0 %v353, 88
        %v909 = vpop.permute.xlu0 %908
        %910 = vrot.lane.b32.xlu0 %v362, 26
        %v911 = vpop.permute.xlu0 %910
        %912 = vrot.lane.b32.xlu0 %v363, 26
        %v913 = vpop.permute.xlu0 %912
        %914 = vrot.lane.b32.xlu0 %v364, 26
        %v915 = vpop.permute.xlu0 %914
        %916 = vrot.lane.b32.xlu0 %v365, 26
        %v917 = vpop.permute.xlu0 %916
        %vm918 = vcmask 211968
        %v919 = vsel %vm918, %v911, %v913
        %v920 = vsel %vm918, %v913, %v915
        %v921 = vsel %vm918, %v915, %v917
        %v923 = vsel %vm378, %v909, 0
        %v926 = vsel %vm382, %v919, 0
        %v929 = vsel %vm382, %v920, 0
        %v932 = vsel %vm382, %v921, 0
        %934 = vmatprep.subr.bf16.mxu0 0
        %935 = vmatpush1.bf16.msra.mxu0 0
        %936 = vmatprep.subr.bf16.mxu0 0
        %937 = vmatpush1.bf16.msra.mxu0 0
        %938 = vmatprep.subr.bf16.mxu0 0
        %939 = vmatpush1.bf16.msra.mxu0 0
        %940 = vmatprep.subr.bf16.mxu0 0
        %941 = vmatpush1.bf16.msra.mxu0 0
        %942 = vmatprep.subr.bf16.mxu0 0
        %943 = vmatpush1.bf16.msra.mxu0 0
        %944 = vmatprep.subr.bf16.mxu0 0
        %945 = vmatpush1.bf16.msra.mxu0 0
        %946 = vmatprep.subr.bf16.mxu0 0
        %947 = vmatpush1.bf16.msra.mxu0 0
        %948 = vmatprep.subr.bf16.mxu0 %v929
        %949 = vmatpush1.bf16.msra.mxu0 %v926
        %950 = vmatprep.subr.bf16.mxu0 0
        %951 = vmatpush2.bf16.msra.mxu0 0
        %952 = vmatprep.subr.bf16.mxu0 0
        %953 = vmatpush2.bf16.msra.mxu0 0
        %954 = vmatprep.subr.bf16.mxu0 0
        %955 = vmatpush2.bf16.msra.mxu0 0
        %956 = vmatprep.subr.bf16.mxu0 0
        %957 = vmatpush2.bf16.msra.mxu0 0
        %958 = vmatprep.subr.bf16.mxu0 0
        %959 = vmatpush2.bf16.msra.mxu0 0
        %960 = vmatprep.subr.bf16.mxu0 0
        %961 = vmatpush2.bf16.msra.mxu0 0
        %962 = vmatprep.subr.bf16.mxu0 0
        %963 = vmatpush2.bf16.msra.mxu0 0
        %964 = vmatprep.subr.bf16.mxu0 0
        %965 = vmatpush2.bf16.msra.mxu0 0
        %966 = vmatprep.mubr.bf16.mxu0 0
        %967 = vmatmul.mubr.bf16.gmra.mxu0 %v923
        %v968 = vpop.f32.mrf.mxu0
        %v969 = vadd.f32 0.0, %v968
        %v970 = vpop.f32.mrf.mxu0
        %v971 = vadd.f32 0.0, %v970
        %v972 = vpop.f32.mrf.mxu0
        %v973 = vpop.f32.mrf.mxu0
        %974 = vdwg.mxu0
        %975 = vmatprep.subr.bf16.mxu0 0
        %976 = vmatpush1.bf16.msra.mxu0 0
        %977 = vmatprep.subr.bf16.mxu0 0
        %978 = vmatpush1.bf16.msra.mxu0 0
        %979 = vmatprep.subr.bf16.mxu0 0
        %980 = vmatpush1.bf16.msra.mxu0 0
        %981 = vmatprep.subr.bf16.mxu0 0
        %982 = vmatpush1.bf16.msra.mxu0 0
        %983 = vmatprep.subr.bf16.mxu0 0
        %984 = vmatpush1.bf16.msra.mxu0 0
        %985 = vmatprep.subr.bf16.mxu0 0
        %986 = vmatpush1.bf16.msra.mxu0 0
        %987 = vmatprep.subr.bf16.mxu0 0
        %988 = vmatpush1.bf16.msra.mxu0 0
        %989 = vmatprep.subr.bf16.mxu0 0
        %990 = vmatpush1.bf16.msra.mxu0 %v932
        %991 = vmatprep.subr.bf16.mxu0 0
        %992 = vmatpush2.bf16.msra.mxu0 0
        %993 = vmatprep.subr.bf16.mxu0 0
        %994 = vmatpush2.bf16.msra.mxu0 0
        %995 = vmatprep.subr.bf16.mxu0 0
        %996 = vmatpush2.bf16.msra.mxu0 0
        %997 = vmatprep.subr.bf16.mxu0 0
        %998 = vmatpush2.bf16.msra.mxu0 0
        %999 = vmatprep.subr.bf16.mxu0 0
        %1000 = vmatpush2.bf16.msra.mxu0 0
        %1001 = vmatprep.subr.bf16.mxu0 0
        %1002 = vmatpush2.bf16.msra.mxu0 0
        %1003 = vmatprep.subr.bf16.mxu0 0
        %1004 = vmatpush2.bf16.msra.mxu0 0
        %1005 = vmatprep.subr.bf16.mxu0 0
        %1006 = vmatpush2.bf16.msra.mxu0 0
        %1007 = vmatprep.mubr.bf16.mxu0 0
        %1008 = vmatmul.mubr.bf16.gmra.mxu0 %v923
        %v1009 = vpop.f32.mrf.mxu0
        %v1010 = vadd.f32 0.0, %v1009
        %v1011 = vpop.f32.mrf.mxu0
        %v1012 = vpop.f32.mrf.mxu0
        %v1013 = vpop.f32.mrf.mxu0
        %1014 = vdwg.mxu0
        %v1015 = vadd.f32 %v905, %v969
        %v1016 = vadd.f32 %v906, %v971
        %v1017 = vadd.f32 %v907, %v1010
        %1018 = vrot.lane.b32.xlu0 %v353, 80
        %v1019 = vpop.permute.xlu0 %1018
        %1020 = vrot.lane.b32.xlu0 %v362, 25
        %v1021 = vpop.permute.xlu0 %1020
        %1022 = vrot.lane.b32.xlu0 %v363, 25
        %v1023 = vpop.permute.xlu0 %1022
        %1024 = vrot.lane.b32.xlu0 %v364, 25
        %v1025 = vpop.permute.xlu0 %1024
        %1026 = vrot.lane.b32.xlu0 %v365, 25
        %v1027 = vpop.permute.xlu0 %1026
        %vm1028 = vcmask 203776
        %v1029 = vsel %vm1028, %v1021, %v1023
        %v1030 = vsel %vm1028, %v1023, %v1025
        %v1031 = vsel %vm1028, %v1025, %v1027
        %v1033 = vsel %vm378, %v1019, 0
        %v1036 = vsel %vm382, %v1029, 0
        %v1039 = vsel %vm382, %v1030, 0
        %v1042 = vsel %vm382, %v1031, 0
        %1044 = vmatprep.subr.bf16.mxu0 0
        %1045 = vmatpush1.bf16.msra.mxu0 0
        %1046 = vmatprep.subr.bf16.mxu0 0
        %1047 = vmatpush1.bf16.msra.mxu0 0
        %1048 = vmatprep.subr.bf16.mxu0 0
        %1049 = vmatpush1.bf16.msra.mxu0 0
        %1050 = vmatprep.subr.bf16.mxu0 0
        %1051 = vmatpush1.bf16.msra.mxu0 0
        %1052 = vmatprep.subr.bf16.mxu0 0
        %1053 = vmatpush1.bf16.msra.mxu0 0
        %1054 = vmatprep.subr.bf16.mxu0 0
        %1055 = vmatpush1.bf16.msra.mxu0 0
        %1056 = vmatprep.subr.bf16.mxu0 0
        %1057 = vmatpush1.bf16.msra.mxu0 0
        %1058 = vmatprep.subr.bf16.mxu0 %v1039
        %1059 = vmatpush1.bf16.msra.mxu0 %v1036
        %1060 = vmatprep.subr.bf16.mxu0 0
        %1061 = vmatpush2.bf16.msra.mxu0 0
        %1062 = vmatprep.subr.bf16.mxu0 0
        %1063 = vmatpush2.bf16.msra.mxu0 0
        %1064 = vmatprep.subr.bf16.mxu0 0
        %1065 = vmatpush2.bf16.msra.mxu0 0
        %1066 = vmatprep.subr.bf16.mxu0 0
        %1067 = vmatpush2.bf16.msra.mxu0 0
        %1068 = vmatprep.subr.bf16.mxu0 0
        %1069 = vmatpush2.bf16.msra.mxu0 0
        %1070 = vmatprep.subr.bf16.mxu0 0
        %1071 = vmatpush2.bf16.msra.mxu0 0
        %1072 = vmatprep.subr.bf16.mxu0 0
        %1073 = vmatpush2.bf16.msra.mxu0 0
        %1074 = vmatprep.subr.bf16.mxu0 0
        %1075 = vmatpush2.bf16.msra.mxu0 0
        %1076 = vmatprep.mubr.bf16.mxu0 0
        %1077 = vmatmul.mubr.bf16.gmra.mxu0 %v1033
        %v1078 = vpop.f32.mrf.mxu0
        %v1079 = vadd.f32 0.0, %v1078
        %v1080 = vpop.f32.mrf.mxu0
        %v1081 = vadd.f32 0.0, %v1080
        %v1082 = vpop.f32.mrf.mxu0
        %v1083 = vpop.f32.mrf.mxu0
        %1084 = vdwg.mxu0
        %1085 = vmatprep.subr.bf16.mxu0 0
        %1086 = vmatpush1.bf16.msra.mxu0 0
        %1087 = vmatprep.subr.bf16.mxu0 0
        %1088 = vmatpush1.bf16.msra.mxu0 0
        %1089 = vmatprep.subr.bf16.mxu0 0
        %1090 = vmatpush1.bf16.msra.mxu0 0
        %1091 = vmatprep.subr.bf16.mxu0 0
        %1092 = vmatpush1.bf16.msra.mxu0 0
        %1093 = vmatprep.subr.bf16.mxu0 0
        %1094 = vmatpush1.bf16.msra.mxu0 0
        %1095 = vmatprep.subr.bf16.mxu0 0
        %1096 = vmatpush1.bf16.msra.mxu0 0
        %1097 = vmatprep.subr.bf16.mxu0 0
        %1098 = vmatpush1.bf16.msra.mxu0 0
        %1099 = vmatprep.subr.bf16.mxu0 0
        %1100 = vmatpush1.bf16.msra.mxu0 %v1042
        %1101 = vmatprep.subr.bf16.mxu0 0
        %1102 = vmatpush2.bf16.msra.mxu0 0
        %1103 = vmatprep.subr.bf16.mxu0 0
        %1104 = vmatpush2.bf16.msra.mxu0 0
        %1105 = vmatprep.subr.bf16.mxu0 0
        %1106 = vmatpush2.bf16.msra.mxu0 0
        %1107 = vmatprep.subr.bf16.mxu0 0
        %1108 = vmatpush2.bf16.msra.mxu0 0
        %1109 = vmatprep.subr.bf16.mxu0 0
        %1110 = vmatpush2.bf16.msra.mxu0 0
        %1111 = vmatprep.subr.bf16.mxu0 0
        %1112 = vmatpush2.bf16.msra.mxu0 0
        %1113 = vmatprep.subr.bf16.mxu0 0
        %1114 = vmatpush2.bf16.msra.mxu0 0
        %1115 = vmatprep.subr.bf16.mxu0 0
        %1116 = vmatpush2.bf16.msra.mxu0 0
        %1117 = vmatprep.mubr.bf16.mxu0 0
        %1118 = vmatmul.mubr.bf16.gmra.mxu0 %v1033
        %v1119 = vpop.f32.mrf.mxu0
        %v1120 = vadd.f32 0.0, %v1119
        %v1121 = vpop.f32.mrf.mxu0
        %v1122 = vpop.f32.mrf.mxu0
        %v1123 = vpop.f32.mrf.mxu0
        %1124 = vdwg.mxu0
        %v1125 = vadd.f32 %v1015, %v1079
        %v1126 = vadd.f32 %v1016, %v1081
        %v1127 = vadd.f32 %v1017, %v1120
        %1128 = vrot.lane.b32.xlu0 %v353, 72
        %v1129 = vpop.permute.xlu0 %1128
        %1130 = vrot.lane.b32.xlu0 %v362, 24
        %v1131 = vpop.permute.xlu0 %1130
        %1132 = vrot.lane.b32.xlu0 %v363, 24
        %v1133 = vpop.permute.xlu0 %1132
        %1134 = vrot.lane.b32.xlu0 %v364, 24
        %v1135 = vpop.permute.xlu0 %1134
        %1136 = vrot.lane.b32.xlu0 %v365, 24
        %v1137 = vpop.permute.xlu0 %1136
        %vm1138 = vcmask 195584
        %v1139 = vsel %vm1138, %v1131, %v1133
        %v1140 = vsel %vm1138, %v1133, %v1135
        %v1141 = vsel %vm1138, %v1135, %v1137
        %v1143 = vsel %vm378, %v1129, 0
        %v1146 = vsel %vm382, %v1139, 0
        %v1149 = vsel %vm382, %v1140, 0
        %v1152 = vsel %vm382, %v1141, 0
        %1154 = vmatprep.subr.bf16.mxu0 0
        %1155 = vmatpush1.bf16.msra.mxu0 0
        %1156 = vmatprep.subr.bf16.mxu0 0
        %1157 = vmatpush1.bf16.msra.mxu0 0
        %1158 = vmatprep.subr.bf16.mxu0 0
        %1159 = vmatpush1.bf16.msra.mxu0 0
        %1160 = vmatprep.subr.bf16.mxu0 0
        %1161 = vmatpush1.bf16.msra.mxu0 0
        %1162 = vmatprep.subr.bf16.mxu0 0
        %1163 = vmatpush1.bf16.msra.mxu0 0
        %1164 = vmatprep.subr.bf16.mxu0 0
        %1165 = vmatpush1.bf16.msra.mxu0 0
        %1166 = vmatprep.subr.bf16.mxu0 0
        %1167 = vmatpush1.bf16.msra.mxu0 0
        %1168 = vmatprep.subr.bf16.mxu0 %v1149
        %1169 = vmatpush1.bf16.msra.mxu0 %v1146
        %1170 = vmatprep.subr.bf16.mxu0 0
        %1171 = vmatpush2.bf16.msra.mxu0 0
        %1172 = vmatprep.subr.bf16.mxu0 0
        %1173 = vmatpush2.bf16.msra.mxu0 0
        %1174 = vmatprep.subr.bf16.mxu0 0
        %1175 = vmatpush2.bf16.msra.mxu0 0
        %1176 = vmatprep.subr.bf16.mxu0 0
        %1177 = vmatpush2.bf16.msra.mxu0 0
        %1178 = vmatprep.subr.bf16.mxu0 0
        %1179 = vmatpush2.bf16.msra.mxu0 0
        %1180 = vmatprep.subr.bf16.mxu0 0
        %1181 = vmatpush2.bf16.msra.mxu0 0
        %1182 = vmatprep.subr.bf16.mxu0 0
        %1183 = vmatpush2.bf16.msra.mxu0 0
        %1184 = vmatprep.subr.bf16.mxu0 0
        %1185 = vmatpush2.bf16.msra.mxu0 0
        %1186 = vmatprep.mubr.bf16.mxu0 0
        %1187 = vmatmul.mubr.bf16.gmra.mxu0 %v1143
        %v1188 = vpop.f32.mrf.mxu0
        %v1189 = vadd.f32 0.0, %v1188
        %v1190 = vpop.f32.mrf.mxu0
        %v1191 = vadd.f32 0.0, %v1190
        %v1192 = vpop.f32.mrf.mxu0
        %v1193 = vpop.f32.mrf.mxu0
        %1194 = vdwg.mxu0
        %1195 = vmatprep.subr.bf16.mxu0 0
        %1196 = vmatpush1.bf16.msra.mxu0 0
        %1197 = vmatprep.subr.bf16.mxu0 0
        %1198 = vmatpush1.bf16.msra.mxu0 0
        %1199 = vmatprep.subr.bf16.mxu0 0
        %1200 = vmatpush1.bf16.msra.mxu0 0
        %1201 = vmatprep.subr.bf16.mxu0 0
        %1202 = vmatpush1.bf16.msra.mxu0 0
        %1203 = vmatprep.subr.bf16.mxu0 0
        %1204 = vmatpush1.bf16.msra.mxu0 0
        %1205 = vmatprep.subr.bf16.mxu0 0
        %1206 = vmatpush1.bf16.msra.mxu0 0
        %1207 = vmatprep.subr.bf16.mxu0 0
        %1208 = vmatpush1.bf16.msra.mxu0 0
        %1209 = vmatprep.subr.bf16.mxu0 0
        %1210 = vmatpush1.bf16.msra.mxu0 %v1152
        %1211 = vmatprep.subr.bf16.mxu0 0
        %1212 = vmatpush2.bf16.msra.mxu0 0
        %1213 = vmatprep.subr.bf16.mxu0 0
        %1214 = vmatpush2.bf16.msra.mxu0 0
        %1215 = vmatprep.subr.bf16.mxu0 0
        %1216 = vmatpush2.bf16.msra.mxu0 0
        %1217 = vmatprep.subr.bf16.mxu0 0
        %1218 = vmatpush2.bf16.msra.mxu0 0
        %1219 = vmatprep.subr.bf16.mxu0 0
        %1220 = vmatpush2.bf16.msra.mxu0 0
        %1221 = vmatprep.subr.bf16.mxu0 0
        %1222 = vmatpush2.bf16.msra.mxu0 0
        %1223 = vmatprep.subr.bf16.mxu0 0
        %1224 = vmatpush2.bf16.msra.mxu0 0
        %1225 = vmatprep.subr.bf16.mxu0 0
        %1226 = vmatpush2.bf16.msra.mxu0 0
        %1227 = vmatprep.mubr.bf16.mxu0 0
        %1228 = vmatmul.mubr.bf16.gmra.mxu0 %v1143
        %v1229 = vpop.f32.mrf.mxu0
        %v1230 = vadd.f32 0.0, %v1229
        %v1231 = vpop.f32.mrf.mxu0
        %v1232 = vpop.f32.mrf.mxu0
        %v1233 = vpop.f32.mrf.mxu0
        %1234 = vdwg.mxu0
        %v1235 = vadd.f32 %v1125, %v1189
        %v1236 = vadd.f32 %v1126, %v1191
        %v1237 = vadd.f32 %v1127, %v1230
        %1238 = vrot.lane.b32.xlu0 %v353, 64
        %v1239 = vpop.permute.xlu0 %1238
        %1240 = vrot.lane.b32.xlu0 %v362, 23
        %v1241 = vpop.permute.xlu0 %1240
        %1242 = vrot.lane.b32.xlu0 %v363, 23
        %v1243 = vpop.permute.xlu0 %1242
        %1244 = vrot.lane.b32.xlu0 %v364, 23
        %v1245 = vpop.permute.xlu0 %1244
        %1246 = vrot.lane.b32.xlu0 %v365, 23
        %v1247 = vpop.permute.xlu0 %1246
        %vm1248 = vcmask 187392
        %v1249 = vsel %vm1248, %v1241, %v1243
        %v1250 = vsel %vm1248, %v1243, %v1245
        %v1251 = vsel %vm1248, %v1245, %v1247
        %v1253 = vsel %vm378, %v1239, 0
        %v1256 = vsel %vm382, %v1249, 0
        %v1259 = vsel %vm382, %v1250, 0
        %v1262 = vsel %vm382, %v1251, 0
        %1264 = vmatprep.subr.bf16.mxu0 0
        %1265 = vmatpush1.bf16.msra.mxu0 0
        %1266 = vmatprep.subr.bf16.mxu0 0
        %1267 = vmatpush1.bf16.msra.mxu0 0
        %1268 = vmatprep.subr.bf16.mxu0 0
        %1269 = vmatpush1.bf16.msra.mxu0 0
        %1270 = vmatprep.subr.bf16.mxu0 0
        %1271 = vmatpush1.bf16.msra.mxu0 0
        %1272 = vmatprep.subr.bf16.mxu0 0
        %1273 = vmatpush1.bf16.msra.mxu0 0
        %1274 = vmatprep.subr.bf16.mxu0 0
        %1275 = vmatpush1.bf16.msra.mxu0 0
        %1276 = vmatprep.subr.bf16.mxu0 0
        %1277 = vmatpush1.bf16.msra.mxu0 0
        %1278 = vmatprep.subr.bf16.mxu0 %v1259
        %1279 = vmatpush1.bf16.msra.mxu0 %v1256
        %1280 = vmatprep.subr.bf16.mxu0 0
        %1281 = vmatpush2.bf16.msra.mxu0 0
        %1282 = vmatprep.subr.bf16.mxu0 0
        %1283 = vmatpush2.bf16.msra.mxu0 0
        %1284 = vmatprep.subr.bf16.mxu0 0
        %1285 = vmatpush2.bf16.msra.mxu0 0
        %1286 = vmatprep.subr.bf16.mxu0 0
        %1287 = vmatpush2.bf16.msra.mxu0 0
        %1288 = vmatprep.subr.bf16.mxu0 0
        %1289 = vmatpush2.bf16.msra.mxu0 0
        %1290 = vmatprep.subr.bf16.mxu0 0
        %1291 = vmatpush2.bf16.msra.mxu0 0
        %1292 = vmatprep.subr.bf16.mxu0 0
        %1293 = vmatpush2.bf16.msra.mxu0 0
        %1294 = vmatprep.subr.bf16.mxu0 0
        %1295 = vmatpush2.bf16.msra.mxu0 0
        %1296 = vmatprep.mubr.bf16.mxu0 0
        %1297 = vmatmul.mubr.bf16.gmra.mxu0 %v1253
        %v1298 = vpop.f32.mrf.mxu0
        %v1299 = vadd.f32 0.0, %v1298
        %v1300 = vpop.f32.mrf.mxu0
        %v1301 = vadd.f32 0.0, %v1300
        %v1302 = vpop.f32.mrf.mxu0
        %v1303 = vpop.f32.mrf.mxu0
        %1304 = vdwg.mxu0
        %1305 = vmatprep.subr.bf16.mxu0 0
        %1306 = vmatpush1.bf16.msra.mxu0 0
        %1307 = vmatprep.subr.bf16.mxu0 0
        %1308 = vmatpush1.bf16.msra.mxu0 0
        %1309 = vmatprep.subr.bf16.mxu0 0
        %1310 = vmatpush1.bf16.msra.mxu0 0
        %1311 = vmatprep.subr.bf16.mxu0 0
        %1312 = vmatpush1.bf16.msra.mxu0 0
        %1313 = vmatprep.subr.bf16.mxu0 0
        %1314 = vmatpush1.bf16.msra.mxu0 0
        %1315 = vmatprep.subr.bf16.mxu0 0
        %1316 = vmatpush1.bf16.msra.mxu0 0
        %1317 = vmatprep.subr.bf16.mxu0 0
        %1318 = vmatpush1.bf16.msra.mxu0 0
        %1319 = vmatprep.subr.bf16.mxu0 0
        %1320 = vmatpush1.bf16.msra.mxu0 %v1262
        %1321 = vmatprep.subr.bf16.mxu0 0
        %1322 = vmatpush2.bf16.msra.mxu0 0
        %1323 = vmatprep.subr.bf16.mxu0 0
        %1324 = vmatpush2.bf16.msra.mxu0 0
        %1325 = vmatprep.subr.bf16.mxu0 0
        %1326 = vmatpush2.bf16.msra.mxu0 0
        %1327 = vmatprep.subr.bf16.mxu0 0
        %1328 = vmatpush2.bf16.msra.mxu0 0
        %1329 = vmatprep.subr.bf16.mxu0 0
        %1330 = vmatpush2.bf16.msra.mxu0 0
        %1331 = vmatprep.subr.bf16.mxu0 0
        %1332 = vmatpush2.bf16.msra.mxu0 0
        %1333 = vmatprep.subr.bf16.mxu0 0
        %1334 = vmatpush2.bf16.msra.mxu0 0
        %1335 = vmatprep.subr.bf16.mxu0 0
        %1336 = vmatpush2.bf16.msra.mxu0 0
        %1337 = vmatprep.mubr.bf16.mxu0 0
        %1338 = vmatmul.mubr.bf16.gmra.mxu0 %v1253
        %v1339 = vpop.f32.mrf.mxu0
        %v1340 = vadd.f32 0.0, %v1339
        %v1341 = vpop.f32.mrf.mxu0
        %v1342 = vpop.f32.mrf.mxu0
        %v1343 = vpop.f32.mrf.mxu0
        %1344 = vdwg.mxu0
        %v1345 = vadd.f32 %v1235, %v1299
        %v1346 = vadd.f32 %v1236, %v1301
        %v1347 = vadd.f32 %v1237, %v1340
        %1348 = vrot.lane.b32.xlu0 %v353, 56
        %v1349 = vpop.permute.xlu0 %1348
        %1350 = vrot.lane.b32.xlu0 %v362, 22
        %v1351 = vpop.permute.xlu0 %1350
        %1352 = vrot.lane.b32.xlu0 %v363, 22
        %v1353 = vpop.permute.xlu0 %1352
        %1354 = vrot.lane.b32.xlu0 %v364, 22
        %v1355 = vpop.permute.xlu0 %1354
        %1356 = vrot.lane.b32.xlu0 %v365, 22
        %v1357 = vpop.permute.xlu0 %1356
        %vm1358 = vcmask 179200
        %v1359 = vsel %vm1358, %v1351, %v1353
        %v1360 = vsel %vm1358, %v1353, %v1355
        %v1361 = vsel %vm1358, %v1355, %v1357
        %v1363 = vsel %vm378, %v1349, 0
        %v1366 = vsel %vm382, %v1359, 0
        %v1369 = vsel %vm382, %v1360, 0
        %v1372 = vsel %vm382, %v1361, 0
        %1374 = vmatprep.subr.bf16.mxu0 0
        %1375 = vmatpush1.bf16.msra.mxu0 0
        %1376 = vmatprep.subr.bf16.mxu0 0
        %1377 = vmatpush1.bf16.msra.mxu0 0
        %1378 = vmatprep.subr.bf16.mxu0 0
        %1379 = vmatpush1.bf16.msra.mxu0 0
        %1380 = vmatprep.subr.bf16.mxu0 0
        %1381 = vmatpush1.bf16.msra.mxu0 0
        %1382 = vmatprep.subr.bf16.mxu0 0
        %1383 = vmatpush1.bf16.msra.mxu0 0
        %1384 = vmatprep.subr.bf16.mxu0 0
        %1385 = vmatpush1.bf16.msra.mxu0 0
        %1386 = vmatprep.subr.bf16.mxu0 0
        %1387 = vmatpush1.bf16.msra.mxu0 0
        %1388 = vmatprep.subr.bf16.mxu0 %v1369
        %1389 = vmatpush1.bf16.msra.mxu0 %v1366
        %1390 = vmatprep.subr.bf16.mxu0 0
        %1391 = vmatpush2.bf16.msra.mxu0 0
        %1392 = vmatprep.subr.bf16.mxu0 0
        %1393 = vmatpush2.bf16.msra.mxu0 0
        %1394 = vmatprep.subr.bf16.mxu0 0
        %1395 = vmatpush2.bf16.msra.mxu0 0
        %1396 = vmatprep.subr.bf16.mxu0 0
        %1397 = vmatpush2.bf16.msra.mxu0 0
        %1398 = vmatprep.subr.bf16.mxu0 0
        %1399 = vmatpush2.bf16.msra.mxu0 0
        %1400 = vmatprep.subr.bf16.mxu0 0
        %1401 = vmatpush2.bf16.msra.mxu0 0
        %1402 = vmatprep.subr.bf16.mxu0 0
        %1403 = vmatpush2.bf16.msra.mxu0 0
        %1404 = vmatprep.subr.bf16.mxu0 0
        %1405 = vmatpush2.bf16.msra.mxu0 0
        %1406 = vmatprep.mubr.bf16.mxu0 0
        %1407 = vmatmul.mubr.bf16.gmra.mxu0 %v1363
        %v1408 = vpop.f32.mrf.mxu0
        %v1409 = vadd.f32 0.0, %v1408
        %v1410 = vpop.f32.mrf.mxu0
        %v1411 = vadd.f32 0.0, %v1410
        %v1412 = vpop.f32.mrf.mxu0
        %v1413 = vpop.f32.mrf.mxu0
        %1414 = vdwg.mxu0
        %1415 = vmatprep.subr.bf16.mxu0 0
        %1416 = vmatpush1.bf16.msra.mxu0 0
        %1417 = vmatprep.subr.bf16.mxu0 0
        %1418 = vmatpush1.bf16.msra.mxu0 0
        %1419 = vmatprep.subr.bf16.mxu0 0
        %1420 = vmatpush1.bf16.msra.mxu0 0
        %1421 = vmatprep.subr.bf16.mxu0 0
        %1422 = vmatpush1.bf16.msra.mxu0 0
        %1423 = vmatprep.subr.bf16.mxu0 0
        %1424 = vmatpush1.bf16.msra.mxu0 0
        %1425 = vmatprep.subr.bf16.mxu0 0
        %1426 = vmatpush1.bf16.msra.mxu0 0
        %1427 = vmatprep.subr.bf16.mxu0 0
        %1428 = vmatpush1.bf16.msra.mxu0 0
        %1429 = vmatprep.subr.bf16.mxu0 0
        %1430 = vmatpush1.bf16.msra.mxu0 %v1372
        %1431 = vmatprep.subr.bf16.mxu0 0
        %1432 = vmatpush2.bf16.msra.mxu0 0
        %1433 = vmatprep.subr.bf16.mxu0 0
        %1434 = vmatpush2.bf16.msra.mxu0 0
        %1435 = vmatprep.subr.bf16.mxu0 0
        %1436 = vmatpush2.bf16.msra.mxu0 0
        %1437 = vmatprep.subr.bf16.mxu0 0
        %1438 = vmatpush2.bf16.msra.mxu0 0
        %1439 = vmatprep.subr.bf16.mxu0 0
        %1440 = vmatpush2.bf16.msra.mxu0 0
        %1441 = vmatprep.subr.bf16.mxu0 0
        %1442 = vmatpush2.bf16.msra.mxu0 0
        %1443 = vmatprep.subr.bf16.mxu0 0
        %1444 = vmatpush2.bf16.msra.mxu0 0
        %1445 = vmatprep.subr.bf16.mxu0 0
        %1446 = vmatpush2.bf16.msra.mxu0 0
        %1447 = vmatprep.mubr.bf16.mxu0 0
        %1448 = vmatmul.mubr.bf16.gmra.mxu0 %v1363
        %v1449 = vpop.f32.mrf.mxu0
        %v1450 = vadd.f32 0.0, %v1449
        %v1451 = vpop.f32.mrf.mxu0
        %v1452 = vpop.f32.mrf.mxu0
        %v1453 = vpop.f32.mrf.mxu0
        %1454 = vdwg.mxu0
        %v1455 = vadd.f32 %v1345, %v1409
        %v1456 = vadd.f32 %v1346, %v1411
        %v1457 = vadd.f32 %v1347, %v1450
        %1458 = vrot.lane.b32.xlu0 %v353, 48
        %v1459 = vpop.permute.xlu0 %1458
        %1460 = vrot.lane.b32.xlu0 %v362, 2
        %v1461 = vpop.permute.xlu0 %1460
        %1462 = vrot.lane.b32.xlu0 %v363, 2
        %v1463 = vpop.permute.xlu0 %1462
        %1464 = vrot.lane.b32.xlu0 %v364, 2
        %v1465 = vpop.permute.xlu0 %1464
        %1466 = vrot.lane.b32.xlu0 %v365, 2
        %v1467 = vpop.permute.xlu0 %1466
        %vm1468 = vcmask 15360
        %v1469 = vsel %vm1468, %v1461, %v1463
        %v1470 = vsel %vm1468, %v1463, %v1465
        %v1471 = vsel %vm1468, %v1465, %v1467
        %v1473 = vsel %vm378, %v1459, 0
        %v1476 = vsel %vm382, %v1469, 0
        %v1479 = vsel %vm382, %v1470, 0
        %v1482 = vsel %vm382, %v1471, 0
        %1484 = vmatprep.subr.bf16.mxu0 0
        %1485 = vmatpush1.bf16.msra.mxu0 0
        %1486 = vmatprep.subr.bf16.mxu0 0
        %1487 = vmatpush1.bf16.msra.mxu0 0
        %1488 = vmatprep.subr.bf16.mxu0 0
        %1489 = vmatpush1.bf16.msra.mxu0 0
        %1490 = vmatprep.subr.bf16.mxu0 0
        %1491 = vmatpush1.bf16.msra.mxu0 0
        %1492 = vmatprep.subr.bf16.mxu0 0
        %1493 = vmatpush1.bf16.msra.mxu0 0
        %1494 = vmatprep.subr.bf16.mxu0 0
        %1495 = vmatpush1.bf16.msra.mxu0 0
        %1496 = vmatprep.subr.bf16.mxu0 0
        %1497 = vmatpush1.bf16.msra.mxu0 0
        %1498 = vmatprep.subr.bf16.mxu0 %v1479
        %1499 = vmatpush1.bf16.msra.mxu0 %v1476
        %1500 = vmatprep.subr.bf16.mxu0 0
        %1501 = vmatpush2.bf16.msra.mxu0 0
        %1502 = vmatprep.subr.bf16.mxu0 0
        %1503 = vmatpush2.bf16.msra.mxu0 0
        %1504 = vmatprep.subr.bf16.mxu0 0
        %1505 = vmatpush2.bf16.msra.mxu0 0
        %1506 = vmatprep.subr.bf16.mxu0 0
        %1507 = vmatpush2.bf16.msra.mxu0 0
        %1508 = vmatprep.subr.bf16.mxu0 0
        %1509 = vmatpush2.bf16.msra.mxu0 0
        %1510 = vmatprep.subr.bf16.mxu0 0
        %1511 = vmatpush2.bf16.msra.mxu0 0
        %1512 = vmatprep.subr.bf16.mxu0 0
        %1513 = vmatpush2.bf16.msra.mxu0 0
        %1514 = vmatprep.subr.bf16.mxu0 0
        %1515 = vmatpush2.bf16.msra.mxu0 0
        %1516 = vmatprep.mubr.bf16.mxu0 0
        %1517 = vmatmul.mubr.bf16.gmra.mxu0 %v1473
        %v1518 = vpop.f32.mrf.mxu0
        %v1519 = vadd.f32 0.0, %v1518
        %v1520 = vpop.f32.mrf.mxu0
        %v1521 = vadd.f32 0.0, %v1520
        %v1522 = vpop.f32.mrf.mxu0
        %v1523 = vpop.f32.mrf.mxu0
        %1524 = vdwg.mxu0
        %1525 = vmatprep.subr.bf16.mxu0 0
        %1526 = vmatpush1.bf16.msra.mxu0 0
        %1527 = vmatprep.subr.bf16.mxu0 0
        %1528 = vmatpush1.bf16.msra.mxu0 0
        %1529 = vmatprep.subr.bf16.mxu0 0
        %1530 = vmatpush1.bf16.msra.mxu0 0
        %1531 = vmatprep.subr.bf16.mxu0 0
        %1532 = vmatpush1.bf16.msra.mxu0 0
        %1533 = vmatprep.subr.bf16.mxu0 0
        %1534 = vmatpush1.bf16.msra.mxu0 0
        %1535 = vmatprep.subr.bf16.mxu0 0
        %1536 = vmatpush1.bf16.msra.mxu0 0
        %1537 = vmatprep.subr.bf16.mxu0 0
        %1538 = vmatpush1.bf16.msra.mxu0 0
        %1539 = vmatprep.subr.bf16.mxu0 0
        %1540 = vmatpush1.bf16.msra.mxu0 %v1482
        %1541 = vmatprep.subr.bf16.mxu0 0
        %1542 = vmatpush2.bf16.msra.mxu0 0
        %1543 = vmatprep.subr.bf16.mxu0 0
        %1544 = vmatpush2.bf16.msra.mxu0 0
        %1545 = vmatprep.subr.bf16.mxu0 0
        %1546 = vmatpush2.bf16.msra.mxu0 0
        %1547 = vmatprep.subr.bf16.mxu0 0
        %1548 = vmatpush2.bf16.msra.mxu0 0
        %1549 = vmatprep.subr.bf16.mxu0 0
        %1550 = vmatpush2.bf16.msra.mxu0 0
        %1551 = vmatprep.subr.bf16.mxu0 0
        %1552 = vmatpush2.bf16.msra.mxu0 0
        %1553 = vmatprep.subr.bf16.mxu0 0
        %1554 = vmatpush2.bf16.msra.mxu0 0
        %1555 = vmatprep.subr.bf16.mxu0 0
        %1556 = vmatpush2.bf16.msra.mxu0 0
        %1557 = vmatprep.mubr.bf16.mxu0 0
        %1558 = vmatmul.mubr.bf16.gmra.mxu0 %v1473
        %v1559 = vpop.f32.mrf.mxu0
        %v1560 = vadd.f32 0.0, %v1559
        %v1561 = vpop.f32.mrf.mxu0
        %v1562 = vpop.f32.mrf.mxu0
        %v1563 = vpop.f32.mrf.mxu0
        %1564 = vdwg.mxu0
        %v1565 = vadd.f32 %v1455, %v1519
        %v1566 = vadd.f32 %v1456, %v1521
        %v1567 = vadd.f32 %v1457, %v1560
        %1568 = vrot.lane.b32.xlu0 %v353, 40
        %v1569 = vpop.permute.xlu0 %1568
        %1570 = vrot.lane.b32.xlu0 %v362, 1
        %v1571 = vpop.permute.xlu0 %1570
        %1572 = vrot.lane.b32.xlu0 %v363, 1
        %v1573 = vpop.permute.xlu0 %1572
        %1574 = vrot.lane.b32.xlu0 %v364, 1
        %v1575 = vpop.permute.xlu0 %1574
        %1576 = vrot.lane.b32.xlu0 %v365, 1
        %v1577 = vpop.permute.xlu0 %1576
        %vm1578 = vcmask 7168
        %v1579 = vsel %vm1578, %v1571, %v1573
        %v1580 = vsel %vm1578, %v1573, %v1575
        %v1581 = vsel %vm1578, %v1575, %v1577
        %v1583 = vsel %vm378, %v1569, 0
        %v1586 = vsel %vm382, %v1579, 0
        %v1589 = vsel %vm382, %v1580, 0
        %v1592 = vsel %vm382, %v1581, 0
        %1594 = vmatprep.subr.bf16.mxu0 0
        %1595 = vmatpush1.bf16.msra.mxu0 0
        %1596 = vmatprep.subr.bf16.mxu0 0
        %1597 = vmatpush1.bf16.msra.mxu0 0
        %1598 = vmatprep.subr.bf16.mxu0 0
        %1599 = vmatpush1.bf16.msra.mxu0 0
        %1600 = vmatprep.subr.bf16.mxu0 0
        %1601 = vmatpush1.bf16.msra.mxu0 0
        %1602 = vmatprep.subr.bf16.mxu0 0
        %1603 = vmatpush1.bf16.msra.mxu0 0
        %1604 = vmatprep.subr.bf16.mxu0 0
        %1605 = vmatpush1.bf16.msra.mxu0 0
        %1606 = vmatprep.subr.bf16.mxu0 0
        %1607 = vmatpush1.bf16.msra.mxu0 0
        %1608 = vmatprep.subr.bf16.mxu0 %v1589
        %1609 = vmatpush1.bf16.msra.mxu0 %v1586
        %1610 = vmatprep.subr.bf16.mxu0 0
        %1611 = vmatpush2.bf16.msra.mxu0 0
        %1612 = vmatprep.subr.bf16.mxu0 0
        %1613 = vmatpush2.bf16.msra.mxu0 0
        %1614 = vmatprep.subr.bf16.mxu0 0
        %1615 = vmatpush2.bf16.msra.mxu0 0
        %1616 = vmatprep.subr.bf16.mxu0 0
        %1617 = vmatpush2.bf16.msra.mxu0 0
        %1618 = vmatprep.subr.bf16.mxu0 0
        %1619 = vmatpush2.bf16.msra.mxu0 0
        %1620 = vmatprep.subr.bf16.mxu0 0
        %1621 = vmatpush2.bf16.msra.mxu0 0
        %1622 = vmatprep.subr.bf16.mxu0 0
        %1623 = vmatpush2.bf16.msra.mxu0 0
        %1624 = vmatprep.subr.bf16.mxu0 0
        %1625 = vmatpush2.bf16.msra.mxu0 0
        %1626 = vmatprep.mubr.bf16.mxu0 0
        %1627 = vmatmul.mubr.bf16.gmra.mxu0 %v1583
        %v1628 = vpop.f32.mrf.mxu0
        %v1629 = vadd.f32 0.0, %v1628
        %v1630 = vpop.f32.mrf.mxu0
        %v1631 = vadd.f32 0.0, %v1630
        %v1632 = vpop.f32.mrf.mxu0
        %v1633 = vpop.f32.mrf.mxu0
        %1634 = vdwg.mxu0
        %1635 = vmatprep.subr.bf16.mxu0 0
        %1636 = vmatpush1.bf16.msra.mxu0 0
        %1637 = vmatprep.subr.bf16.mxu0 0
        %1638 = vmatpush1.bf16.msra.mxu0 0
        %1639 = vmatprep.subr.bf16.mxu0 0
        %1640 = vmatpush1.bf16.msra.mxu0 0
        %1641 = vmatprep.subr.bf16.mxu0 0
        %1642 = vmatpush1.bf16.msra.mxu0 0
        %1643 = vmatprep.subr.bf16.mxu0 0
        %1644 = vmatpush1.bf16.msra.mxu0 0
        %1645 = vmatprep.subr.bf16.mxu0 0
        %1646 = vmatpush1.bf16.msra.mxu0 0
        %1647 = vmatprep.subr.bf16.mxu0 0
        %1648 = vmatpush1.bf16.msra.mxu0 0
        %1649 = vmatprep.subr.bf16.mxu0 0
        %1650 = vmatpush1.bf16.msra.mxu0 %v1592
        %1651 = vmatprep.subr.bf16.mxu0 0
        %1652 = vmatpush2.bf16.msra.mxu0 0
        %1653 = vmatprep.subr.bf16.mxu0 0
        %1654 = vmatpush2.bf16.msra.mxu0 0
        %1655 = vmatprep.subr.bf16.mxu0 0
        %1656 = vmatpush2.bf16.msra.mxu0 0
        %1657 = vmatprep.subr.bf16.mxu0 0
        %1658 = vmatpush2.bf16.msra.mxu0 0
        %1659 = vmatprep.subr.bf16.mxu0 0
        %1660 = vmatpush2.bf16.msra.mxu0 0
        %1661 = vmatprep.subr.bf16.mxu0 0
        %1662 = vmatpush2.bf16.msra.mxu0 0
        %1663 = vmatprep.subr.bf16.mxu0 0
        %1664 = vmatpush2.bf16.msra.mxu0 0
        %1665 = vmatprep.subr.bf16.mxu0 0
        %1666 = vmatpush2.bf16.msra.mxu0 0
        %1667 = vmatprep.mubr.bf16.mxu0 0
        %1668 = vmatmul.mubr.bf16.gmra.mxu0 %v1583
        %v1669 = vpop.f32.mrf.mxu0
        %v1670 = vadd.f32 0.0, %v1669
        %v1671 = vpop.f32.mrf.mxu0
        %v1672 = vpop.f32.mrf.mxu0
        %v1673 = vpop.f32.mrf.mxu0
        %1674 = vdwg.mxu0
        %v1675 = vadd.f32 %v1565, %v1629
        %v1676 = vadd.f32 %v1566, %v1631
        %v1677 = vadd.f32 %v1567, %v1670
        %1678 = vrot.lane.b32.xlu0 %v353, 32
        %v1679 = vpop.permute.xlu0 %1678
        %v1681 = vsel %vm378, %v1679, 0
        %v1684 = vsel %vm382, %v363, 0
        %v1687 = vsel %vm382, %v364, 0
        %v1690 = vsel %vm382, %v365, 0
        %1692 = vmatprep.subr.bf16.mxu0 0
        %1693 = vmatpush1.bf16.msra.mxu0 0
        %1694 = vmatprep.subr.bf16.mxu0 0
        %1695 = vmatpush1.bf16.msra.mxu0 0
        %1696 = vmatprep.subr.bf16.mxu0 0
        %1697 = vmatpush1.bf16.msra.mxu0 0
        %1698 = vmatprep.subr.bf16.mxu0 0
        %1699 = vmatpush1.bf16.msra.mxu0 0
        %1700 = vmatprep.subr.bf16.mxu0 0
        %1701 = vmatpush1.bf16.msra.mxu0 0
        %1702 = vmatprep.subr.bf16.mxu0 0
        %1703 = vmatpush1.bf16.msra.mxu0 0
        %1704 = vmatprep.subr.bf16.mxu0 0
        %1705 = vmatpush1.bf16.msra.mxu0 0
        %1706 = vmatprep.subr.bf16.mxu0 %v1687
        %1707 = vmatpush1.bf16.msra.mxu0 %v1684
        %1708 = vmatprep.subr.bf16.mxu0 0
        %1709 = vmatpush2.bf16.msra.mxu0 0
        %1710 = vmatprep.subr.bf16.mxu0 0
        %1711 = vmatpush2.bf16.msra.mxu0 0
        %1712 = vmatprep.subr.bf16.mxu0 0
        %1713 = vmatpush2.bf16.msra.mxu0 0
        %1714 = vmatprep.subr.bf16.mxu0 0
        %1715 = vmatpush2.bf16.msra.mxu0 0
        %1716 = vmatprep.subr.bf16.mxu0 0
        %1717 = vmatpush2.bf16.msra.mxu0 0
        %1718 = vmatprep.subr.bf16.mxu0 0
        %1719 = vmatpush2.bf16.msra.mxu0 0
        %1720 = vmatprep.subr.bf16.mxu0 0
        %1721 = vmatpush2.bf16.msra.mxu0 0
        %1722 = vmatprep.subr.bf16.mxu0 0
        %1723 = vmatpush2.bf16.msra.mxu0 0
        %1724 = vmatprep.mubr.bf16.mxu0 0
        %1725 = vmatmul.mubr.bf16.gmra.mxu0 %v1681
        %v1726 = vpop.f32.mrf.mxu0
        %v1727 = vadd.f32 0.0, %v1726
        %v1728 = vpop.f32.mrf.mxu0
        %v1729 = vadd.f32 0.0, %v1728
        %v1730 = vpop.f32.mrf.mxu0
        %v1731 = vpop.f32.mrf.mxu0
        %1732 = vdwg.mxu0
        %1733 = vmatprep.subr.bf16.mxu0 0
        %1734 = vmatpush1.bf16.msra.mxu0 0
        %1735 = vmatprep.subr.bf16.mxu0 0
        %1736 = vmatpush1.bf16.msra.mxu0 0
        %1737 = vmatprep.subr.bf16.mxu0 0
        %1738 = vmatpush1.bf16.msra.mxu0 0
        %1739 = vmatprep.subr.bf16.mxu0 0
        %1740 = vmatpush1.bf16.msra.mxu0 0
        %1741 = vmatprep.subr.bf16.mxu0 0
        %1742 = vmatpush1.bf16.msra.mxu0 0
        %1743 = vmatprep.subr.bf16.mxu0 0
        %1744 = vmatpush1.bf16.msra.mxu0 0
        %1745 = vmatprep.subr.bf16.mxu0 0
        %1746 = vmatpush1.bf16.msra.mxu0 0
        %1747 = vmatprep.subr.bf16.mxu0 0
        %1748 = vmatpush1.bf16.msra.mxu0 %v1690
        %1749 = vmatprep.subr.bf16.mxu0 0
        %1750 = vmatpush2.bf16.msra.mxu0 0
        %1751 = vmatprep.subr.bf16.mxu0 0
        %1752 = vmatpush2.bf16.msra.mxu0 0
        %1753 = vmatprep.subr.bf16.mxu0 0
        %1754 = vmatpush2.bf16.msra.mxu0 0
        %1755 = vmatprep.subr.bf16.mxu0 0
        %1756 = vmatpush2.bf16.msra.mxu0 0
        %1757 = vmatprep.subr.bf16.mxu0 0
        %1758 = vmatpush2.bf16.msra.mxu0 0
        %1759 = vmatprep.subr.bf16.mxu0 0
        %1760 = vmatpush2.bf16.msra.mxu0 0
        %1761 = vmatprep.subr.bf16.mxu0 0
        %1762 = vmatpush2.bf16.msra.mxu0 0
        %1763 = vmatprep.subr.bf16.mxu0 0
        %1764 = vmatpush2.bf16.msra.mxu0 0
        %1765 = vmatprep.mubr.bf16.mxu0 0
        %1766 = vmatmul.mubr.bf16.gmra.mxu0 %v1681
        %v1767 = vpop.f32.mrf.mxu0
        %v1768 = vadd.f32 0.0, %v1767
        %v1769 = vpop.f32.mrf.mxu0
        %v1770 = vpop.f32.mrf.mxu0
        %v1771 = vpop.f32.mrf.mxu0
        %1772 = vdwg.mxu0
        %v1773 = vadd.f32 %v1675, %v1727
        %v1774 = vadd.f32 %v1676, %v1729
        %v1775 = vadd.f32 %v1677, %v1768
        %1776 = vrot.lane.b32.xlu0 %v353, 24
        %v1777 = vpop.permute.xlu0 %1776
        %v1779 = vunpack.c.l.b16 %v294
        %v1780 = vpack.c.b16 %v1779, %v1779
        %1781 = vrot.lane.b32.xlu0 %v363, 127
        %v1782 = vpop.permute.xlu0 %1781
        %1783 = vrot.lane.b32.xlu0 %v364, 127
        %v1784 = vpop.permute.xlu0 %1783
        %1785 = vrot.lane.b32.xlu0 %v365, 127
        %v1786 = vpop.permute.xlu0 %1785
        %1787 = vrot.lane.b32.xlu0 %v1780, 127
        %v1788 = vpop.permute.xlu0 %1787
        %vm1789 = vcmask 1039360
        %v1790 = vsel %vm1789, %v1782, %v1784
        %v1791 = vsel %vm1789, %v1784, %v1786
        %v1792 = vsel %vm1789, %v1786, %v1788
        %v1794 = vsel %vm378, %v1777, 0
        %v1797 = vsel %vm382, %v1790, 0
        %v1800 = vsel %vm382, %v1791, 0
        %v1803 = vsel %vm382, %v1792, 0
        %1805 = vmatprep.subr.bf16.mxu0 0
        %1806 = vmatpush1.bf16.msra.mxu0 0
        %1807 = vmatprep.subr.bf16.mxu0 0
        %1808 = vmatpush1.bf16.msra.mxu0 0
        %1809 = vmatprep.subr.bf16.mxu0 0
        %1810 = vmatpush1.bf16.msra.mxu0 0
        %1811 = vmatprep.subr.bf16.mxu0 0
        %1812 = vmatpush1.bf16.msra.mxu0 0
        %1813 = vmatprep.subr.bf16.mxu0 0
        %1814 = vmatpush1.bf16.msra.mxu0 0
        %1815 = vmatprep.subr.bf16.mxu0 0
        %1816 = vmatpush1.bf16.msra.mxu0 0
        %1817 = vmatprep.subr.bf16.mxu0 0
        %1818 = vmatpush1.bf16.msra.mxu0 0
        %1819 = vmatprep.subr.bf16.mxu0 %v1800
        %1820 = vmatpush1.bf16.msra.mxu0 %v1797
        %1821 = vmatprep.subr.bf16.mxu0 0
        %1822 = vmatpush2.bf16.msra.mxu0 0
        %1823 = vmatprep.subr.bf16.mxu0 0
        %1824 = vmatpush2.bf16.msra.mxu0 0
        %1825 = vmatprep.subr.bf16.mxu0 0
        %1826 = vmatpush2.bf16.msra.mxu0 0
        %1827 = vmatprep.subr.bf16.mxu0 0
        %1828 = vmatpush2.bf16.msra.mxu0 0
        %1829 = vmatprep.subr.bf16.mxu0 0
        %1830 = vmatpush2.bf16.msra.mxu0 0
        %1831 = vmatprep.subr.bf16.mxu0 0
        %1832 = vmatpush2.bf16.msra.mxu0 0
        %1833 = vmatprep.subr.bf16.mxu0 0
        %1834 = vmatpush2.bf16.msra.mxu0 0
        %1835 = vmatprep.subr.bf16.mxu0 0
        %1836 = vmatpush2.bf16.msra.mxu0 0
        %1837 = vmatprep.mubr.bf16.mxu0 0
        %1838 = vmatmul.mubr.bf16.gmra.mxu0 %v1794
        %v1839 = vpop.f32.mrf.mxu0
        %v1840 = vadd.f32 0.0, %v1839
        %v1841 = vpop.f32.mrf.mxu0
        %v1842 = vadd.f32 0.0, %v1841
        %v1843 = vpop.f32.mrf.mxu0
        %v1844 = vpop.f32.mrf.mxu0
        %1845 = vdwg.mxu0
        %1846 = vmatprep.subr.bf16.mxu0 0
        %1847 = vmatpush1.bf16.msra.mxu0 0
        %1848 = vmatprep.subr.bf16.mxu0 0
        %1849 = vmatpush1.bf16.msra.mxu0 0
        %1850 = vmatprep.subr.bf16.mxu0 0
        %1851 = vmatpush1.bf16.msra.mxu0 0
        %1852 = vmatprep.subr.bf16.mxu0 0
        %1853 = vmatpush1.bf16.msra.mxu0 0
        %1854 = vmatprep.subr.bf16.mxu0 0
        %1855 = vmatpush1.bf16.msra.mxu0 0
        %1856 = vmatprep.subr.bf16.mxu0 0
        %1857 = vmatpush1.bf16.msra.mxu0 0
        %1858 = vmatprep.subr.bf16.mxu0 0
        %1859 = vmatpush1.bf16.msra.mxu0 0
        %1860 = vmatprep.subr.bf16.mxu0 0
        %1861 = vmatpush1.bf16.msra.mxu0 %v1803
        %1862 = vmatprep.subr.bf16.mxu0 0
        %1863 = vmatpush2.bf16.msra.mxu0 0
        %1864 = vmatprep.subr.bf16.mxu0 0
        %1865 = vmatpush2.bf16.msra.mxu0 0
        %1866 = vmatprep.subr.bf16.mxu0 0
        %1867 = vmatpush2.bf16.msra.mxu0 0
        %1868 = vmatprep.subr.bf16.mxu0 0
        %1869 = vmatpush2.bf16.msra.mxu0 0
        %1870 = vmatprep.subr.bf16.mxu0 0
        %1871 = vmatpush2.bf16.msra.mxu0 0
        %1872 = vmatprep.subr.bf16.mxu0 0
        %1873 = vmatpush2.bf16.msra.mxu0 0
        %1874 = vmatprep.subr.bf16.mxu0 0
        %1875 = vmatpush2.bf16.msra.mxu0 0
        %1876 = vmatprep.subr.bf16.mxu0 0
        %1877 = vmatpush2.bf16.msra.mxu0 0
        %1878 = vmatprep.mubr.bf16.mxu0 0
        %1879 = vmatmul.mubr.bf16.gmra.mxu0 %v1794
        %v1880 = vpop.f32.mrf.mxu0
        %v1881 = vadd.f32 0.0, %v1880
        %v1882 = vpop.f32.mrf.mxu0
        %v1883 = vpop.f32.mrf.mxu0
        %v1884 = vpop.f32.mrf.mxu0
        %1885 = vdwg.mxu0
        %v1886 = vadd.f32 %v1773, %v1840
        %v1887 = vadd.f32 %v1774, %v1842
        %v1888 = vadd.f32 %v1775, %v1881
        %1889 = vrot.lane.b32.xlu0 %v353, 16
        %v1890 = vpop.permute.xlu0 %1889
        %1891 = vrot.lane.b32.xlu0 %v363, 126
        %v1892 = vpop.permute.xlu0 %1891
        %1893 = vrot.lane.b32.xlu0 %v364, 126
        %v1894 = vpop.permute.xlu0 %1893
        %1895 = vrot.lane.b32.xlu0 %v365, 126
        %v1896 = vpop.permute.xlu0 %1895
        %1897 = vrot.lane.b32.xlu0 %v1780, 126
        %v1898 = vpop.permute.xlu0 %1897
        %vm1899 = vcmask 1031168
        %v1900 = vsel %vm1899, %v1892, %v1894
        %v1901 = vsel %vm1899, %v1894, %v1896
        %v1902 = vsel %vm1899, %v1896, %v1898
        %v1904 = vsel %vm378, %v1890, 0
        %v1907 = vsel %vm382, %v1900, 0
        %v1910 = vsel %vm382, %v1901, 0
        %v1913 = vsel %vm382, %v1902, 0
        %1915 = vmatprep.subr.bf16.mxu0 0
        %1916 = vmatpush1.bf16.msra.mxu0 0
        %1917 = vmatprep.subr.bf16.mxu0 0
        %1918 = vmatpush1.bf16.msra.mxu0 0
        %1919 = vmatprep.subr.bf16.mxu0 0
        %1920 = vmatpush1.bf16.msra.mxu0 0
        %1921 = vmatprep.subr.bf16.mxu0 0
        %1922 = vmatpush1.bf16.msra.mxu0 0
        %1923 = vmatprep.subr.bf16.mxu0 0
        %1924 = vmatpush1.bf16.msra.mxu0 0
        %1925 = vmatprep.subr.bf16.mxu0 0
        %1926 = vmatpush1.bf16.msra.mxu0 0
        %1927 = vmatprep.subr.bf16.mxu0 0
        %1928 = vmatpush1.bf16.msra.mxu0 0
        %1929 = vmatprep.subr.bf16.mxu0 %v1910
        %1930 = vmatpush1.bf16.msra.mxu0 %v1907
        %1931 = vmatprep.subr.bf16.mxu0 0
        %1932 = vmatpush2.bf16.msra.mxu0 0
        %1933 = vmatprep.subr.bf16.mxu0 0
        %1934 = vmatpush2.bf16.msra.mxu0 0
        %1935 = vmatprep.subr.bf16.mxu0 0
        %1936 = vmatpush2.bf16.msra.mxu0 0
        %1937 = vmatprep.subr.bf16.mxu0 0
        %1938 = vmatpush2.bf16.msra.mxu0 0
        %1939 = vmatprep.subr.bf16.mxu0 0
        %1940 = vmatpush2.bf16.msra.mxu0 0
        %1941 = vmatprep.subr.bf16.mxu0 0
        %1942 = vmatpush2.bf16.msra.mxu0 0
        %1943 = vmatprep.subr.bf16.mxu0 0
        %1944 = vmatpush2.bf16.msra.mxu0 0
        %1945 = vmatprep.subr.bf16.mxu0 0
        %1946 = vmatpush2.bf16.msra.mxu0 0
        %1947 = vmatprep.mubr.bf16.mxu0 0
        %1948 = vmatmul.mubr.bf16.gmra.mxu0 %v1904
        %v1949 = vpop.f32.mrf.mxu0
        %v1950 = vadd.f32 0.0, %v1949
        %v1951 = vpop.f32.mrf.mxu0
        %v1952 = vadd.f32 0.0, %v1951
        %v1953 = vpop.f32.mrf.mxu0
        %v1954 = vpop.f32.mrf.mxu0
        %1955 = vdwg.mxu0
        %1956 = vmatprep.subr.bf16.mxu0 0
        %1957 = vmatpush1.bf16.msra.mxu0 0
        %1958 = vmatprep.subr.bf16.mxu0 0
        %1959 = vmatpush1.bf16.msra.mxu0 0
        %1960 = vmatprep.subr.bf16.mxu0 0
        %1961 = vmatpush1.bf16.msra.mxu0 0
        %1962 = vmatprep.subr.bf16.mxu0 0
        %1963 = vmatpush1.bf16.msra.mxu0 0
        %1964 = vmatprep.subr.bf16.mxu0 0
        %1965 = vmatpush1.bf16.msra.mxu0 0
        %1966 = vmatprep.subr.bf16.mxu0 0
        %1967 = vmatpush1.bf16.msra.mxu0 0
        %1968 = vmatprep.subr.bf16.mxu0 0
        %1969 = vmatpush1.bf16.msra.mxu0 0
        %1970 = vmatprep.subr.bf16.mxu0 0
        %1971 = vmatpush1.bf16.msra.mxu0 %v1913
        %1972 = vmatprep.subr.bf16.mxu0 0
        %1973 = vmatpush2.bf16.msra.mxu0 0
        %1974 = vmatprep.subr.bf16.mxu0 0
        %1975 = vmatpush2.bf16.msra.mxu0 0
        %1976 = vmatprep.subr.bf16.mxu0 0
        %1977 = vmatpush2.bf16.msra.mxu0 0
        %1978 = vmatprep.subr.bf16.mxu0 0
        %1979 = vmatpush2.bf16.msra.mxu0 0
        %1980 = vmatprep.subr.bf16.mxu0 0
        %1981 = vmatpush2.bf16.msra.mxu0 0
        %1982 = vmatprep.subr.bf16.mxu0 0
        %1983 = vmatpush2.bf16.msra.mxu0 0
        %1984 = vmatprep.subr.bf16.mxu0 0
        %1985 = vmatpush2.bf16.msra.mxu0 0
        %1986 = vmatprep.subr.bf16.mxu0 0
        %1987 = vmatpush2.bf16.msra.mxu0 0
        %1988 = vmatprep.mubr.bf16.mxu0 0
        %1989 = vmatmul.mubr.bf16.gmra.mxu0 %v1904
        %v1990 = vpop.f32.mrf.mxu0
        %v1991 = vadd.f32 0.0, %v1990
        %v1992 = vpop.f32.mrf.mxu0
        %v1993 = vpop.f32.mrf.mxu0
        %v1994 = vpop.f32.mrf.mxu0
        %1995 = vdwg.mxu0
        %v1996 = vadd.f32 %v1886, %v1950
        %v1997 = vadd.f32 %v1887, %v1952
        %v1998 = vadd.f32 %v1888, %v1991
        %1999 = vrot.lane.b32.xlu0 %v353, 8
        %v2000 = vpop.permute.xlu0 %1999
        %2001 = vrot.lane.b32.xlu0 %v363, 106
        %v2002 = vpop.permute.xlu0 %2001
        %2003 = vrot.lane.b32.xlu0 %v364, 106
        %v2004 = vpop.permute.xlu0 %2003
        %2005 = vrot.lane.b32.xlu0 %v365, 106
        %v2006 = vpop.permute.xlu0 %2005
        %2007 = vrot.lane.b32.xlu0 %v1780, 106
        %v2008 = vpop.permute.xlu0 %2007
        %vm2009 = vcmask 867328
        %v2010 = vsel %vm2009, %v2002, %v2004
        %v2011 = vsel %vm2009, %v2004, %v2006
        %v2012 = vsel %vm2009, %v2006, %v2008
        %v2014 = vsel %vm378, %v2000, 0
        %v2017 = vsel %vm382, %v2010, 0
        %v2020 = vsel %vm382, %v2011, 0
        %v2023 = vsel %vm382, %v2012, 0
        %2025 = vmatprep.subr.bf16.mxu0 0
        %2026 = vmatpush1.bf16.msra.mxu0 0
        %2027 = vmatprep.subr.bf16.mxu0 0
        %2028 = vmatpush1.bf16.msra.mxu0 0
        %2029 = vmatprep.subr.bf16.mxu0 0
        %2030 = vmatpush1.bf16.msra.mxu0 0
        %2031 = vmatprep.subr.bf16.mxu0 0
        %2032 = vmatpush1.bf16.msra.mxu0 0
        %2033 = vmatprep.subr.bf16.mxu0 0
        %2034 = vmatpush1.bf16.msra.mxu0 0
        %2035 = vmatprep.subr.bf16.mxu0 0
        %2036 = vmatpush1.bf16.msra.mxu0 0
        %2037 = vmatprep.subr.bf16.mxu0 0
        %2038 = vmatpush1.bf16.msra.mxu0 0
        %2039 = vmatprep.subr.bf16.mxu0 %v2020
        %2040 = vmatpush1.bf16.msra.mxu0 %v2017
        %2041 = vmatprep.subr.bf16.mxu0 0
        %2042 = vmatpush2.bf16.msra.mxu0 0
        %2043 = vmatprep.subr.bf16.mxu0 0
        %2044 = vmatpush2.bf16.msra.mxu0 0
        %2045 = vmatprep.subr.bf16.mxu0 0
        %2046 = vmatpush2.bf16.msra.mxu0 0
        %2047 = vmatprep.subr.bf16.mxu0 0
        %2048 = vmatpush2.bf16.msra.mxu0 0
        %2049 = vmatprep.subr.bf16.mxu0 0
        %2050 = vmatpush2.bf16.msra.mxu0 0
        %2051 = vmatprep.subr.bf16.mxu0 0
        %2052 = vmatpush2.bf16.msra.mxu0 0
        %2053 = vmatprep.subr.bf16.mxu0 0
        %2054 = vmatpush2.bf16.msra.mxu0 0
        %2055 = vmatprep.subr.bf16.mxu0 0
        %2056 = vmatpush2.bf16.msra.mxu0 0
        %2057 = vmatprep.mubr.bf16.mxu0 0
        %2058 = vmatmul.mubr.bf16.gmra.mxu0 %v2014
        %v2059 = vpop.f32.mrf.mxu0
        %v2060 = vadd.f32 0.0, %v2059
        %v2061 = vpop.f32.mrf.mxu0
        %v2062 = vadd.f32 0.0, %v2061
        %v2063 = vpop.f32.mrf.mxu0
        %v2064 = vpop.f32.mrf.mxu0
        %2065 = vdwg.mxu0
        %2066 = vmatprep.subr.bf16.mxu0 0
        %2067 = vmatpush1.bf16.msra.mxu0 0
        %2068 = vmatprep.subr.bf16.mxu0 0
        %2069 = vmatpush1.bf16.msra.mxu0 0
        %2070 = vmatprep.subr.bf16.mxu0 0
        %2071 = vmatpush1.bf16.msra.mxu0 0
        %2072 = vmatprep.subr.bf16.mxu0 0
        %2073 = vmatpush1.bf16.msra.mxu0 0
        %2074 = vmatprep.subr.bf16.mxu0 0
        %2075 = vmatpush1.bf16.msra.mxu0 0
        %2076 = vmatprep.subr.bf16.mxu0 0
        %2077 = vmatpush1.bf16.msra.mxu0 0
        %2078 = vmatprep.subr.bf16.mxu0 0
        %2079 = vmatpush1.bf16.msra.mxu0 0
        %2080 = vmatprep.subr.bf16.mxu0 0
        %2081 = vmatpush1.bf16.msra.mxu0 %v2023
        %2082 = vmatprep.subr.bf16.mxu0 0
        %2083 = vmatpush2.bf16.msra.mxu0 0
        %2084 = vmatprep.subr.bf16.mxu0 0
        %2085 = vmatpush2.bf16.msra.mxu0 0
        %2086 = vmatprep.subr.bf16.mxu0 0
        %2087 = vmatpush2.bf16.msra.mxu0 0
        %2088 = vmatprep.subr.bf16.mxu0 0
        %2089 = vmatpush2.bf16.msra.mxu0 0
        %2090 = vmatprep.subr.bf16.mxu0 0
        %2091 = vmatpush2.bf16.msra.mxu0 0
        %2092 = vmatprep.subr.bf16.mxu0 0
        %2093 = vmatpush2.bf16.msra.mxu0 0
        %2094 = vmatprep.subr.bf16.mxu0 0
        %2095 = vmatpush2.bf16.msra.mxu0 0
        %2096 = vmatprep.subr.bf16.mxu0 0
        %2097 = vmatpush2.bf16.msra.mxu0 0
        %2098 = vmatprep.mubr.bf16.mxu0 0
        %2099 = vmatmul.mubr.bf16.gmra.mxu0 %v2014
        %v2100 = vpop.f32.mrf.mxu0
        %v2101 = vadd.f32 0.0, %v2100
        %v2102 = vpop.f32.mrf.mxu0
        %v2103 = vpop.f32.mrf.mxu0
        %v2104 = vpop.f32.mrf.mxu0
        %2105 = vdwg.mxu0
        %v2106 = vadd.f32 %v1996, %v2060
        %v2107 = vadd.f32 %v1997, %v2062
        %v2108 = vadd.f32 %v1998, %v2101
        %v2109 = vunpack.c.h.b16 %v350
        %v2110 = vpack.c.b16 %v2109, %v2109
        %2111 = vrot.lane.b32.xlu0 %v363, 105
        %v2112 = vpop.permute.xlu0 %2111
        %2113 = vrot.lane.b32.xlu0 %v364, 105
        %v2114 = vpop.permute.xlu0 %2113
        %2115 = vrot.lane.b32.xlu0 %v365, 105
        %v2116 = vpop.permute.xlu0 %2115
        %2117 = vrot.lane.b32.xlu0 %v1780, 105
        %v2118 = vpop.permute.xlu0 %2117
        %vm2119 = vcmask 859136
        %v2120 = vsel %vm2119, %v2112, %v2114
        %v2121 = vsel %vm2119, %v2114, %v2116
        %v2122 = vsel %vm2119, %v2116, %v2118
        %v2124 = vsel %vm378, %v2110, 0
        %v2127 = vsel %vm382, %v2120, 0
        %v2130 = vsel %vm382, %v2121, 0
        %v2133 = vsel %vm382, %v2122, 0
        %2135 = vmatprep.subr.bf16.mxu0 0
        %2136 = vmatpush1.bf16.msra.mxu0 0
        %2137 = vmatprep.subr.bf16.mxu0 0
        %2138 = vmatpush1.bf16.msra.mxu0 0
        %2139 = vmatprep.subr.bf16.mxu0 0
        %2140 = vmatpush1.bf16.msra.mxu0 0
        %2141 = vmatprep.subr.bf16.mxu0 0
        %2142 = vmatpush1.bf16.msra.mxu0 0
        %2143 = vmatprep.subr.bf16.mxu0 0
        %2144 = vmatpush1.bf16.msra.mxu0 0
        %2145 = vmatprep.subr.bf16.mxu0 0
        %2146 = vmatpush1.bf16.msra.mxu0 0
        %2147 = vmatprep.subr.bf16.mxu0 0
        %2148 = vmatpush1.bf16.msra.mxu0 0
        %2149 = vmatprep.subr.bf16.mxu0 %v2130
        %2150 = vmatpush1.bf16.msra.mxu0 %v2127
        %2151 = vmatprep.subr.bf16.mxu0 0
        %2152 = vmatpush2.bf16.msra.mxu0 0
        %2153 = vmatprep.subr.bf16.mxu0 0
        %2154 = vmatpush2.bf16.msra.mxu0 0
        %2155 = vmatprep.subr.bf16.mxu0 0
        %2156 = vmatpush2.bf16.msra.mxu0 0
        %2157 = vmatprep.subr.bf16.mxu0 0
        %2158 = vmatpush2.bf16.msra.mxu0 0
        %2159 = vmatprep.subr.bf16.mxu0 0
        %2160 = vmatpush2.bf16.msra.mxu0 0
        %2161 = vmatprep.subr.bf16.mxu0 0
        %2162 = vmatpush2.bf16.msra.mxu0 0
        %2163 = vmatprep.subr.bf16.mxu0 0
        %2164 = vmatpush2.bf16.msra.mxu0 0
        %2165 = vmatprep.subr.bf16.mxu0 0
        %2166 = vmatpush2.bf16.msra.mxu0 0
        %2167 = vmatprep.mubr.bf16.mxu0 0
        %2168 = vmatmul.mubr.bf16.gmra.mxu0 %v2124
        %v2169 = vpop.f32.mrf.mxu0
        %v2170 = vadd.f32 0.0, %v2169
        %v2171 = vpop.f32.mrf.mxu0
        %v2172 = vadd.f32 0.0, %v2171
        %v2173 = vpop.f32.mrf.mxu0
        %v2174 = vpop.f32.mrf.mxu0
        %2175 = vdwg.mxu0
        %2176 = vmatprep.subr.bf16.mxu0 0
        %2177 = vmatpush1.bf16.msra.mxu0 0
        %2178 = vmatprep.subr.bf16.mxu0 0
        %2179 = vmatpush1.bf16.msra.mxu0 0
        %2180 = vmatprep.subr.bf16.mxu0 0
        %2181 = vmatpush1.bf16.msra.mxu0 0
        %2182 = vmatprep.subr.bf16.mxu0 0
        %2183 = vmatpush1.bf16.msra.mxu0 0
        %2184 = vmatprep.subr.bf16.mxu0 0
        %2185 = vmatpush1.bf16.msra.mxu0 0
        %2186 = vmatprep.subr.bf16.mxu0 0
        %2187 = vmatpush1.bf16.msra.mxu0 0
        %2188 = vmatprep.subr.bf16.mxu0 0
        %2189 = vmatpush1.bf16.msra.mxu0 0
        %2190 = vmatprep.subr.bf16.mxu0 0
        %2191 = vmatpush1.bf16.msra.mxu0 %v2133
        %2192 = vmatprep.subr.bf16.mxu0 0
        %2193 = vmatpush2.bf16.msra.mxu0 0
        %2194 = vmatprep.subr.bf16.mxu0 0
        %2195 = vmatpush2.bf16.msra.mxu0 0
        %2196 = vmatprep.subr.bf16.mxu0 0
        %2197 = vmatpush2.bf16.msra.mxu0 0
        %2198 = vmatprep.subr.bf16.mxu0 0
        %2199 = vmatpush2.bf16.msra.mxu0 0
        %2200 = vmatprep.subr.bf16.mxu0 0
        %2201 = vmatpush2.bf16.msra.mxu0 0
        %2202 = vmatprep.subr.bf16.mxu0 0
        %2203 = vmatpush2.bf16.msra.mxu0 0
        %2204 = vmatprep.subr.bf16.mxu0 0
        %2205 = vmatpush2.bf16.msra.mxu0 0
        %2206 = vmatprep.subr.bf16.mxu0 0
        %2207 = vmatpush2.bf16.msra.mxu0 0
        %2208 = vmatprep.mubr.bf16.mxu0 0
        %2209 = vmatmul.mubr.bf16.gmra.mxu0 %v2124
        %v2210 = vpop.f32.mrf.mxu0
        %v2211 = vadd.f32 0.0, %v2210
        %v2212 = vpop.f32.mrf.mxu0
        %v2213 = vpop.f32.mrf.mxu0
        %v2214 = vpop.f32.mrf.mxu0
        %2215 = vdwg.mxu0
        %v2216 = vadd.f32 %v2106, %v2170
        %v2217 = vadd.f32 %v2107, %v2172
        %v2218 = vadd.f32 %v2108, %v2211
        %2219 = vrot.lane.b32.xlu0 %v2110, 120
        %v2220 = vpop.permute.xlu0 %2219
        %2221 = vrot.lane.b32.xlu0 %v363, 104
        %v2222 = vpop.permute.xlu0 %2221
        %2223 = vrot.lane.b32.xlu0 %v364, 104
        %v2224 = vpop.permute.xlu0 %2223
        %2225 = vrot.lane.b32.xlu0 %v365, 104
        %v2226 = vpop.permute.xlu0 %2225
        %2227 = vrot.lane.b32.xlu0 %v1780, 104
        %v2228 = vpop.permute.xlu0 %2227
        %vm2229 = vcmask 850944
        %v2230 = vsel %vm2229, %v2222, %v2224
        %v2231 = vsel %vm2229, %v2224, %v2226
        %v2232 = vsel %vm2229, %v2226, %v2228
        %v2234 = vsel %vm378, %v2220, 0
        %v2237 = vsel %vm382, %v2230, 0
        %v2240 = vsel %vm382, %v2231, 0
        %v2243 = vsel %vm382, %v2232, 0
        %2245 = vmatprep.subr.bf16.mxu0 0
        %2246 = vmatpush1.bf16.msra.mxu0 0
        %2247 = vmatprep.subr.bf16.mxu0 0
        %2248 = vmatpush1.bf16.msra.mxu0 0
        %2249 = vmatprep.subr.bf16.mxu0 0
        %2250 = vmatpush1.bf16.msra.mxu0 0
        %2251 = vmatprep.subr.bf16.mxu0 0
        %2252 = vmatpush1.bf16.msra.mxu0 0
        %2253 = vmatprep.subr.bf16.mxu0 0
        %2254 = vmatpush1.bf16.msra.mxu0 0
        %2255 = vmatprep.subr.bf16.mxu0 0
        %2256 = vmatpush1.bf16.msra.mxu0 0
        %2257 = vmatprep.subr.bf16.mxu0 0
        %2258 = vmatpush1.bf16.msra.mxu0 0
        %2259 = vmatprep.subr.bf16.mxu0 %v2240
        %2260 = vmatpush1.bf16.msra.mxu0 %v2237
        %2261 = vmatprep.subr.bf16.mxu0 0
        %2262 = vmatpush2.bf16.msra.mxu0 0
        %2263 = vmatprep.subr.bf16.mxu0 0
        %2264 = vmatpush2.bf16.msra.mxu0 0
        %2265 = vmatprep.subr.bf16.mxu0 0
        %2266 = vmatpush2.bf16.msra.mxu0 0
        %2267 = vmatprep.subr.bf16.mxu0 0
        %2268 = vmatpush2.bf16.msra.mxu0 0
        %2269 = vmatprep.subr.bf16.mxu0 0
        %2270 = vmatpush2.bf16.msra.mxu0 0
        %2271 = vmatprep.subr.bf16.mxu0 0
        %2272 = vmatpush2.bf16.msra.mxu0 0
        %2273 = vmatprep.subr.bf16.mxu0 0
        %2274 = vmatpush2.bf16.msra.mxu0 0
        %2275 = vmatprep.subr.bf16.mxu0 0
        %2276 = vmatpush2.bf16.msra.mxu0 0
        %2277 = vmatprep.mubr.bf16.mxu0 0
        %2278 = vmatmul.mubr.bf16.gmra.mxu0 %v2234
        %v2279 = vpop.f32.mrf.mxu0
        %v2280 = vadd.f32 0.0, %v2279
        %v2281 = vpop.f32.mrf.mxu0
        %v2282 = vadd.f32 0.0, %v2281
        %v2283 = vpop.f32.mrf.mxu0
        %v2284 = vpop.f32.mrf.mxu0
        %2285 = vdwg.mxu0
        %2286 = vmatprep.subr.bf16.mxu0 0
        %2287 = vmatpush1.bf16.msra.mxu0 0
        %2288 = vmatprep.subr.bf16.mxu0 0
        %2289 = vmatpush1.bf16.msra.mxu0 0
        %2290 = vmatprep.subr.bf16.mxu0 0
        %2291 = vmatpush1.bf16.msra.mxu0 0
        %2292 = vmatprep.subr.bf16.mxu0 0
        %2293 = vmatpush1.bf16.msra.mxu0 0
        %2294 = vmatprep.subr.bf16.mxu0 0
        %2295 = vmatpush1.bf16.msra.mxu0 0
        %2296 = vmatprep.subr.bf16.mxu0 0
        %2297 = vmatpush1.bf16.msra.mxu0 0
        %2298 = vmatprep.subr.bf16.mxu0 0
        %2299 = vmatpush1.bf16.msra.mxu0 0
        %2300 = vmatprep.subr.bf16.mxu0 0
        %2301 = vmatpush1.bf16.msra.mxu0 %v2243
        %2302 = vmatprep.subr.bf16.mxu0 0
        %2303 = vmatpush2.bf16.msra.mxu0 0
        %2304 = vmatprep.subr.bf16.mxu0 0
        %2305 = vmatpush2.bf16.msra.mxu0 0
        %2306 = vmatprep.subr.bf16.mxu0 0
        %2307 = vmatpush2.bf16.msra.mxu0 0
        %2308 = vmatprep.subr.bf16.mxu0 0
        %2309 = vmatpush2.bf16.msra.mxu0 0
        %2310 = vmatprep.subr.bf16.mxu0 0
        %2311 = vmatpush2.bf16.msra.mxu0 0
        %2312 = vmatprep.subr.bf16.mxu0 0
        %2313 = vmatpush2.bf16.msra.mxu0 0
        %2314 = vmatprep.subr.bf16.mxu0 0
        %2315 = vmatpush2.bf16.msra.mxu0 0
        %2316 = vmatprep.subr.bf16.mxu0 0
        %2317 = vmatpush2.bf16.msra.mxu0 0
        %2318 = vmatprep.mubr.bf16.mxu0 0
        %2319 = vmatmul.mubr.bf16.gmra.mxu0 %v2234
        %v2320 = vpop.f32.mrf.mxu0
        %v2321 = vadd.f32 0.0, %v2320
        %v2322 = vpop.f32.mrf.mxu0
        %v2323 = vpop.f32.mrf.mxu0
        %v2324 = vpop.f32.mrf.mxu0
        %2325 = vdwg.mxu0
        %v2326 = vadd.f32 %v2216, %v2280
        %v2327 = vadd.f32 %v2217, %v2282
        %v2328 = vadd.f32 %v2218, %v2321
        %2329 = vrot.lane.b32.xlu0 %v2110, 112
        %v2330 = vpop.permute.xlu0 %2329
        %2331 = vrot.lane.b32.xlu0 %v363, 103
        %v2332 = vpop.permute.xlu0 %2331
        %2333 = vrot.lane.b32.xlu0 %v364, 103
        %v2334 = vpop.permute.xlu0 %2333
        %2335 = vrot.lane.b32.xlu0 %v365, 103
        %v2336 = vpop.permute.xlu0 %2335
        %2337 = vrot.lane.b32.xlu0 %v1780, 103
        %v2338 = vpop.permute.xlu0 %2337
        %vm2339 = vcmask 842752
        %v2340 = vsel %vm2339, %v2332, %v2334
        %v2341 = vsel %vm2339, %v2334, %v2336
        %v2342 = vsel %vm2339, %v2336, %v2338
        %v2344 = vsel %vm378, %v2330, 0
        %v2347 = vsel %vm382, %v2340, 0
        %v2350 = vsel %vm382, %v2341, 0
        %v2353 = vsel %vm382, %v2342, 0
        %2355 = vmatprep.subr.bf16.mxu0 0
        %2356 = vmatpush1.bf16.msra.mxu0 0
        %2357 = vmatprep.subr.bf16.mxu0 0
        %2358 = vmatpush1.bf16.msra.mxu0 0
        %2359 = vmatprep.subr.bf16.mxu0 0
        %2360 = vmatpush1.bf16.msra.mxu0 0
        %2361 = vmatprep.subr.bf16.mxu0 0
        %2362 = vmatpush1.bf16.msra.mxu0 0
        %2363 = vmatprep.subr.bf16.mxu0 0
        %2364 = vmatpush1.bf16.msra.mxu0 0
        %2365 = vmatprep.subr.bf16.mxu0 0
        %2366 = vmatpush1.bf16.msra.mxu0 0
        %2367 = vmatprep.subr.bf16.mxu0 0
        %2368 = vmatpush1.bf16.msra.mxu0 0
        %2369 = vmatprep.subr.bf16.mxu0 %v2350
        %2370 = vmatpush1.bf16.msra.mxu0 %v2347
        %2371 = vmatprep.subr.bf16.mxu0 0
        %2372 = vmatpush2.bf16.msra.mxu0 0
        %2373 = vmatprep.subr.bf16.mxu0 0
        %2374 = vmatpush2.bf16.msra.mxu0 0
        %2375 = vmatprep.subr.bf16.mxu0 0
        %2376 = vmatpush2.bf16.msra.mxu0 0
        %2377 = vmatprep.subr.bf16.mxu0 0
        %2378 = vmatpush2.bf16.msra.mxu0 0
        %2379 = vmatprep.subr.bf16.mxu0 0
        %2380 = vmatpush2.bf16.msra.mxu0 0
        %2381 = vmatprep.subr.bf16.mxu0 0
        %2382 = vmatpush2.bf16.msra.mxu0 0
        %2383 = vmatprep.subr.bf16.mxu0 0
        %2384 = vmatpush2.bf16.msra.mxu0 0
        %2385 = vmatprep.subr.bf16.mxu0 0
        %2386 = vmatpush2.bf16.msra.mxu0 0
        %2387 = vmatprep.mubr.bf16.mxu0 0
        %2388 = vmatmul.mubr.bf16.gmra.mxu0 %v2344
        %v2389 = vpop.f32.mrf.mxu0
        %v2390 = vadd.f32 0.0, %v2389
        %v2391 = vpop.f32.mrf.mxu0
        %v2392 = vadd.f32 0.0, %v2391
        %v2393 = vpop.f32.mrf.mxu0
        %v2394 = vpop.f32.mrf.mxu0
        %2395 = vdwg.mxu0
        %2396 = vmatprep.subr.bf16.mxu0 0
        %2397 = vmatpush1.bf16.msra.mxu0 0
        %2398 = vmatprep.subr.bf16.mxu0 0
        %2399 = vmatpush1.bf16.msra.mxu0 0
        %2400 = vmatprep.subr.bf16.mxu0 0
        %2401 = vmatpush1.bf16.msra.mxu0 0
        %2402 = vmatprep.subr.bf16.mxu0 0
        %2403 = vmatpush1.bf16.msra.mxu0 0
        %2404 = vmatprep.subr.bf16.mxu0 0
        %2405 = vmatpush1.bf16.msra.mxu0 0
        %2406 = vmatprep.subr.bf16.mxu0 0
        %2407 = vmatpush1.bf16.msra.mxu0 0
        %2408 = vmatprep.subr.bf16.mxu0 0
        %2409 = vmatpush1.bf16.msra.mxu0 0
        %2410 = vmatprep.subr.bf16.mxu0 0
        %2411 = vmatpush1.bf16.msra.mxu0 %v2353
        %2412 = vmatprep.subr.bf16.mxu0 0
        %2413 = vmatpush2.bf16.msra.mxu0 0
        %2414 = vmatprep.subr.bf16.mxu0 0
        %2415 = vmatpush2.bf16.msra.mxu0 0
        %2416 = vmatprep.subr.bf16.mxu0 0
        %2417 = vmatpush2.bf16.msra.mxu0 0
        %2418 = vmatprep.subr.bf16.mxu0 0
        %2419 = vmatpush2.bf16.msra.mxu0 0
        %2420 = vmatprep.subr.bf16.mxu0 0
        %2421 = vmatpush2.bf16.msra.mxu0 0
        %2422 = vmatprep.subr.bf16.mxu0 0
        %2423 = vmatpush2.bf16.msra.mxu0 0
        %2424 = vmatprep.subr.bf16.mxu0 0
        %2425 = vmatpush2.bf16.msra.mxu0 0
        %2426 = vmatprep.subr.bf16.mxu0 0
        %2427 = vmatpush2.bf16.msra.mxu0 0
        %2428 = vmatprep.mubr.bf16.mxu0 0
        %2429 = vmatmul.mubr.bf16.gmra.mxu0 %v2344
        %v2430 = vpop.f32.mrf.mxu0
        %v2431 = vadd.f32 0.0, %v2430
        %v2432 = vpop.f32.mrf.mxu0
        %v2433 = vpop.f32.mrf.mxu0
        %v2434 = vpop.f32.mrf.mxu0
        %2435 = vdwg.mxu0
        %v2436 = vadd.f32 %v2326, %v2390
        %v2437 = vadd.f32 %v2327, %v2392
        %v2438 = vadd.f32 %v2328, %v2431
        %2439 = vrot.lane.b32.xlu0 %v2110, 104
        %v2440 = vpop.permute.xlu0 %2439
        %2441 = vrot.lane.b32.xlu0 %v363, 102
        %v2442 = vpop.permute.xlu0 %2441
        %2443 = vrot.lane.b32.xlu0 %v364, 102
        %v2444 = vpop.permute.xlu0 %2443
        %2445 = vrot.lane.b32.xlu0 %v365, 102
        %v2446 = vpop.permute.xlu0 %2445
        %2447 = vrot.lane.b32.xlu0 %v1780, 102
        %v2448 = vpop.permute.xlu0 %2447
        %vm2449 = vcmask 834560
        %v2450 = vsel %vm2449, %v2442, %v2444
        %v2451 = vsel %vm2449, %v2444, %v2446
        %v2452 = vsel %vm2449, %v2446, %v2448
        %v2454 = vsel %vm378, %v2440, 0
        %v2457 = vsel %vm382, %v2450, 0
        %v2460 = vsel %vm382, %v2451, 0
        %v2463 = vsel %vm382, %v2452, 0
        %2465 = vmatprep.subr.bf16.mxu0 0
        %2466 = vmatpush1.bf16.msra.mxu0 0
        %2467 = vmatprep.subr.bf16.mxu0 0
        %2468 = vmatpush1.bf16.msra.mxu0 0
        %2469 = vmatprep.subr.bf16.mxu0 0
        %2470 = vmatpush1.bf16.msra.mxu0 0
        %2471 = vmatprep.subr.bf16.mxu0 0
        %2472 = vmatpush1.bf16.msra.mxu0 0
        %2473 = vmatprep.subr.bf16.mxu0 0
        %2474 = vmatpush1.bf16.msra.mxu0 0
        %2475 = vmatprep.subr.bf16.mxu0 0
        %2476 = vmatpush1.bf16.msra.mxu0 0
        %2477 = vmatprep.subr.bf16.mxu0 0
        %2478 = vmatpush1.bf16.msra.mxu0 0
        %2479 = vmatprep.subr.bf16.mxu0 %v2460
        %2480 = vmatpush1.bf16.msra.mxu0 %v2457
        %2481 = vmatprep.subr.bf16.mxu0 0
        %2482 = vmatpush2.bf16.msra.mxu0 0
        %2483 = vmatprep.subr.bf16.mxu0 0
        %2484 = vmatpush2.bf16.msra.mxu0 0
        %2485 = vmatprep.subr.bf16.mxu0 0
        %2486 = vmatpush2.bf16.msra.mxu0 0
        %2487 = vmatprep.subr.bf16.mxu0 0
        %2488 = vmatpush2.bf16.msra.mxu0 0
        %2489 = vmatprep.subr.bf16.mxu0 0
        %2490 = vmatpush2.bf16.msra.mxu0 0
        %2491 = vmatprep.subr.bf16.mxu0 0
        %2492 = vmatpush2.bf16.msra.mxu0 0
        %2493 = vmatprep.subr.bf16.mxu0 0
        %2494 = vmatpush2.bf16.msra.mxu0 0
        %2495 = vmatprep.subr.bf16.mxu0 0
        %2496 = vmatpush2.bf16.msra.mxu0 0
        %2497 = vmatprep.mubr.bf16.mxu0 0
        %2498 = vmatmul.mubr.bf16.gmra.mxu0 %v2454
        %v2499 = vpop.f32.mrf.mxu0
        %v2500 = vadd.f32 0.0, %v2499
        %v2501 = vpop.f32.mrf.mxu0
        %v2502 = vadd.f32 0.0, %v2501
        %v2503 = vpop.f32.mrf.mxu0
        %v2504 = vpop.f32.mrf.mxu0
        %2505 = vdwg.mxu0
        %2506 = vmatprep.subr.bf16.mxu0 0
        %2507 = vmatpush1.bf16.msra.mxu0 0
        %2508 = vmatprep.subr.bf16.mxu0 0
        %2509 = vmatpush1.bf16.msra.mxu0 0
        %2510 = vmatprep.subr.bf16.mxu0 0
        %2511 = vmatpush1.bf16.msra.mxu0 0
        %2512 = vmatprep.subr.bf16.mxu0 0
        %2513 = vmatpush1.bf16.msra.mxu0 0
        %2514 = vmatprep.subr.bf16.mxu0 0
        %2515 = vmatpush1.bf16.msra.mxu0 0
        %2516 = vmatprep.subr.bf16.mxu0 0
        %2517 = vmatpush1.bf16.msra.mxu0 0
        %2518 = vmatprep.subr.bf16.mxu0 0
        %2519 = vmatpush1.bf16.msra.mxu0 0
        %2520 = vmatprep.subr.bf16.mxu0 0
        %2521 = vmatpush1.bf16.msra.mxu0 %v2463
        %2522 = vmatprep.subr.bf16.mxu0 0
        %2523 = vmatpush2.bf16.msra.mxu0 0
        %2524 = vmatprep.subr.bf16.mxu0 0
        %2525 = vmatpush2.bf16.msra.mxu0 0
        %2526 = vmatprep.subr.bf16.mxu0 0
        %2527 = vmatpush2.bf16.msra.mxu0 0
        %2528 = vmatprep.subr.bf16.mxu0 0
        %2529 = vmatpush2.bf16.msra.mxu0 0
        %2530 = vmatprep.subr.bf16.mxu0 0
        %2531 = vmatpush2.bf16.msra.mxu0 0
        %2532 = vmatprep.subr.bf16.mxu0 0
        %2533 = vmatpush2.bf16.msra.mxu0 0
        %2534 = vmatprep.subr.bf16.mxu0 0
        %2535 = vmatpush2.bf16.msra.mxu0 0
        %2536 = vmatprep.subr.bf16.mxu0 0
        %2537 = vmatpush2.bf16.msra.mxu0 0
        %2538 = vmatprep.mubr.bf16.mxu0 0
        %2539 = vmatmul.mubr.bf16.gmra.mxu0 %v2454
        %v2540 = vpop.f32.mrf.mxu0
        %v2541 = vadd.f32 0.0, %v2540
        %v2542 = vpop.f32.mrf.mxu0
        %v2543 = vpop.f32.mrf.mxu0
        %v2544 = vpop.f32.mrf.mxu0
        %2545 = vdwg.mxu0
        %v2546 = vadd.f32 %v2436, %v2500
        %v2547 = vadd.f32 %v2437, %v2502
        %v2548 = vadd.f32 %v2438, %v2541
        %2549 = vrot.lane.b32.xlu0 %v2110, 96
        %v2550 = vpop.permute.xlu0 %2549
        %2551 = vrot.lane.b32.xlu0 %v363, 82
        %v2552 = vpop.permute.xlu0 %2551
        %2553 = vrot.lane.b32.xlu0 %v364, 82
        %v2554 = vpop.permute.xlu0 %2553
        %2555 = vrot.lane.b32.xlu0 %v365, 82
        %v2556 = vpop.permute.xlu0 %2555
        %2557 = vrot.lane.b32.xlu0 %v1780, 82
        %v2558 = vpop.permute.xlu0 %2557
        %vm2559 = vcmask 670720
        %v2560 = vsel %vm2559, %v2552, %v2554
        %v2561 = vsel %vm2559, %v2554, %v2556
        %v2562 = vsel %vm2559, %v2556, %v2558
        %v2564 = vsel %vm378, %v2550, 0
        %v2567 = vsel %vm382, %v2560, 0
        %v2570 = vsel %vm382, %v2561, 0
        %v2573 = vsel %vm382, %v2562, 0
        %2575 = vmatprep.subr.bf16.mxu0 0
        %2576 = vmatpush1.bf16.msra.mxu0 0
        %2577 = vmatprep.subr.bf16.mxu0 0
        %2578 = vmatpush1.bf16.msra.mxu0 0
        %2579 = vmatprep.subr.bf16.mxu0 0
        %2580 = vmatpush1.bf16.msra.mxu0 0
        %2581 = vmatprep.subr.bf16.mxu0 0
        %2582 = vmatpush1.bf16.msra.mxu0 0
        %2583 = vmatprep.subr.bf16.mxu0 0
        %2584 = vmatpush1.bf16.msra.mxu0 0
        %2585 = vmatprep.subr.bf16.mxu0 0
        %2586 = vmatpush1.bf16.msra.mxu0 0
        %2587 = vmatprep.subr.bf16.mxu0 0
        %2588 = vmatpush1.bf16.msra.mxu0 0
        %2589 = vmatprep.subr.bf16.mxu0 %v2570
        %2590 = vmatpush1.bf16.msra.mxu0 %v2567
        %2591 = vmatprep.subr.bf16.mxu0 0
        %2592 = vmatpush2.bf16.msra.mxu0 0
        %2593 = vmatprep.subr.bf16.mxu0 0
        %2594 = vmatpush2.bf16.msra.mxu0 0
        %2595 = vmatprep.subr.bf16.mxu0 0
        %2596 = vmatpush2.bf16.msra.mxu0 0
        %2597 = vmatprep.subr.bf16.mxu0 0
        %2598 = vmatpush2.bf16.msra.mxu0 0
        %2599 = vmatprep.subr.bf16.mxu0 0
        %2600 = vmatpush2.bf16.msra.mxu0 0
        %2601 = vmatprep.subr.bf16.mxu0 0
        %2602 = vmatpush2.bf16.msra.mxu0 0
        %2603 = vmatprep.subr.bf16.mxu0 0
        %2604 = vmatpush2.bf16.msra.mxu0 0
        %2605 = vmatprep.subr.bf16.mxu0 0
        %2606 = vmatpush2.bf16.msra.mxu0 0
        %2607 = vmatprep.mubr.bf16.mxu0 0
        %2608 = vmatmul.mubr.bf16.gmra.mxu0 %v2564
        %v2609 = vpop.f32.mrf.mxu0
        %v2610 = vadd.f32 0.0, %v2609
        %v2611 = vpop.f32.mrf.mxu0
        %v2612 = vadd.f32 0.0, %v2611
        %v2613 = vpop.f32.mrf.mxu0
        %v2614 = vpop.f32.mrf.mxu0
        %2615 = vdwg.mxu0
        %2616 = vmatprep.subr.bf16.mxu0 0
        %2617 = vmatpush1.bf16.msra.mxu0 0
        %2618 = vmatprep.subr.bf16.mxu0 0
        %2619 = vmatpush1.bf16.msra.mxu0 0
        %2620 = vmatprep.subr.bf16.mxu0 0
        %2621 = vmatpush1.bf16.msra.mxu0 0
        %2622 = vmatprep.subr.bf16.mxu0 0
        %2623 = vmatpush1.bf16.msra.mxu0 0
        %2624 = vmatprep.subr.bf16.mxu0 0
        %2625 = vmatpush1.bf16.msra.mxu0 0
        %2626 = vmatprep.subr.bf16.mxu0 0
        %2627 = vmatpush1.bf16.msra.mxu0 0
        %2628 = vmatprep.subr.bf16.mxu0 0
        %2629 = vmatpush1.bf16.msra.mxu0 0
        %2630 = vmatprep.subr.bf16.mxu0 0
        %2631 = vmatpush1.bf16.msra.mxu0 %v2573
        %2632 = vmatprep.subr.bf16.mxu0 0
        %2633 = vmatpush2.bf16.msra.mxu0 0
        %2634 = vmatprep.subr.bf16.mxu0 0
        %2635 = vmatpush2.bf16.msra.mxu0 0
        %2636 = vmatprep.subr.bf16.mxu0 0
        %2637 = vmatpush2.bf16.msra.mxu0 0
        %2638 = vmatprep.subr.bf16.mxu0 0
        %2639 = vmatpush2.bf16.msra.mxu0 0
        %2640 = vmatprep.subr.bf16.mxu0 0
        %2641 = vmatpush2.bf16.msra.mxu0 0
        %2642 = vmatprep.subr.bf16.mxu0 0
        %2643 = vmatpush2.bf16.msra.mxu0 0
        %2644 = vmatprep.subr.bf16.mxu0 0
        %2645 = vmatpush2.bf16.msra.mxu0 0
        %2646 = vmatprep.subr.bf16.mxu0 0
        %2647 = vmatpush2.bf16.msra.mxu0 0
        %2648 = vmatprep.mubr.bf16.mxu0 0
        %2649 = vmatmul.mubr.bf16.gmra.mxu0 %v2564
        %v2650 = vpop.f32.mrf.mxu0
        %v2651 = vadd.f32 0.0, %v2650
        %v2652 = vpop.f32.mrf.mxu0
        %v2653 = vpop.f32.mrf.mxu0
        %v2654 = vpop.f32.mrf.mxu0
        %2655 = vdwg.mxu0
        %v2656 = vadd.f32 %v2546, %v2610
        %v2657 = vadd.f32 %v2547, %v2612
        %v2658 = vadd.f32 %v2548, %v2651
        %2659 = vrot.lane.b32.xlu0 %v2110, 88
        %v2660 = vpop.permute.xlu0 %2659
        %2661 = vrot.lane.b32.xlu0 %v363, 81
        %v2662 = vpop.permute.xlu0 %2661
        %2663 = vrot.lane.b32.xlu0 %v364, 81
        %v2664 = vpop.permute.xlu0 %2663
        %2665 = vrot.lane.b32.xlu0 %v365, 81
        %v2666 = vpop.permute.xlu0 %2665
        %2667 = vrot.lane.b32.xlu0 %v1780, 81
        %v2668 = vpop.permute.xlu0 %2667
        %vm2669 = vcmask 662528
        %v2670 = vsel %vm2669, %v2662, %v2664
        %v2671 = vsel %vm2669, %v2664, %v2666
        %v2672 = vsel %vm2669, %v2666, %v2668
        %v2674 = vsel %vm378, %v2660, 0
        %v2677 = vsel %vm382, %v2670, 0
        %v2680 = vsel %vm382, %v2671, 0
        %v2683 = vsel %vm382, %v2672, 0
        %2685 = vmatprep.subr.bf16.mxu0 0
        %2686 = vmatpush1.bf16.msra.mxu0 0
        %2687 = vmatprep.subr.bf16.mxu0 0
        %2688 = vmatpush1.bf16.msra.mxu0 0
        %2689 = vmatprep.subr.bf16.mxu0 0
        %2690 = vmatpush1.bf16.msra.mxu0 0
        %2691 = vmatprep.subr.bf16.mxu0 0
        %2692 = vmatpush1.bf16.msra.mxu0 0
        %2693 = vmatprep.subr.bf16.mxu0 0
        %2694 = vmatpush1.bf16.msra.mxu0 0
        %2695 = vmatprep.subr.bf16.mxu0 0
        %2696 = vmatpush1.bf16.msra.mxu0 0
        %2697 = vmatprep.subr.bf16.mxu0 0
        %2698 = vmatpush1.bf16.msra.mxu0 0
        %2699 = vmatprep.subr.bf16.mxu0 %v2680
        %2700 = vmatpush1.bf16.msra.mxu0 %v2677
        %2701 = vmatprep.subr.bf16.mxu0 0
        %2702 = vmatpush2.bf16.msra.mxu0 0
        %2703 = vmatprep.subr.bf16.mxu0 0
        %2704 = vmatpush2.bf16.msra.mxu0 0
        %2705 = vmatprep.subr.bf16.mxu0 0
        %2706 = vmatpush2.bf16.msra.mxu0 0
        %2707 = vmatprep.subr.bf16.mxu0 0
        %2708 = vmatpush2.bf16.msra.mxu0 0
        %2709 = vmatprep.subr.bf16.mxu0 0
        %2710 = vmatpush2.bf16.msra.mxu0 0
        %2711 = vmatprep.subr.bf16.mxu0 0
        %2712 = vmatpush2.bf16.msra.mxu0 0
        %2713 = vmatprep.subr.bf16.mxu0 0
        %2714 = vmatpush2.bf16.msra.mxu0 0
        %2715 = vmatprep.subr.bf16.mxu0 0
        %2716 = vmatpush2.bf16.msra.mxu0 0
        %2717 = vmatprep.mubr.bf16.mxu0 0
        %2718 = vmatmul.mubr.bf16.gmra.mxu0 %v2674
        %v2719 = vpop.f32.mrf.mxu0
        %v2720 = vadd.f32 0.0, %v2719
        %v2721 = vpop.f32.mrf.mxu0
        %v2722 = vadd.f32 0.0, %v2721
        %v2723 = vpop.f32.mrf.mxu0
        %v2724 = vpop.f32.mrf.mxu0
        %2725 = vdwg.mxu0
        %2726 = vmatprep.subr.bf16.mxu0 0
        %2727 = vmatpush1.bf16.msra.mxu0 0
        %2728 = vmatprep.subr.bf16.mxu0 0
        %2729 = vmatpush1.bf16.msra.mxu0 0
        %2730 = vmatprep.subr.bf16.mxu0 0
        %2731 = vmatpush1.bf16.msra.mxu0 0
        %2732 = vmatprep.subr.bf16.mxu0 0
        %2733 = vmatpush1.bf16.msra.mxu0 0
        %2734 = vmatprep.subr.bf16.mxu0 0
        %2735 = vmatpush1.bf16.msra.mxu0 0
        %2736 = vmatprep.subr.bf16.mxu0 0
        %2737 = vmatpush1.bf16.msra.mxu0 0
        %2738 = vmatprep.subr.bf16.mxu0 0
        %2739 = vmatpush1.bf16.msra.mxu0 0
        %2740 = vmatprep.subr.bf16.mxu0 0
        %2741 = vmatpush1.bf16.msra.mxu0 %v2683
        %2742 = vmatprep.subr.bf16.mxu0 0
        %2743 = vmatpush2.bf16.msra.mxu0 0
        %2744 = vmatprep.subr.bf16.mxu0 0
        %2745 = vmatpush2.bf16.msra.mxu0 0
        %2746 = vmatprep.subr.bf16.mxu0 0
        %2747 = vmatpush2.bf16.msra.mxu0 0
        %2748 = vmatprep.subr.bf16.mxu0 0
        %2749 = vmatpush2.bf16.msra.mxu0 0
        %2750 = vmatprep.subr.bf16.mxu0 0
        %2751 = vmatpush2.bf16.msra.mxu0 0
        %2752 = vmatprep.subr.bf16.mxu0 0
        %2753 = vmatpush2.bf16.msra.mxu0 0
        %2754 = vmatprep.subr.bf16.mxu0 0
        %2755 = vmatpush2.bf16.msra.mxu0 0
        %2756 = vmatprep.subr.bf16.mxu0 0
        %2757 = vmatpush2.bf16.msra.mxu0 0
        %2758 = vmatprep.mubr.bf16.mxu0 0
        %2759 = vmatmul.mubr.bf16.gmra.mxu0 %v2674
        %v2760 = vpop.f32.mrf.mxu0
        %v2761 = vadd.f32 0.0, %v2760
        %v2762 = vpop.f32.mrf.mxu0
        %v2763 = vpop.f32.mrf.mxu0
        %v2764 = vpop.f32.mrf.mxu0
        %2765 = vdwg.mxu0
        %v2766 = vadd.f32 %v2656, %v2720
        %v2767 = vadd.f32 %v2657, %v2722
        %v2768 = vadd.f32 %v2658, %v2761
        %2769 = vrot.lane.b32.xlu0 %v2110, 80
        %v2770 = vpop.permute.xlu0 %2769
        %2771 = vrot.lane.b32.xlu0 %v363, 80
        %v2772 = vpop.permute.xlu0 %2771
        %2773 = vrot.lane.b32.xlu0 %v364, 80
        %v2774 = vpop.permute.xlu0 %2773
        %2775 = vrot.lane.b32.xlu0 %v365, 80
        %v2776 = vpop.permute.xlu0 %2775
        %2777 = vrot.lane.b32.xlu0 %v1780, 80
        %v2778 = vpop.permute.xlu0 %2777
        %vm2779 = vcmask 654336
        %v2780 = vsel %vm2779, %v2772, %v2774
        %v2781 = vsel %vm2779, %v2774, %v2776
        %v2782 = vsel %vm2779, %v2776, %v2778
        %v2784 = vsel %vm378, %v2770, 0
        %v2787 = vsel %vm382, %v2780, 0
        %v2790 = vsel %vm382, %v2781, 0
        %v2793 = vsel %vm382, %v2782, 0
        %2795 = vmatprep.subr.bf16.mxu0 0
        %2796 = vmatpush1.bf16.msra.mxu0 0
        %2797 = vmatprep.subr.bf16.mxu0 0
        %2798 = vmatpush1.bf16.msra.mxu0 0
        %2799 = vmatprep.subr.bf16.mxu0 0
        %2800 = vmatpush1.bf16.msra.mxu0 0
        %2801 = vmatprep.subr.bf16.mxu0 0
        %2802 = vmatpush1.bf16.msra.mxu0 0
        %2803 = vmatprep.subr.bf16.mxu0 0
        %2804 = vmatpush1.bf16.msra.mxu0 0
        %2805 = vmatprep.subr.bf16.mxu0 0
        %2806 = vmatpush1.bf16.msra.mxu0 0
        %2807 = vmatprep.subr.bf16.mxu0 0
        %2808 = vmatpush1.bf16.msra.mxu0 0
        %2809 = vmatprep.subr.bf16.mxu0 %v2790
        %2810 = vmatpush1.bf16.msra.mxu0 %v2787
        %2811 = vmatprep.subr.bf16.mxu0 0
        %2812 = vmatpush2.bf16.msra.mxu0 0
        %2813 = vmatprep.subr.bf16.mxu0 0
        %2814 = vmatpush2.bf16.msra.mxu0 0
        %2815 = vmatprep.subr.bf16.mxu0 0
        %2816 = vmatpush2.bf16.msra.mxu0 0
        %2817 = vmatprep.subr.bf16.mxu0 0
        %2818 = vmatpush2.bf16.msra.mxu0 0
        %2819 = vmatprep.subr.bf16.mxu0 0
        %2820 = vmatpush2.bf16.msra.mxu0 0
        %2821 = vmatprep.subr.bf16.mxu0 0
        %2822 = vmatpush2.bf16.msra.mxu0 0
        %2823 = vmatprep.subr.bf16.mxu0 0
        %2824 = vmatpush2.bf16.msra.mxu0 0
        %2825 = vmatprep.subr.bf16.mxu0 0
        %2826 = vmatpush2.bf16.msra.mxu0 0
        %2827 = vmatprep.mubr.bf16.mxu0 0
        %2828 = vmatmul.mubr.bf16.gmra.mxu0 %v2784
        %v2829 = vpop.f32.mrf.mxu0
        %v2830 = vadd.f32 0.0, %v2829
        %v2831 = vpop.f32.mrf.mxu0
        %v2832 = vadd.f32 0.0, %v2831
        %v2833 = vpop.f32.mrf.mxu0
        %v2834 = vpop.f32.mrf.mxu0
        %2835 = vdwg.mxu0
        %2836 = vmatprep.subr.bf16.mxu0 0
        %2837 = vmatpush1.bf16.msra.mxu0 0
        %2838 = vmatprep.subr.bf16.mxu0 0
        %2839 = vmatpush1.bf16.msra.mxu0 0
        %2840 = vmatprep.subr.bf16.mxu0 0
        %2841 = vmatpush1.bf16.msra.mxu0 0
        %2842 = vmatprep.subr.bf16.mxu0 0
        %2843 = vmatpush1.bf16.msra.mxu0 0
        %2844 = vmatprep.subr.bf16.mxu0 0
        %2845 = vmatpush1.bf16.msra.mxu0 0
        %2846 = vmatprep.subr.bf16.mxu0 0
        %2847 = vmatpush1.bf16.msra.mxu0 0
        %2848 = vmatprep.subr.bf16.mxu0 0
        %2849 = vmatpush1.bf16.msra.mxu0 0
        %2850 = vmatprep.subr.bf16.mxu0 0
        %2851 = vmatpush1.bf16.msra.mxu0 %v2793
        %2852 = vmatprep.subr.bf16.mxu0 0
        %2853 = vmatpush2.bf16.msra.mxu0 0
        %2854 = vmatprep.subr.bf16.mxu0 0
        %2855 = vmatpush2.bf16.msra.mxu0 0
        %2856 = vmatprep.subr.bf16.mxu0 0
        %2857 = vmatpush2.bf16.msra.mxu0 0
        %2858 = vmatprep.subr.bf16.mxu0 0
        %2859 = vmatpush2.bf16.msra.mxu0 0
        %2860 = vmatprep.subr.bf16.mxu0 0
        %2861 = vmatpush2.bf16.msra.mxu0 0
        %2862 = vmatprep.subr.bf16.mxu0 0
        %2863 = vmatpush2.bf16.msra.mxu0 0
        %2864 = vmatprep.subr.bf16.mxu0 0
        %2865 = vmatpush2.bf16.msra.mxu0 0
        %2866 = vmatprep.subr.bf16.mxu0 0
        %2867 = vmatpush2.bf16.msra.mxu0 0
        %2868 = vmatprep.mubr.bf16.mxu0 0
        %2869 = vmatmul.mubr.bf16.gmra.mxu0 %v2784
        %v2870 = vpop.f32.mrf.mxu0
        %v2871 = vadd.f32 0.0, %v2870
        %v2872 = vpop.f32.mrf.mxu0
        %v2873 = vpop.f32.mrf.mxu0
        %v2874 = vpop.f32.mrf.mxu0
        %2875 = vdwg.mxu0
        %v2876 = vadd.f32 %v2766, %v2830
        %v2877 = vadd.f32 %v2767, %v2832
        %v2878 = vadd.f32 %v2768, %v2871
        %2879 = vrot.lane.b32.xlu0 %v2110, 72
        %v2880 = vpop.permute.xlu0 %2879
        %2881 = vrot.lane.b32.xlu0 %v363, 79
        %v2882 = vpop.permute.xlu0 %2881
        %2883 = vrot.lane.b32.xlu0 %v364, 79
        %v2884 = vpop.permute.xlu0 %2883
        %2885 = vrot.lane.b32.xlu0 %v365, 79
        %v2886 = vpop.permute.xlu0 %2885
        %2887 = vrot.lane.b32.xlu0 %v1780, 79
        %v2888 = vpop.permute.xlu0 %2887
        %vm2889 = vcmask 646144
        %v2890 = vsel %vm2889, %v2882, %v2884
        %v2891 = vsel %vm2889, %v2884, %v2886
        %v2892 = vsel %vm2889, %v2886, %v2888
        %v2894 = vsel %vm378, %v2880, 0
        %v2897 = vsel %vm382, %v2890, 0
        %v2900 = vsel %vm382, %v2891, 0
        %v2903 = vsel %vm382, %v2892, 0
        %2905 = vmatprep.subr.bf16.mxu0 0
        %2906 = vmatpush1.bf16.msra.mxu0 0
        %2907 = vmatprep.subr.bf16.mxu0 0
        %2908 = vmatpush1.bf16.msra.mxu0 0
        %2909 = vmatprep.subr.bf16.mxu0 0
        %2910 = vmatpush1.bf16.msra.mxu0 0
        %2911 = vmatprep.subr.bf16.mxu0 0
        %2912 = vmatpush1.bf16.msra.mxu0 0
        %2913 = vmatprep.subr.bf16.mxu0 0
        %2914 = vmatpush1.bf16.msra.mxu0 0
        %2915 = vmatprep.subr.bf16.mxu0 0
        %2916 = vmatpush1.bf16.msra.mxu0 0
        %2917 = vmatprep.subr.bf16.mxu0 0
        %2918 = vmatpush1.bf16.msra.mxu0 0
        %2919 = vmatprep.subr.bf16.mxu0 %v2900
        %2920 = vmatpush1.bf16.msra.mxu0 %v2897
        %2921 = vmatprep.subr.bf16.mxu0 0
        %2922 = vmatpush2.bf16.msra.mxu0 0
        %2923 = vmatprep.subr.bf16.mxu0 0
        %2924 = vmatpush2.bf16.msra.mxu0 0
        %2925 = vmatprep.subr.bf16.mxu0 0
        %2926 = vmatpush2.bf16.msra.mxu0 0
        %2927 = vmatprep.subr.bf16.mxu0 0
        %2928 = vmatpush2.bf16.msra.mxu0 0
        %2929 = vmatprep.subr.bf16.mxu0 0
        %2930 = vmatpush2.bf16.msra.mxu0 0
        %2931 = vmatprep.subr.bf16.mxu0 0
        %2932 = vmatpush2.bf16.msra.mxu0 0
        %2933 = vmatprep.subr.bf16.mxu0 0
        %2934 = vmatpush2.bf16.msra.mxu0 0
        %2935 = vmatprep.subr.bf16.mxu0 0
        %2936 = vmatpush2.bf16.msra.mxu0 0
        %2937 = vmatprep.mubr.bf16.mxu0 0
        %2938 = vmatmul.mubr.bf16.gmra.mxu0 %v2894
        %v2939 = vpop.f32.mrf.mxu0
        %v2940 = vadd.f32 0.0, %v2939
        %v2941 = vpop.f32.mrf.mxu0
        %v2942 = vadd.f32 0.0, %v2941
        %v2943 = vpop.f32.mrf.mxu0
        %v2944 = vpop.f32.mrf.mxu0
        %2945 = vdwg.mxu0
        %2946 = vmatprep.subr.bf16.mxu0 0
        %2947 = vmatpush1.bf16.msra.mxu0 0
        %2948 = vmatprep.subr.bf16.mxu0 0
        %2949 = vmatpush1.bf16.msra.mxu0 0
        %2950 = vmatprep.subr.bf16.mxu0 0
        %2951 = vmatpush1.bf16.msra.mxu0 0
        %2952 = vmatprep.subr.bf16.mxu0 0
        %2953 = vmatpush1.bf16.msra.mxu0 0
        %2954 = vmatprep.subr.bf16.mxu0 0
        %2955 = vmatpush1.bf16.msra.mxu0 0
        %2956 = vmatprep.subr.bf16.mxu0 0
        %2957 = vmatpush1.bf16.msra.mxu0 0
        %2958 = vmatprep.subr.bf16.mxu0 0
        %2959 = vmatpush1.bf16.msra.mxu0 0
        %2960 = vmatprep.subr.bf16.mxu0 0
        %2961 = vmatpush1.bf16.msra.mxu0 %v2903
        %2962 = vmatprep.subr.bf16.mxu0 0
        %2963 = vmatpush2.bf16.msra.mxu0 0
        %2964 = vmatprep.subr.bf16.mxu0 0
        %2965 = vmatpush2.bf16.msra.mxu0 0
        %2966 = vmatprep.subr.bf16.mxu0 0
        %2967 = vmatpush2.bf16.msra.mxu0 0
        %2968 = vmatprep.subr.bf16.mxu0 0
        %2969 = vmatpush2.bf16.msra.mxu0 0
        %2970 = vmatprep.subr.bf16.mxu0 0
        %2971 = vmatpush2.bf16.msra.mxu0 0
        %2972 = vmatprep.subr.bf16.mxu0 0
        %2973 = vmatpush2.bf16.msra.mxu0 0
        %2974 = vmatprep.subr.bf16.mxu0 0
        %2975 = vmatpush2.bf16.msra.mxu0 0
        %2976 = vmatprep.subr.bf16.mxu0 0
        %2977 = vmatpush2.bf16.msra.mxu0 0
        %2978 = vmatprep.mubr.bf16.mxu0 0
        %2979 = vmatmul.mubr.bf16.gmra.mxu0 %v2894
        %v2980 = vpop.f32.mrf.mxu0
        %v2981 = vadd.f32 0.0, %v2980
        %v2982 = vpop.f32.mrf.mxu0
        %v2983 = vpop.f32.mrf.mxu0
        %v2984 = vpop.f32.mrf.mxu0
        %2985 = vdwg.mxu0
        %v2986 = vadd.f32 %v2876, %v2940
        %v2987 = vadd.f32 %v2877, %v2942
        %v2988 = vadd.f32 %v2878, %v2981
        %2989 = vrot.lane.b32.xlu0 %v2110, 64
        %v2990 = vpop.permute.xlu0 %2989
        %2991 = vrot.lane.b32.xlu0 %v363, 78
        %v2992 = vpop.permute.xlu0 %2991
        %2993 = vrot.lane.b32.xlu0 %v364, 78
        %v2994 = vpop.permute.xlu0 %2993
        %2995 = vrot.lane.b32.xlu0 %v365, 78
        %v2996 = vpop.permute.xlu0 %2995
        %2997 = vrot.lane.b32.xlu0 %v1780, 78
        %v2998 = vpop.permute.xlu0 %2997
        %vm2999 = vcmask 637952
        %v3000 = vsel %vm2999, %v2992, %v2994
        %v3001 = vsel %vm2999, %v2994, %v2996
        %v3002 = vsel %vm2999, %v2996, %v2998
        %v3004 = vsel %vm378, %v2990, 0
        %v3007 = vsel %vm382, %v3000, 0
        %v3010 = vsel %vm382, %v3001, 0
        %v3013 = vsel %vm382, %v3002, 0
        %3015 = vmatprep.subr.bf16.mxu0 0
        %3016 = vmatpush1.bf16.msra.mxu0 0
        %3017 = vmatprep.subr.bf16.mxu0 0
        %3018 = vmatpush1.bf16.msra.mxu0 0
        %3019 = vmatprep.subr.bf16.mxu0 0
        %3020 = vmatpush1.bf16.msra.mxu0 0
        %3021 = vmatprep.subr.bf16.mxu0 0
        %3022 = vmatpush1.bf16.msra.mxu0 0
        %3023 = vmatprep.subr.bf16.mxu0 0
        %3024 = vmatpush1.bf16.msra.mxu0 0
        %3025 = vmatprep.subr.bf16.mxu0 0
        %3026 = vmatpush1.bf16.msra.mxu0 0
        %3027 = vmatprep.subr.bf16.mxu0 0
        %3028 = vmatpush1.bf16.msra.mxu0 0
        %3029 = vmatprep.subr.bf16.mxu0 %v3010
        %3030 = vmatpush1.bf16.msra.mxu0 %v3007
        %3031 = vmatprep.subr.bf16.mxu0 0
        %3032 = vmatpush2.bf16.msra.mxu0 0
        %3033 = vmatprep.subr.bf16.mxu0 0
        %3034 = vmatpush2.bf16.msra.mxu0 0
        %3035 = vmatprep.subr.bf16.mxu0 0
        %3036 = vmatpush2.bf16.msra.mxu0 0
        %3037 = vmatprep.subr.bf16.mxu0 0
        %3038 = vmatpush2.bf16.msra.mxu0 0
        %3039 = vmatprep.subr.bf16.mxu0 0
        %3040 = vmatpush2.bf16.msra.mxu0 0
        %3041 = vmatprep.subr.bf16.mxu0 0
        %3042 = vmatpush2.bf16.msra.mxu0 0
        %3043 = vmatprep.subr.bf16.mxu0 0
        %3044 = vmatpush2.bf16.msra.mxu0 0
        %3045 = vmatprep.subr.bf16.mxu0 0
        %3046 = vmatpush2.bf16.msra.mxu0 0
        %3047 = vmatprep.mubr.bf16.mxu0 0
        %3048 = vmatmul.mubr.bf16.gmra.mxu0 %v3004
        %v3049 = vpop.f32.mrf.mxu0
        %v3050 = vadd.f32 0.0, %v3049
        %v3051 = vpop.f32.mrf.mxu0
        %v3052 = vadd.f32 0.0, %v3051
        %v3053 = vpop.f32.mrf.mxu0
        %v3054 = vpop.f32.mrf.mxu0
        %3055 = vdwg.mxu0
        %3056 = vmatprep.subr.bf16.mxu0 0
        %3057 = vmatpush1.bf16.msra.mxu0 0
        %3058 = vmatprep.subr.bf16.mxu0 0
        %3059 = vmatpush1.bf16.msra.mxu0 0
        %3060 = vmatprep.subr.bf16.mxu0 0
        %3061 = vmatpush1.bf16.msra.mxu0 0
        %3062 = vmatprep.subr.bf16.mxu0 0
        %3063 = vmatpush1.bf16.msra.mxu0 0
        %3064 = vmatprep.subr.bf16.mxu0 0
        %3065 = vmatpush1.bf16.msra.mxu0 0
        %3066 = vmatprep.subr.bf16.mxu0 0
        %3067 = vmatpush1.bf16.msra.mxu0 0
        %3068 = vmatprep.subr.bf16.mxu0 0
        %3069 = vmatpush1.bf16.msra.mxu0 0
        %3070 = vmatprep.subr.bf16.mxu0 0
        %3071 = vmatpush1.bf16.msra.mxu0 %v3013
        %3072 = vmatprep.subr.bf16.mxu0 0
        %3073 = vmatpush2.bf16.msra.mxu0 0
        %3074 = vmatprep.subr.bf16.mxu0 0
        %3075 = vmatpush2.bf16.msra.mxu0 0
        %3076 = vmatprep.subr.bf16.mxu0 0
        %3077 = vmatpush2.bf16.msra.mxu0 0
        %3078 = vmatprep.subr.bf16.mxu0 0
        %3079 = vmatpush2.bf16.msra.mxu0 0
        %3080 = vmatprep.subr.bf16.mxu0 0
        %3081 = vmatpush2.bf16.msra.mxu0 0
        %3082 = vmatprep.subr.bf16.mxu0 0
        %3083 = vmatpush2.bf16.msra.mxu0 0
        %3084 = vmatprep.subr.bf16.mxu0 0
        %3085 = vmatpush2.bf16.msra.mxu0 0
        %3086 = vmatprep.subr.bf16.mxu0 0
        %3087 = vmatpush2.bf16.msra.mxu0 0
        %3088 = vmatprep.mubr.bf16.mxu0 0
        %3089 = vmatmul.mubr.bf16.gmra.mxu0 %v3004
        %v3090 = vpop.f32.mrf.mxu0
        %v3091 = vadd.f32 0.0, %v3090
        %v3092 = vpop.f32.mrf.mxu0
        %v3093 = vpop.f32.mrf.mxu0
        %v3094 = vpop.f32.mrf.mxu0
        %3095 = vdwg.mxu0
        %v3096 = vadd.f32 %v2986, %v3050
        %v3097 = vadd.f32 %v2987, %v3052
        %v3098 = vadd.f32 %v2988, %v3091
        %v3099 = vld [vmem:[#allocation8] sm:$0xff]
        %3101 = vset.pattern.permute.xlu0 0
        %3102 = vperm.xlu0 %3101, %v3099
        %v3103 = vpop.permute.xlu0 %3102
        %v3105 = vadd.f32 %v3096, %v3103
        %v3106 = vadd.f32 %v3097, %v3103
        %v3107 = vadd.f32 %v3098, %v3103
        %vm3108 = vcmp.gt.f32.partialorder %v3105, 0.0
        %vm3109 = vcmp.gt.f32.partialorder %v3106, 0.0
        %vm3110 = vcmp.gt.f32.partialorder %v3107, 0.0
        %v3111 = vmul.f32 %v3105, 0.25
        %v3112 = vmul.f32 %v3106, 0.25
        %v3113 = vmul.f32 %v3107, 0.25
        %v3114 = vsel %vm3108, %v3105, %v3111
        %v3115 = vsel %vm3109, %v3106, %v3112
        %v3116 = vsel %vm3110, %v3107, %v3113
        %v3117 = vsel %vm347, 1, 0
        %v3118 = vsel %vm348, 1, 0
        %v3119 = vsel %vm349, 1, 0
        %vm3120 = vcmp.eq.s32.totalorder %v3117, 1
        %vm3121 = vcmp.eq.s32.totalorder %v3118, 1
        %vm3122 = vcmp.eq.s32.totalorder %v3119, 1
        %v3123 = vsel %vm3120, %v3114, 0.0
        %v3124 = vsel %vm3121, %v3115, 0.0
        %v3125 = vsel %vm3122, %v3116, 0.0
        %3126 = vst [vmem:[#allocation2] sm:$0xf] 0
        %3127 = vst [vmem:[#allocation2 + $0x10] sm:$0xf] 0
        %v3128 = vpack.c.bf16 %v3123, %v3123
        %v3129 = vpack.c.bf16 %v3124, %v3124
        %v3130 = vpack.c.bf16 %v3125, %v3125
        %v3134 = vunpack.c.l.b16 %v3128
        %v3135 = vunpack.c.l.b16 %v3129
        %v3136 = vunpack.c.l.b16 %v3130
        %v3137 = vpack.c.b16 %v3135, %v3134
        %v3138 = vpack.c.b16 %v3136, %v3136
        %3141 = vst [vmem:[#allocation2 + $0x4] sm:$0xff] %v3137
        %3142 = vst [vmem:[#allocation2 + $0xc] sm:$0xf] %v3138
        %v3143 = vld [vmem:[#allocation2] sm:$0xff]
        %v3144 = vld [vmem:[#allocation2 + $0x8] sm:$0xff]
        %v3145 = vld [vmem:[#allocation2 + $0x10] sm:$0xf]
        %v3146 = vld [vmem:[#allocation9] sm:$0xff]
        %v3148 = vunpack.c.l.b16 %v3146
        %v3149 = vpack.c.b16 %v3148, %v3148
        %3150 = vrot.lane.b32.xlu0 %v3149, 120
        %v3151 = vpop.permute.xlu0 %3150
        %v3154 = vunpack.c.l.b16 %v3143
        %v3155 = vunpack.c.h.b16 %v3143
        %v3156 = vunpack.c.l.b16 %v3144
        %v3157 = vunpack.c.h.b16 %v3144
        %v3158 = vpack.c.b16 %v3154, %v3154
        %v3159 = vpack.c.b16 %v3155, %v3155
        %v3160 = vpack.c.b16 %v3156, %v3156
        %v3161 = vpack.c.b16 %v3157, %v3157
        %3162 = vrot.lane.b32.xlu0 %v3158, 49
        %v3163 = vpop.permute.xlu0 %3162
        %3164 = vrot.lane.b32.xlu0 %v3159, 49
        %v3165 = vpop.permute.xlu0 %3164
        %3166 = vrot.lane.b32.xlu0 %v3160, 49
        %v3167 = vpop.permute.xlu0 %3166
        %3168 = vrot.lane.b32.xlu0 %v3161, 49
        %v3169 = vpop.permute.xlu0 %3168
        %v3170 = vsel %vm374, %v3163, %v3165
        %v3171 = vsel %vm374, %v3165, %v3167
        %v3172 = vsel %vm374, %v3167, %v3169
        %v3174 = vsel %vm378, %v3151, 0
        %v3177 = vsel %vm382, %v3170, 0
        %v3180 = vsel %vm382, %v3171, 0
        %v3183 = vsel %vm382, %v3172, 0
        %3185 = vmatprep.subr.bf16.mxu0 0
        %3186 = vmatpush1.bf16.msra.mxu0 0
        %3187 = vmatprep.subr.bf16.mxu0 0
        %3188 = vmatpush1.bf16.msra.mxu0 0
        %3189 = vmatprep.subr.bf16.mxu0 0
        %3190 = vmatpush1.bf16.msra.mxu0 0
        %3191 = vmatprep.subr.bf16.mxu0 0
        %3192 = vmatpush1.bf16.msra.mxu0 0
        %3193 = vmatprep.subr.bf16.mxu0 0
        %3194 = vmatpush1.bf16.msra.mxu0 0
        %3195 = vmatprep.subr.bf16.mxu0 0
        %3196 = vmatpush1.bf16.msra.mxu0 0
        %3197 = vmatprep.subr.bf16.mxu0 0
        %3198 = vmatpush1.bf16.msra.mxu0 0
        %3199 = vmatprep.subr.bf16.mxu0 %v3180
        %3200 = vmatpush1.bf16.msra.mxu0 %v3177
        %3201 = vmatprep.subr.bf16.mxu0 0
        %3202 = vmatpush2.bf16.msra.mxu0 0
        %3203 = vmatprep.subr.bf16.mxu0 0
        %3204 = vmatpush2.bf16.msra.mxu0 0
        %3205 = vmatprep.subr.bf16.mxu0 0
        %3206 = vmatpush2.bf16.msra.mxu0 0
        %3207 = vmatprep.subr.bf16.mxu0 0
        %3208 = vmatpush2.bf16.msra.mxu0 0
        %3209 = vmatprep.subr.bf16.mxu0 0
        %3210 = vmatpush2.bf16.msra.mxu0 0
        %3211 = vmatprep.subr.bf16.mxu0 0
        %3212 = vmatpush2.bf16.msra.mxu0 0
        %3213 = vmatprep.subr.bf16.mxu0 0
        %3214 = vmatpush2.bf16.msra.mxu0 0
        %3215 = vmatprep.subr.bf16.mxu0 0
        %3216 = vmatpush2.bf16.msra.mxu0 0
        %3217 = vmatprep.mubr.bf16.mxu0 0
        %3218 = vmatmul.mubr.bf16.gmra.mxu0 %v3174
        %v3219 = vpop.f32.mrf.mxu0
        %v3220 = vadd.f32 0.0, %v3219
        %v3221 = vpop.f32.mrf.mxu0
        %v3222 = vadd.f32 0.0, %v3221
        %v3223 = vpop.f32.mrf.mxu0
        %v3224 = vpop.f32.mrf.mxu0
        %3225 = vdwg.mxu0
        %3226 = vmatprep.subr.bf16.mxu0 0
        %3227 = vmatpush1.bf16.msra.mxu0 0
        %3228 = vmatprep.subr.bf16.mxu0 0
        %3229 = vmatpush1.bf16.msra.mxu0 0
        %3230 = vmatprep.subr.bf16.mxu0 0
        %3231 = vmatpush1.bf16.msra.mxu0 0
        %3232 = vmatprep.subr.bf16.mxu0 0
        %3233 = vmatpush1.bf16.msra.mxu0 0
        %3234 = vmatprep.subr.bf16.mxu0 0
        %3235 = vmatpush1.bf16.msra.mxu0 0
        %3236 = vmatprep.subr.bf16.mxu0 0
        %3237 = vmatpush1.bf16.msra.mxu0 0
        %3238 = vmatprep.subr.bf16.mxu0 0
        %3239 = vmatpush1.bf16.msra.mxu0 0
        %3240 = vmatprep.subr.bf16.mxu0 0
        %3241 = vmatpush1.bf16.msra.mxu0 %v3183
        %3242 = vmatprep.subr.bf16.mxu0 0
        %3243 = vmatpush2.bf16.msra.mxu0 0
        %3244 = vmatprep.subr.bf16.mxu0 0
        %3245 = vmatpush2.bf16.msra.mxu0 0
        %3246 = vmatprep.subr.bf16.mxu0 0
        %3247 = vmatpush2.bf16.msra.mxu0 0
        %3248 = vmatprep.subr.bf16.mxu0 0
        %3249 = vmatpush2.bf16.msra.mxu0 0
        %3250 = vmatprep.subr.bf16.mxu0 0
        %3251 = vmatpush2.bf16.msra.mxu0 0
        %3252 = vmatprep.subr.bf16.mxu0 0
        %3253 = vmatpush2.bf16.msra.mxu0 0
        %3254 = vmatprep.subr.bf16.mxu0 0
        %3255 = vmatpush2.bf16.msra.mxu0 0
        %3256 = vmatprep.subr.bf16.mxu0 0
        %3257 = vmatpush2.bf16.msra.mxu0 0
        %3258 = vmatprep.mubr.bf16.mxu0 0
        %3259 = vmatmul.mubr.bf16.gmra.mxu0 %v3174
        %v3260 = vpop.f32.mrf.mxu0
        %v3261 = vadd.f32 0.0, %v3260
        %v3262 = vpop.f32.mrf.mxu0
        %v3263 = vpop.f32.mrf.mxu0
        %v3264 = vpop.f32.mrf.mxu0
        %3265 = vdwg.mxu0
        %3266 = vrot.lane.b32.xlu0 %v3158, 50
        %v3267 = vpop.permute.xlu0 %3266
        %3268 = vrot.lane.b32.xlu0 %v3159, 50
        %v3269 = vpop.permute.xlu0 %3268
        %3270 = vrot.lane.b32.xlu0 %v3160, 50
        %v3271 = vpop.permute.xlu0 %3270
        %3272 = vrot.lane.b32.xlu0 %v3161, 50
        %v3273 = vpop.permute.xlu0 %3272
        %v3274 = vsel %vm481, %v3267, %v3269
        %v3275 = vsel %vm481, %v3269, %v3271
        %v3276 = vsel %vm481, %v3271, %v3273
        %v3278 = vsel %vm378, %v3146, 0
        %v3281 = vsel %vm382, %v3274, 0
        %v3284 = vsel %vm382, %v3275, 0
        %v3287 = vsel %vm382, %v3276, 0
        %3289 = vmatprep.subr.bf16.mxu0 0
        %3290 = vmatpush1.bf16.msra.mxu0 0
        %3291 = vmatprep.subr.bf16.mxu0 0
        %3292 = vmatpush1.bf16.msra.mxu0 0
        %3293 = vmatprep.subr.bf16.mxu0 0
        %3294 = vmatpush1.bf16.msra.mxu0 0
        %3295 = vmatprep.subr.bf16.mxu0 0
        %3296 = vmatpush1.bf16.msra.mxu0 0
        %3297 = vmatprep.subr.bf16.mxu0 0
        %3298 = vmatpush1.bf16.msra.mxu0 0
        %3299 = vmatprep.subr.bf16.mxu0 0
        %3300 = vmatpush1.bf16.msra.mxu0 0
        %3301 = vmatprep.subr.bf16.mxu0 0
        %3302 = vmatpush1.bf16.msra.mxu0 0
        %3303 = vmatprep.subr.bf16.mxu0 %v3284
        %3304 = vmatpush1.bf16.msra.mxu0 %v3281
        %3305 = vmatprep.subr.bf16.mxu0 0
        %3306 = vmatpush2.bf16.msra.mxu0 0
        %3307 = vmatprep.subr.bf16.mxu0 0
        %3308 = vmatpush2.bf16.msra.mxu0 0
        %3309 = vmatprep.subr.bf16.mxu0 0
        %3310 = vmatpush2.bf16.msra.mxu0 0
        %3311 = vmatprep.subr.bf16.mxu0 0
        %3312 = vmatpush2.bf16.msra.mxu0 0
        %3313 = vmatprep.subr.bf16.mxu0 0
        %3314 = vmatpush2.bf16.msra.mxu0 0
        %3315 = vmatprep.subr.bf16.mxu0 0
        %3316 = vmatpush2.bf16.msra.mxu0 0
        %3317 = vmatprep.subr.bf16.mxu0 0
        %3318 = vmatpush2.bf16.msra.mxu0 0
        %3319 = vmatprep.subr.bf16.mxu0 0
        %3320 = vmatpush2.bf16.msra.mxu0 0
        %3321 = vmatprep.mubr.bf16.mxu0 0
        %3322 = vmatmul.mubr.bf16.gmra.mxu0 %v3278
        %v3323 = vpop.f32.mrf.mxu0
        %v3324 = vadd.f32 %v3220, %v3323
        %v3325 = vpop.f32.mrf.mxu0
        %v3326 = vadd.f32 %v3222, %v3325
        %v3327 = vpop.f32.mrf.mxu0
        %v3328 = vpop.f32.mrf.mxu0
        %3329 = vdwg.mxu0
        %3330 = vmatprep.subr.bf16.mxu0 0
        %3331 = vmatpush1.bf16.msra.mxu0 0
        %3332 = vmatprep.subr.bf16.mxu0 0
        %3333 = vmatpush1.bf16.msra.mxu0 0
        %3334 = vmatprep.subr.bf16.mxu0 0
        %3335 = vmatpush1.bf16.msra.mxu0 0
        %3336 = vmatprep.subr.bf16.mxu0 0
        %3337 = vmatpush1.bf16.msra.mxu0 0
        %3338 = vmatprep.subr.bf16.mxu0 0
        %3339 = vmatpush1.bf16.msra.mxu0 0
        %3340 = vmatprep.subr.bf16.mxu0 0
        %3341 = vmatpush1.bf16.msra.mxu0 0
        %3342 = vmatprep.subr.bf16.mxu0 0
        %3343 = vmatpush1.bf16.msra.mxu0 0
        %3344 = vmatprep.subr.bf16.mxu0 0
        %3345 = vmatpush1.bf16.msra.mxu0 %v3287
        %3346 = vmatprep.subr.bf16.mxu0 0
        %3347 = vmatpush2.bf16.msra.mxu0 0
        %3348 = vmatprep.subr.bf16.mxu0 0
        %3349 = vmatpush2.bf16.msra.mxu0 0
        %3350 = vmatprep.subr.bf16.mxu0 0
        %3351 = vmatpush2.bf16.msra.mxu0 0
        %3352 = vmatprep.subr.bf16.mxu0 0
        %3353 = vmatpush2.bf16.msra.mxu0 0
        %3354 = vmatprep.subr.bf16.mxu0 0
        %3355 = vmatpush2.bf16.msra.mxu0 0
        %3356 = vmatprep.subr.bf16.mxu0 0
        %3357 = vmatpush2.bf16.msra.mxu0 0
        %3358 = vmatprep.subr.bf16.mxu0 0
        %3359 = vmatpush2.bf16.msra.mxu0 0
        %3360 = vmatprep.subr.bf16.mxu0 0
        %3361 = vmatpush2.bf16.msra.mxu0 0
        %3362 = vmatprep.mubr.bf16.mxu0 0
        %3363 = vmatmul.mubr.bf16.gmra.mxu0 %v3278
        %v3364 = vpop.f32.mrf.mxu0
        %v3365 = vadd.f32 %v3261, %v3364
        %v3366 = vpop.f32.mrf.mxu0
        %v3367 = vpop.f32.mrf.mxu0
        %v3368 = vpop.f32.mrf.mxu0
        %3369 = vdwg.mxu0
        %3370 = vrot.lane.b32.xlu0 %v3149, 112
        %v3371 = vpop.permute.xlu0 %3370
        %3372 = vrot.lane.b32.xlu0 %v3158, 48
        %v3373 = vpop.permute.xlu0 %3372
        %3374 = vrot.lane.b32.xlu0 %v3159, 48
        %v3375 = vpop.permute.xlu0 %3374
        %3376 = vrot.lane.b32.xlu0 %v3160, 48
        %v3377 = vpop.permute.xlu0 %3376
        %3378 = vrot.lane.b32.xlu0 %v3161, 48
        %v3379 = vpop.permute.xlu0 %3378
        %v3380 = vsel %vm588, %v3373, %v3375
        %v3381 = vsel %vm588, %v3375, %v3377
        %v3382 = vsel %vm588, %v3377, %v3379
        %v3384 = vsel %vm378, %v3371, 0
        %v3387 = vsel %vm382, %v3380, 0
        %v3390 = vsel %vm382, %v3381, 0
        %v3393 = vsel %vm382, %v3382, 0
        %3395 = vmatprep.subr.bf16.mxu0 0
        %3396 = vmatpush1.bf16.msra.mxu0 0
        %3397 = vmatprep.subr.bf16.mxu0 0
        %3398 = vmatpush1.bf16.msra.mxu0 0
        %3399 = vmatprep.subr.bf16.mxu0 0
        %3400 = vmatpush1.bf16.msra.mxu0 0
        %3401 = vmatprep.subr.bf16.mxu0 0
        %3402 = vmatpush1.bf16.msra.mxu0 0
        %3403 = vmatprep.subr.bf16.mxu0 0
        %3404 = vmatpush1.bf16.msra.mxu0 0
        %3405 = vmatprep.subr.bf16.mxu0 0
        %3406 = vmatpush1.bf16.msra.mxu0 0
        %3407 = vmatprep.subr.bf16.mxu0 0
        %3408 = vmatpush1.bf16.msra.mxu0 0
        %3409 = vmatprep.subr.bf16.mxu0 %v3390
        %3410 = vmatpush1.bf16.msra.mxu0 %v3387
        %3411 = vmatprep.subr.bf16.mxu0 0
        %3412 = vmatpush2.bf16.msra.mxu0 0
        %3413 = vmatprep.subr.bf16.mxu0 0
        %3414 = vmatpush2.bf16.msra.mxu0 0
        %3415 = vmatprep.subr.bf16.mxu0 0
        %3416 = vmatpush2.bf16.msra.mxu0 0
        %3417 = vmatprep.subr.bf16.mxu0 0
        %3418 = vmatpush2.bf16.msra.mxu0 0
        %3419 = vmatprep.subr.bf16.mxu0 0
        %3420 = vmatpush2.bf16.msra.mxu0 0
        %3421 = vmatprep.subr.bf16.mxu0 0
        %3422 = vmatpush2.bf16.msra.mxu0 0
        %3423 = vmatprep.subr.bf16.mxu0 0
        %3424 = vmatpush2.bf16.msra.mxu0 0
        %3425 = vmatprep.subr.bf16.mxu0 0
        %3426 = vmatpush2.bf16.msra.mxu0 0
        %3427 = vmatprep.mubr.bf16.mxu0 0
        %3428 = vmatmul.mubr.bf16.gmra.mxu0 %v3384
        %v3429 = vpop.f32.mrf.mxu0
        %v3430 = vadd.f32 0.0, %v3429
        %v3431 = vpop.f32.mrf.mxu0
        %v3432 = vadd.f32 0.0, %v3431
        %v3433 = vpop.f32.mrf.mxu0
        %v3434 = vpop.f32.mrf.mxu0
        %3435 = vdwg.mxu0
        %3436 = vmatprep.subr.bf16.mxu0 0
        %3437 = vmatpush1.bf16.msra.mxu0 0
        %3438 = vmatprep.subr.bf16.mxu0 0
        %3439 = vmatpush1.bf16.msra.mxu0 0
        %3440 = vmatprep.subr.bf16.mxu0 0
        %3441 = vmatpush1.bf16.msra.mxu0 0
        %3442 = vmatprep.subr.bf16.mxu0 0
        %3443 = vmatpush1.bf16.msra.mxu0 0
        %3444 = vmatprep.subr.bf16.mxu0 0
        %3445 = vmatpush1.bf16.msra.mxu0 0
        %3446 = vmatprep.subr.bf16.mxu0 0
        %3447 = vmatpush1.bf16.msra.mxu0 0
        %3448 = vmatprep.subr.bf16.mxu0 0
        %3449 = vmatpush1.bf16.msra.mxu0 0
        %3450 = vmatprep.subr.bf16.mxu0 0
        %3451 = vmatpush1.bf16.msra.mxu0 %v3393
        %3452 = vmatprep.subr.bf16.mxu0 0
        %3453 = vmatpush2.bf16.msra.mxu0 0
        %3454 = vmatprep.subr.bf16.mxu0 0
        %3455 = vmatpush2.bf16.msra.mxu0 0
        %3456 = vmatprep.subr.bf16.mxu0 0
        %3457 = vmatpush2.bf16.msra.mxu0 0
        %3458 = vmatprep.subr.bf16.mxu0 0
        %3459 = vmatpush2.bf16.msra.mxu0 0
        %3460 = vmatprep.subr.bf16.mxu0 0
        %3461 = vmatpush2.bf16.msra.mxu0 0
        %3462 = vmatprep.subr.bf16.mxu0 0
        %3463 = vmatpush2.bf16.msra.mxu0 0
        %3464 = vmatprep.subr.bf16.mxu0 0
        %3465 = vmatpush2.bf16.msra.mxu0 0
        %3466 = vmatprep.subr.bf16.mxu0 0
        %3467 = vmatpush2.bf16.msra.mxu0 0
        %3468 = vmatprep.mubr.bf16.mxu0 0
        %3469 = vmatmul.mubr.bf16.gmra.mxu0 %v3384
        %v3470 = vpop.f32.mrf.mxu0
        %v3471 = vadd.f32 0.0, %v3470
        %v3472 = vpop.f32.mrf.mxu0
        %v3473 = vpop.f32.mrf.mxu0
        %v3474 = vpop.f32.mrf.mxu0
        %3475 = vdwg.mxu0
        %v3476 = vadd.f32 %v3324, %v3430
        %v3477 = vadd.f32 %v3326, %v3432
        %v3478 = vadd.f32 %v3365, %v3471
        %3479 = vrot.lane.b32.xlu0 %v3149, 104
        %v3480 = vpop.permute.xlu0 %3479
        %3481 = vrot.lane.b32.xlu0 %v3158, 47
        %v3482 = vpop.permute.xlu0 %3481
        %3483 = vrot.lane.b32.xlu0 %v3159, 47
        %v3484 = vpop.permute.xlu0 %3483
        %3485 = vrot.lane.b32.xlu0 %v3160, 47
        %v3486 = vpop.permute.xlu0 %3485
        %3487 = vrot.lane.b32.xlu0 %v3161, 47
        %v3488 = vpop.permute.xlu0 %3487
        %v3489 = vsel %vm698, %v3482, %v3484
        %v3490 = vsel %vm698, %v3484, %v3486
        %v3491 = vsel %vm698, %v3486, %v3488
        %v3493 = vsel %vm378, %v3480, 0
        %v3496 = vsel %vm382, %v3489, 0
        %v3499 = vsel %vm382, %v3490, 0
        %v3502 = vsel %vm382, %v3491, 0
        %3504 = vmatprep.subr.bf16.mxu0 0
        %3505 = vmatpush1.bf16.msra.mxu0 0
        %3506 = vmatprep.subr.bf16.mxu0 0
        %3507 = vmatpush1.bf16.msra.mxu0 0
        %3508 = vmatprep.subr.bf16.mxu0 0
        %3509 = vmatpush1.bf16.msra.mxu0 0
        %3510 = vmatprep.subr.bf16.mxu0 0
        %3511 = vmatpush1.bf16.msra.mxu0 0
        %3512 = vmatprep.subr.bf16.mxu0 0
        %3513 = vmatpush1.bf16.msra.mxu0 0
        %3514 = vmatprep.subr.bf16.mxu0 0
        %3515 = vmatpush1.bf16.msra.mxu0 0
        %3516 = vmatprep.subr.bf16.mxu0 0
        %3517 = vmatpush1.bf16.msra.mxu0 0
        %3518 = vmatprep.subr.bf16.mxu0 %v3499
        %3519 = vmatpush1.bf16.msra.mxu0 %v3496
        %3520 = vmatprep.subr.bf16.mxu0 0
        %3521 = vmatpush2.bf16.msra.mxu0 0
        %3522 = vmatprep.subr.bf16.mxu0 0
        %3523 = vmatpush2.bf16.msra.mxu0 0
        %3524 = vmatprep.subr.bf16.mxu0 0
        %3525 = vmatpush2.bf16.msra.mxu0 0
        %3526 = vmatprep.subr.bf16.mxu0 0
        %3527 = vmatpush2.bf16.msra.mxu0 0
        %3528 = vmatprep.subr.bf16.mxu0 0
        %3529 = vmatpush2.bf16.msra.mxu0 0
        %3530 = vmatprep.subr.bf16.mxu0 0
        %3531 = vmatpush2.bf16.msra.mxu0 0
        %3532 = vmatprep.subr.bf16.mxu0 0
        %3533 = vmatpush2.bf16.msra.mxu0 0
        %3534 = vmatprep.subr.bf16.mxu0 0
        %3535 = vmatpush2.bf16.msra.mxu0 0
        %3536 = vmatprep.mubr.bf16.mxu0 0
        %3537 = vmatmul.mubr.bf16.gmra.mxu0 %v3493
        %v3538 = vpop.f32.mrf.mxu0
        %v3539 = vadd.f32 0.0, %v3538
        %v3540 = vpop.f32.mrf.mxu0
        %v3541 = vadd.f32 0.0, %v3540
        %v3542 = vpop.f32.mrf.mxu0
        %v3543 = vpop.f32.mrf.mxu0
        %3544 = vdwg.mxu0
        %3545 = vmatprep.subr.bf16.mxu0 0
        %3546 = vmatpush1.bf16.msra.mxu0 0
        %3547 = vmatprep.subr.bf16.mxu0 0
        %3548 = vmatpush1.bf16.msra.mxu0 0
        %3549 = vmatprep.subr.bf16.mxu0 0
        %3550 = vmatpush1.bf16.msra.mxu0 0
        %3551 = vmatprep.subr.bf16.mxu0 0
        %3552 = vmatpush1.bf16.msra.mxu0 0
        %3553 = vmatprep.subr.bf16.mxu0 0
        %3554 = vmatpush1.bf16.msra.mxu0 0
        %3555 = vmatprep.subr.bf16.mxu0 0
        %3556 = vmatpush1.bf16.msra.mxu0 0
        %3557 = vmatprep.subr.bf16.mxu0 0
        %3558 = vmatpush1.bf16.msra.mxu0 0
        %3559 = vmatprep.subr.bf16.mxu0 0
        %3560 = vmatpush1.bf16.msra.mxu0 %v3502
        %3561 = vmatprep.subr.bf16.mxu0 0
        %3562 = vmatpush2.bf16.msra.mxu0 0
        %3563 = vmatprep.subr.bf16.mxu0 0
        %3564 = vmatpush2.bf16.msra.mxu0 0
        %3565 = vmatprep.subr.bf16.mxu0 0
        %3566 = vmatpush2.bf16.msra.mxu0 0
        %3567 = vmatprep.subr.bf16.mxu0 0
        %3568 = vmatpush2.bf16.msra.mxu0 0
        %3569 = vmatprep.subr.bf16.mxu0 0
        %3570 = vmatpush2.bf16.msra.mxu0 0
        %3571 = vmatprep.subr.bf16.mxu0 0
        %3572 = vmatpush2.bf16.msra.mxu0 0
        %3573 = vmatprep.subr.bf16.mxu0 0
        %3574 = vmatpush2.bf16.msra.mxu0 0
        %3575 = vmatprep.subr.bf16.mxu0 0
        %3576 = vmatpush2.bf16.msra.mxu0 0
        %3577 = vmatprep.mubr.bf16.mxu0 0
        %3578 = vmatmul.mubr.bf16.gmra.mxu0 %v3493
        %v3579 = vpop.f32.mrf.mxu0
        %v3580 = vadd.f32 0.0, %v3579
        %v3581 = vpop.f32.mrf.mxu0
        %v3582 = vpop.f32.mrf.mxu0
        %v3583 = vpop.f32.mrf.mxu0
        %3584 = vdwg.mxu0
        %v3585 = vadd.f32 %v3476, %v3539
        %v3586 = vadd.f32 %v3477, %v3541
        %v3587 = vadd.f32 %v3478, %v3580
        %3588 = vrot.lane.b32.xlu0 %v3149, 96
        %v3589 = vpop.permute.xlu0 %3588
        %3590 = vrot.lane.b32.xlu0 %v3158, 46
        %v3591 = vpop.permute.xlu0 %3590
        %3592 = vrot.lane.b32.xlu0 %v3159, 46
        %v3593 = vpop.permute.xlu0 %3592
        %3594 = vrot.lane.b32.xlu0 %v3160, 46
        %v3595 = vpop.permute.xlu0 %3594
        %3596 = vrot.lane.b32.xlu0 %v3161, 46
        %v3597 = vpop.permute.xlu0 %3596
        %v3598 = vsel %vm808, %v3591, %v3593
        %v3599 = vsel %vm808, %v3593, %v3595
        %v3600 = vsel %vm808, %v3595, %v3597
        %v3602 = vsel %vm378, %v3589, 0
        %v3605 = vsel %vm382, %v3598, 0
        %v3608 = vsel %vm382, %v3599, 0
        %v3611 = vsel %vm382, %v3600, 0
        %3613 = vmatprep.subr.bf16.mxu0 0
        %3614 = vmatpush1.bf16.msra.mxu0 0
        %3615 = vmatprep.subr.bf16.mxu0 0
        %3616 = vmatpush1.bf16.msra.mxu0 0
        %3617 = vmatprep.subr.bf16.mxu0 0
        %3618 = vmatpush1.bf16.msra.mxu0 0
        %3619 = vmatprep.subr.bf16.mxu0 0
        %3620 = vmatpush1.bf16.msra.mxu0 0
        %3621 = vmatprep.subr.bf16.mxu0 0
        %3622 = vmatpush1.bf16.msra.mxu0 0
        %3623 = vmatprep.subr.bf16.mxu0 0
        %3624 = vmatpush1.bf16.msra.mxu0 0
        %3625 = vmatprep.subr.bf16.mxu0 0
        %3626 = vmatpush1.bf16.msra.mxu0 0
        %3627 = vmatprep.subr.bf16.mxu0 %v3608
        %3628 = vmatpush1.bf16.msra.mxu0 %v3605
        %3629 = vmatprep.subr.bf16.mxu0 0
        %3630 = vmatpush2.bf16.msra.mxu0 0
        %3631 = vmatprep.subr.bf16.mxu0 0
        %3632 = vmatpush2.bf16.msra.mxu0 0
        %3633 = vmatprep.subr.bf16.mxu0 0
        %3634 = vmatpush2.bf16.msra.mxu0 0
        %3635 = vmatprep.subr.bf16.mxu0 0
        %3636 = vmatpush2.bf16.msra.mxu0 0
        %3637 = vmatprep.subr.bf16.mxu0 0
        %3638 = vmatpush2.bf16.msra.mxu0 0
        %3639 = vmatprep.subr.bf16.mxu0 0
        %3640 = vmatpush2.bf16.msra.mxu0 0
        %3641 = vmatprep.subr.bf16.mxu0 0
        %3642 = vmatpush2.bf16.msra.mxu0 0
        %3643 = vmatprep.subr.bf16.mxu0 0
        %3644 = vmatpush2.bf16.msra.mxu0 0
        %3645 = vmatprep.mubr.bf16.mxu0 0
        %3646 = vmatmul.mubr.bf16.gmra.mxu0 %v3602
        %v3647 = vpop.f32.mrf.mxu0
        %v3648 = vadd.f32 0.0, %v3647
        %v3649 = vpop.f32.mrf.mxu0
        %v3650 = vadd.f32 0.0, %v3649
        %v3651 = vpop.f32.mrf.mxu0
        %v3652 = vpop.f32.mrf.mxu0
        %3653 = vdwg.mxu0
        %3654 = vmatprep.subr.bf16.mxu0 0
        %3655 = vmatpush1.bf16.msra.mxu0 0
        %3656 = vmatprep.subr.bf16.mxu0 0
        %3657 = vmatpush1.bf16.msra.mxu0 0
        %3658 = vmatprep.subr.bf16.mxu0 0
        %3659 = vmatpush1.bf16.msra.mxu0 0
        %3660 = vmatprep.subr.bf16.mxu0 0
        %3661 = vmatpush1.bf16.msra.mxu0 0
        %3662 = vmatprep.subr.bf16.mxu0 0
        %3663 = vmatpush1.bf16.msra.mxu0 0
        %3664 = vmatprep.subr.bf16.mxu0 0
        %3665 = vmatpush1.bf16.msra.mxu0 0
        %3666 = vmatprep.subr.bf16.mxu0 0
        %3667 = vmatpush1.bf16.msra.mxu0 0
        %3668 = vmatprep.subr.bf16.mxu0 0
        %3669 = vmatpush1.bf16.msra.mxu0 %v3611
        %3670 = vmatprep.subr.bf16.mxu0 0
        %3671 = vmatpush2.bf16.msra.mxu0 0
        %3672 = vmatprep.subr.bf16.mxu0 0
        %3673 = vmatpush2.bf16.msra.mxu0 0
        %3674 = vmatprep.subr.bf16.mxu0 0
        %3675 = vmatpush2.bf16.msra.mxu0 0
        %3676 = vmatprep.subr.bf16.mxu0 0
        %3677 = vmatpush2.bf16.msra.mxu0 0
        %3678 = vmatprep.subr.bf16.mxu0 0
        %3679 = vmatpush2.bf16.msra.mxu0 0
        %3680 = vmatprep.subr.bf16.mxu0 0
        %3681 = vmatpush2.bf16.msra.mxu0 0
        %3682 = vmatprep.subr.bf16.mxu0 0
        %3683 = vmatpush2.bf16.msra.mxu0 0
        %3684 = vmatprep.subr.bf16.mxu0 0
        %3685 = vmatpush2.bf16.msra.mxu0 0
        %3686 = vmatprep.mubr.bf16.mxu0 0
        %3687 = vmatmul.mubr.bf16.gmra.mxu0 %v3602
        %v3688 = vpop.f32.mrf.mxu0
        %v3689 = vadd.f32 0.0, %v3688
        %v3690 = vpop.f32.mrf.mxu0
        %v3691 = vpop.f32.mrf.mxu0
        %v3692 = vpop.f32.mrf.mxu0
        %3693 = vdwg.mxu0
        %v3694 = vadd.f32 %v3585, %v3648
        %v3695 = vadd.f32 %v3586, %v3650
        %v3696 = vadd.f32 %v3587, %v3689
        %3697 = vrot.lane.b32.xlu0 %v3149, 88
        %v3698 = vpop.permute.xlu0 %3697
        %3699 = vrot.lane.b32.xlu0 %v3158, 26
        %v3700 = vpop.permute.xlu0 %3699
        %3701 = vrot.lane.b32.xlu0 %v3159, 26
        %v3702 = vpop.permute.xlu0 %3701
        %3703 = vrot.lane.b32.xlu0 %v3160, 26
        %v3704 = vpop.permute.xlu0 %3703
        %3705 = vrot.lane.b32.xlu0 %v3161, 26
        %v3706 = vpop.permute.xlu0 %3705
        %v3707 = vsel %vm918, %v3700, %v3702
        %v3708 = vsel %vm918, %v3702, %v3704
        %v3709 = vsel %vm918, %v3704, %v3706
        %v3711 = vsel %vm378, %v3698, 0
        %v3714 = vsel %vm382, %v3707, 0
        %v3717 = vsel %vm382, %v3708, 0
        %v3720 = vsel %vm382, %v3709, 0
        %3722 = vmatprep.subr.bf16.mxu0 0
        %3723 = vmatpush1.bf16.msra.mxu0 0
        %3724 = vmatprep.subr.bf16.mxu0 0
        %3725 = vmatpush1.bf16.msra.mxu0 0
        %3726 = vmatprep.subr.bf16.mxu0 0
        %3727 = vmatpush1.bf16.msra.mxu0 0
        %3728 = vmatprep.subr.bf16.mxu0 0
        %3729 = vmatpush1.bf16.msra.mxu0 0
        %3730 = vmatprep.subr.bf16.mxu0 0
        %3731 = vmatpush1.bf16.msra.mxu0 0
        %3732 = vmatprep.subr.bf16.mxu0 0
        %3733 = vmatpush1.bf16.msra.mxu0 0
        %3734 = vmatprep.subr.bf16.mxu0 0
        %3735 = vmatpush1.bf16.msra.mxu0 0
        %3736 = vmatprep.subr.bf16.mxu0 %v3717
        %3737 = vmatpush1.bf16.msra.mxu0 %v3714
        %3738 = vmatprep.subr.bf16.mxu0 0
        %3739 = vmatpush2.bf16.msra.mxu0 0
        %3740 = vmatprep.subr.bf16.mxu0 0
        %3741 = vmatpush2.bf16.msra.mxu0 0
        %3742 = vmatprep.subr.bf16.mxu0 0
        %3743 = vmatpush2.bf16.msra.mxu0 0
        %3744 = vmatprep.subr.bf16.mxu0 0
        %3745 = vmatpush2.bf16.msra.mxu0 0
        %3746 = vmatprep.subr.bf16.mxu0 0
        %3747 = vmatpush2.bf16.msra.mxu0 0
        %3748 = vmatprep.subr.bf16.mxu0 0
        %3749 = vmatpush2.bf16.msra.mxu0 0
        %3750 = vmatprep.subr.bf16.mxu0 0
        %3751 = vmatpush2.bf16.msra.mxu0 0
        %3752 = vmatprep.subr.bf16.mxu0 0
        %3753 = vmatpush2.bf16.msra.mxu0 0
        %3754 = vmatprep.mubr.bf16.mxu0 0
        %3755 = vmatmul.mubr.bf16.gmra.mxu0 %v3711
        %v3756 = vpop.f32.mrf.mxu0
        %v3757 = vadd.f32 0.0, %v3756
        %v3758 = vpop.f32.mrf.mxu0
        %v3759 = vadd.f32 0.0, %v3758
        %v3760 = vpop.f32.mrf.mxu0
        %v3761 = vpop.f32.mrf.mxu0
        %3762 = vdwg.mxu0
        %3763 = vmatprep.subr.bf16.mxu0 0
        %3764 = vmatpush1.bf16.msra.mxu0 0
        %3765 = vmatprep.subr.bf16.mxu0 0
        %3766 = vmatpush1.bf16.msra.mxu0 0
        %3767 = vmatprep.subr.bf16.mxu0 0
        %3768 = vmatpush1.bf16.msra.mxu0 0
        %3769 = vmatprep.subr.bf16.mxu0 0
        %3770 = vmatpush1.bf16.msra.mxu0 0
        %3771 = vmatprep.subr.bf16.mxu0 0
        %3772 = vmatpush1.bf16.msra.mxu0 0
        %3773 = vmatprep.subr.bf16.mxu0 0
        %3774 = vmatpush1.bf16.msra.mxu0 0
        %3775 = vmatprep.subr.bf16.mxu0 0
        %3776 = vmatpush1.bf16.msra.mxu0 0
        %3777 = vmatprep.subr.bf16.mxu0 0
        %3778 = vmatpush1.bf16.msra.mxu0 %v3720
        %3779 = vmatprep.subr.bf16.mxu0 0
        %3780 = vmatpush2.bf16.msra.mxu0 0
        %3781 = vmatprep.subr.bf16.mxu0 0
        %3782 = vmatpush2.bf16.msra.mxu0 0
        %3783 = vmatprep.subr.bf16.mxu0 0
        %3784 = vmatpush2.bf16.msra.mxu0 0
        %3785 = vmatprep.subr.bf16.mxu0 0
        %3786 = vmatpush2.bf16.msra.mxu0 0
        %3787 = vmatprep.subr.bf16.mxu0 0
        %3788 = vmatpush2.bf16.msra.mxu0 0
        %3789 = vmatprep.subr.bf16.mxu0 0
        %3790 = vmatpush2.bf16.msra.mxu0 0
        %3791 = vmatprep.subr.bf16.mxu0 0
        %3792 = vmatpush2.bf16.msra.mxu0 0
        %3793 = vmatprep.subr.bf16.mxu0 0
        %3794 = vmatpush2.bf16.msra.mxu0 0
        %3795 = vmatprep.mubr.bf16.mxu0 0
        %3796 = vmatmul.mubr.bf16.gmra.mxu0 %v3711
        %v3797 = vpop.f32.mrf.mxu0
        %v3798 = vadd.f32 0.0, %v3797
        %v3799 = vpop.f32.mrf.mxu0
        %v3800 = vpop.f32.mrf.mxu0
        %v3801 = vpop.f32.mrf.mxu0
        %3802 = vdwg.mxu0
        %v3803 = vadd.f32 %v3694, %v3757
        %v3804 = vadd.f32 %v3695, %v3759
        %v3805 = vadd.f32 %v3696, %v3798
        %3806 = vrot.lane.b32.xlu0 %v3149, 80
        %v3807 = vpop.permute.xlu0 %3806
        %3808 = vrot.lane.b32.xlu0 %v3158, 25
        %v3809 = vpop.permute.xlu0 %3808
        %3810 = vrot.lane.b32.xlu0 %v3159, 25
        %v3811 = vpop.permute.xlu0 %3810
        %3812 = vrot.lane.b32.xlu0 %v3160, 25
        %v3813 = vpop.permute.xlu0 %3812
        %3814 = vrot.lane.b32.xlu0 %v3161, 25
        %v3815 = vpop.permute.xlu0 %3814
        %v3816 = vsel %vm1028, %v3809, %v3811
        %v3817 = vsel %vm1028, %v3811, %v3813
        %v3818 = vsel %vm1028, %v3813, %v3815
        %v3820 = vsel %vm378, %v3807, 0
        %v3823 = vsel %vm382, %v3816, 0
        %v3826 = vsel %vm382, %v3817, 0
        %v3829 = vsel %vm382, %v3818, 0
        %3831 = vmatprep.subr.bf16.mxu0 0
        %3832 = vmatpush1.bf16.msra.mxu0 0
        %3833 = vmatprep.subr.bf16.mxu0 0
        %3834 = vmatpush1.bf16.msra.mxu0 0
        %3835 = vmatprep.subr.bf16.mxu0 0
        %3836 = vmatpush1.bf16.msra.mxu0 0
        %3837 = vmatprep.subr.bf16.mxu0 0
        %3838 = vmatpush1.bf16.msra.mxu0 0
        %3839 = vmatprep.subr.bf16.mxu0 0
        %3840 = vmatpush1.bf16.msra.mxu0 0
        %3841 = vmatprep.subr.bf16.mxu0 0
        %3842 = vmatpush1.bf16.msra.mxu0 0
        %3843 = vmatprep.subr.bf16.mxu0 0
        %3844 = vmatpush1.bf16.msra.mxu0 0
        %3845 = vmatprep.subr.bf16.mxu0 %v3826
        %3846 = vmatpush1.bf16.msra.mxu0 %v3823
        %3847 = vmatprep.subr.bf16.mxu0 0
        %3848 = vmatpush2.bf16.msra.mxu0 0
        %3849 = vmatprep.subr.bf16.mxu0 0
        %3850 = vmatpush2.bf16.msra.mxu0 0
        %3851 = vmatprep.subr.bf16.mxu0 0
        %3852 = vmatpush2.bf16.msra.mxu0 0
        %3853 = vmatprep.subr.bf16.mxu0 0
        %3854 = vmatpush2.bf16.msra.mxu0 0
        %3855 = vmatprep.subr.bf16.mxu0 0
        %3856 = vmatpush2.bf16.msra.mxu0 0
        %3857 = vmatprep.subr.bf16.mxu0 0
        %3858 = vmatpush2.bf16.msra.mxu0 0
        %3859 = vmatprep.subr.bf16.mxu0 0
        %3860 = vmatpush2.bf16.msra.mxu0 0
        %3861 = vmatprep.subr.bf16.mxu0 0
        %3862 = vmatpush2.bf16.msra.mxu0 0
        %3863 = vmatprep.mubr.bf16.mxu0 0
        %3864 = vmatmul.mubr.bf16.gmra.mxu0 %v3820
        %v3865 = vpop.f32.mrf.mxu0
        %v3866 = vadd.f32 0.0, %v3865
        %v3867 = vpop.f32.mrf.mxu0
        %v3868 = vadd.f32 0.0, %v3867
        %v3869 = vpop.f32.mrf.mxu0
        %v3870 = vpop.f32.mrf.mxu0
        %3871 = vdwg.mxu0
        %3872 = vmatprep.subr.bf16.mxu0 0
        %3873 = vmatpush1.bf16.msra.mxu0 0
        %3874 = vmatprep.subr.bf16.mxu0 0
        %3875 = vmatpush1.bf16.msra.mxu0 0
        %3876 = vmatprep.subr.bf16.mxu0 0
        %3877 = vmatpush1.bf16.msra.mxu0 0
        %3878 = vmatprep.subr.bf16.mxu0 0
        %3879 = vmatpush1.bf16.msra.mxu0 0
        %3880 = vmatprep.subr.bf16.mxu0 0
        %3881 = vmatpush1.bf16.msra.mxu0 0
        %3882 = vmatprep.subr.bf16.mxu0 0
        %3883 = vmatpush1.bf16.msra.mxu0 0
        %3884 = vmatprep.subr.bf16.mxu0 0
        %3885 = vmatpush1.bf16.msra.mxu0 0
        %3886 = vmatprep.subr.bf16.mxu0 0
        %3887 = vmatpush1.bf16.msra.mxu0 %v3829
        %3888 = vmatprep.subr.bf16.mxu0 0
        %3889 = vmatpush2.bf16.msra.mxu0 0
        %3890 = vmatprep.subr.bf16.mxu0 0
        %3891 = vmatpush2.bf16.msra.mxu0 0
        %3892 = vmatprep.subr.bf16.mxu0 0
        %3893 = vmatpush2.bf16.msra.mxu0 0
        %3894 = vmatprep.subr.bf16.mxu0 0
        %3895 = vmatpush2.bf16.msra.mxu0 0
        %3896 = vmatprep.subr.bf16.mxu0 0
        %3897 = vmatpush2.bf16.msra.mxu0 0
        %3898 = vmatprep.subr.bf16.mxu0 0
        %3899 = vmatpush2.bf16.msra.mxu0 0
        %3900 = vmatprep.subr.bf16.mxu0 0
        %3901 = vmatpush2.bf16.msra.mxu0 0
        %3902 = vmatprep.subr.bf16.mxu0 0
        %3903 = vmatpush2.bf16.msra.mxu0 0
        %3904 = vmatprep.mubr.bf16.mxu0 0
        %3905 = vmatmul.mubr.bf16.gmra.mxu0 %v3820
        %v3906 = vpop.f32.mrf.mxu0
        %v3907 = vadd.f32 0.0, %v3906
        %v3908 = vpop.f32.mrf.mxu0
        %v3909 = vpop.f32.mrf.mxu0
        %v3910 = vpop.f32.mrf.mxu0
        %3911 = vdwg.mxu0
        %v3912 = vadd.f32 %v3803, %v3866
        %v3913 = vadd.f32 %v3804, %v3868
        %v3914 = vadd.f32 %v3805, %v3907
        %3915 = vrot.lane.b32.xlu0 %v3149, 72
        %v3916 = vpop.permute.xlu0 %3915
        %3917 = vrot.lane.b32.xlu0 %v3158, 24
        %v3918 = vpop.permute.xlu0 %3917
        %3919 = vrot.lane.b32.xlu0 %v3159, 24
        %v3920 = vpop.permute.xlu0 %3919
        %3921 = vrot.lane.b32.xlu0 %v3160, 24
        %v3922 = vpop.permute.xlu0 %3921
        %3923 = vrot.lane.b32.xlu0 %v3161, 24
        %v3924 = vpop.permute.xlu0 %3923
        %v3925 = vsel %vm1138, %v3918, %v3920
        %v3926 = vsel %vm1138, %v3920, %v3922
        %v3927 = vsel %vm1138, %v3922, %v3924
        %v3929 = vsel %vm378, %v3916, 0
        %v3932 = vsel %vm382, %v3925, 0
        %v3935 = vsel %vm382, %v3926, 0
        %v3938 = vsel %vm382, %v3927, 0
        %3940 = vmatprep.subr.bf16.mxu0 0
        %3941 = vmatpush1.bf16.msra.mxu0 0
        %3942 = vmatprep.subr.bf16.mxu0 0
        %3943 = vmatpush1.bf16.msra.mxu0 0
        %3944 = vmatprep.subr.bf16.mxu0 0
        %3945 = vmatpush1.bf16.msra.mxu0 0
        %3946 = vmatprep.subr.bf16.mxu0 0
        %3947 = vmatpush1.bf16.msra.mxu0 0
        %3948 = vmatprep.subr.bf16.mxu0 0
        %3949 = vmatpush1.bf16.msra.mxu0 0
        %3950 = vmatprep.subr.bf16.mxu0 0
        %3951 = vmatpush1.bf16.msra.mxu0 0
        %3952 = vmatprep.subr.bf16.mxu0 0
        %3953 = vmatpush1.bf16.msra.mxu0 0
        %3954 = vmatprep.subr.bf16.mxu0 %v3935
        %3955 = vmatpush1.bf16.msra.mxu0 %v3932
        %3956 = vmatprep.subr.bf16.mxu0 0
        %3957 = vmatpush2.bf16.msra.mxu0 0
        %3958 = vmatprep.subr.bf16.mxu0 0
        %3959 = vmatpush2.bf16.msra.mxu0 0
        %3960 = vmatprep.subr.bf16.mxu0 0
        %3961 = vmatpush2.bf16.msra.mxu0 0
        %3962 = vmatprep.subr.bf16.mxu0 0
        %3963 = vmatpush2.bf16.msra.mxu0 0
        %3964 = vmatprep.subr.bf16.mxu0 0
        %3965 = vmatpush2.bf16.msra.mxu0 0
        %3966 = vmatprep.subr.bf16.mxu0 0
        %3967 = vmatpush2.bf16.msra.mxu0 0
        %3968 = vmatprep.subr.bf16.mxu0 0
        %3969 = vmatpush2.bf16.msra.mxu0 0
        %3970 = vmatprep.subr.bf16.mxu0 0
        %3971 = vmatpush2.bf16.msra.mxu0 0
        %3972 = vmatprep.mubr.bf16.mxu0 0
        %3973 = vmatmul.mubr.bf16.gmra.mxu0 %v3929
        %v3974 = vpop.f32.mrf.mxu0
        %v3975 = vadd.f32 0.0, %v3974
        %v3976 = vpop.f32.mrf.mxu0
        %v3977 = vadd.f32 0.0, %v3976
        %v3978 = vpop.f32.mrf.mxu0
        %v3979 = vpop.f32.mrf.mxu0
        %3980 = vdwg.mxu0
        %3981 = vmatprep.subr.bf16.mxu0 0
        %3982 = vmatpush1.bf16.msra.mxu0 0
        %3983 = vmatprep.subr.bf16.mxu0 0
        %3984 = vmatpush1.bf16.msra.mxu0 0
        %3985 = vmatprep.subr.bf16.mxu0 0
        %3986 = vmatpush1.bf16.msra.mxu0 0
        %3987 = vmatprep.subr.bf16.mxu0 0
        %3988 = vmatpush1.bf16.msra.mxu0 0
        %3989 = vmatprep.subr.bf16.mxu0 0
        %3990 = vmatpush1.bf16.msra.mxu0 0
        %3991 = vmatprep.subr.bf16.mxu0 0
        %3992 = vmatpush1.bf16.msra.mxu0 0
        %3993 = vmatprep.subr.bf16.mxu0 0
        %3994 = vmatpush1.bf16.msra.mxu0 0
        %3995 = vmatprep.subr.bf16.mxu0 0
        %3996 = vmatpush1.bf16.msra.mxu0 %v3938
        %3997 = vmatprep.subr.bf16.mxu0 0
        %3998 = vmatpush2.bf16.msra.mxu0 0
        %3999 = vmatprep.subr.bf16.mxu0 0
        %4000 = vmatpush2.bf16.msra.mxu0 0
        %4001 = vmatprep.subr.bf16.mxu0 0
        %4002 = vmatpush2.bf16.msra.mxu0 0
        %4003 = vmatprep.subr.bf16.mxu0 0
        %4004 = vmatpush2.bf16.msra.mxu0 0
        %4005 = vmatprep.subr.bf16.mxu0 0
        %4006 = vmatpush2.bf16.msra.mxu0 0
        %4007 = vmatprep.subr.bf16.mxu0 0
        %4008 = vmatpush2.bf16.msra.mxu0 0
        %4009 = vmatprep.subr.bf16.mxu0 0
        %4010 = vmatpush2.bf16.msra.mxu0 0
        %4011 = vmatprep.subr.bf16.mxu0 0
        %4012 = vmatpush2.bf16.msra.mxu0 0
        %4013 = vmatprep.mubr.bf16.mxu0 0
        %4014 = vmatmul.mubr.bf16.gmra.mxu0 %v3929
        %v4015 = vpop.f32.mrf.mxu0
        %v4016 = vadd.f32 0.0, %v4015
        %v4017 = vpop.f32.mrf.mxu0
        %v4018 = vpop.f32.mrf.mxu0
        %v4019 = vpop.f32.mrf.mxu0
        %4020 = vdwg.mxu0
        %v4021 = vadd.f32 %v3912, %v3975
        %v4022 = vadd.f32 %v3913, %v3977
        %v4023 = vadd.f32 %v3914, %v4016
        %4024 = vrot.lane.b32.xlu0 %v3149, 64
        %v4025 = vpop.permute.xlu0 %4024
        %4026 = vrot.lane.b32.xlu0 %v3158, 23
        %v4027 = vpop.permute.xlu0 %4026
        %4028 = vrot.lane.b32.xlu0 %v3159, 23
        %v4029 = vpop.permute.xlu0 %4028
        %4030 = vrot.lane.b32.xlu0 %v3160, 23
        %v4031 = vpop.permute.xlu0 %4030
        %4032 = vrot.lane.b32.xlu0 %v3161, 23
        %v4033 = vpop.permute.xlu0 %4032
        %v4034 = vsel %vm1248, %v4027, %v4029
        %v4035 = vsel %vm1248, %v4029, %v4031
        %v4036 = vsel %vm1248, %v4031, %v4033
        %v4038 = vsel %vm378, %v4025, 0
        %v4041 = vsel %vm382, %v4034, 0
        %v4044 = vsel %vm382, %v4035, 0
        %v4047 = vsel %vm382, %v4036, 0
        %4049 = vmatprep.subr.bf16.mxu0 0
        %4050 = vmatpush1.bf16.msra.mxu0 0
        %4051 = vmatprep.subr.bf16.mxu0 0
        %4052 = vmatpush1.bf16.msra.mxu0 0
        %4053 = vmatprep.subr.bf16.mxu0 0
        %4054 = vmatpush1.bf16.msra.mxu0 0
        %4055 = vmatprep.subr.bf16.mxu0 0
        %4056 = vmatpush1.bf16.msra.mxu0 0
        %4057 = vmatprep.subr.bf16.mxu0 0
        %4058 = vmatpush1.bf16.msra.mxu0 0
        %4059 = vmatprep.subr.bf16.mxu0 0
        %4060 = vmatpush1.bf16.msra.mxu0 0
        %4061 = vmatprep.subr.bf16.mxu0 0
        %4062 = vmatpush1.bf16.msra.mxu0 0
        %4063 = vmatprep.subr.bf16.mxu0 %v4044
        %4064 = vmatpush1.bf16.msra.mxu0 %v4041
        %4065 = vmatprep.subr.bf16.mxu0 0
        %4066 = vmatpush2.bf16.msra.mxu0 0
        %4067 = vmatprep.subr.bf16.mxu0 0
        %4068 = vmatpush2.bf16.msra.mxu0 0
        %4069 = vmatprep.subr.bf16.mxu0 0
        %4070 = vmatpush2.bf16.msra.mxu0 0
        %4071 = vmatprep.subr.bf16.mxu0 0
        %4072 = vmatpush2.bf16.msra.mxu0 0
        %4073 = vmatprep.subr.bf16.mxu0 0
        %4074 = vmatpush2.bf16.msra.mxu0 0
        %4075 = vmatprep.subr.bf16.mxu0 0
        %4076 = vmatpush2.bf16.msra.mxu0 0
        %4077 = vmatprep.subr.bf16.mxu0 0
        %4078 = vmatpush2.bf16.msra.mxu0 0
        %4079 = vmatprep.subr.bf16.mxu0 0
        %4080 = vmatpush2.bf16.msra.mxu0 0
        %4081 = vmatprep.mubr.bf16.mxu0 0
        %4082 = vmatmul.mubr.bf16.gmra.mxu0 %v4038
        %v4083 = vpop.f32.mrf.mxu0
        %v4084 = vadd.f32 0.0, %v4083
        %v4085 = vpop.f32.mrf.mxu0
        %v4086 = vadd.f32 0.0, %v4085
        %v4087 = vpop.f32.mrf.mxu0
        %v4088 = vpop.f32.mrf.mxu0
        %4089 = vdwg.mxu0
        %4090 = vmatprep.subr.bf16.mxu0 0
        %4091 = vmatpush1.bf16.msra.mxu0 0
        %4092 = vmatprep.subr.bf16.mxu0 0
        %4093 = vmatpush1.bf16.msra.mxu0 0
        %4094 = vmatprep.subr.bf16.mxu0 0
        %4095 = vmatpush1.bf16.msra.mxu0 0
        %4096 = vmatprep.subr.bf16.mxu0 0
        %4097 = vmatpush1.bf16.msra.mxu0 0
        %4098 = vmatprep.subr.bf16.mxu0 0
        %4099 = vmatpush1.bf16.msra.mxu0 0
        %4100 = vmatprep.subr.bf16.mxu0 0
        %4101 = vmatpush1.bf16.msra.mxu0 0
        %4102 = vmatprep.subr.bf16.mxu0 0
        %4103 = vmatpush1.bf16.msra.mxu0 0
        %4104 = vmatprep.subr.bf16.mxu0 0
        %4105 = vmatpush1.bf16.msra.mxu0 %v4047
        %4106 = vmatprep.subr.bf16.mxu0 0
        %4107 = vmatpush2.bf16.msra.mxu0 0
        %4108 = vmatprep.subr.bf16.mxu0 0
        %4109 = vmatpush2.bf16.msra.mxu0 0
        %4110 = vmatprep.subr.bf16.mxu0 0
        %4111 = vmatpush2.bf16.msra.mxu0 0
        %4112 = vmatprep.subr.bf16.mxu0 0
        %4113 = vmatpush2.bf16.msra.mxu0 0
        %4114 = vmatprep.subr.bf16.mxu0 0
        %4115 = vmatpush2.bf16.msra.mxu0 0
        %4116 = vmatprep.subr.bf16.mxu0 0
        %4117 = vmatpush2.bf16.msra.mxu0 0
        %4118 = vmatprep.subr.bf16.mxu0 0
        %4119 = vmatpush2.bf16.msra.mxu0 0
        %4120 = vmatprep.subr.bf16.mxu0 0
        %4121 = vmatpush2.bf16.msra.mxu0 0
        %4122 = vmatprep.mubr.bf16.mxu0 0
        %4123 = vmatmul.mubr.bf16.gmra.mxu0 %v4038
        %v4124 = vpop.f32.mrf.mxu0
        %v4125 = vadd.f32 0.0, %v4124
        %v4126 = vpop.f32.mrf.mxu0
        %v4127 = vpop.f32.mrf.mxu0
        %v4128 = vpop.f32.mrf.mxu0
        %4129 = vdwg.mxu0
        %v4130 = vadd.f32 %v4021, %v4084
        %v4131 = vadd.f32 %v4022, %v4086
        %v4132 = vadd.f32 %v4023, %v4125
        %4133 = vrot.lane.b32.xlu0 %v3149, 56
        %v4134 = vpop.permute.xlu0 %4133
        %4135 = vrot.lane.b32.xlu0 %v3158, 22
        %v4136 = vpop.permute.xlu0 %4135
        %4137 = vrot.lane.b32.xlu0 %v3159, 22
        %v4138 = vpop.permute.xlu0 %4137
        %4139 = vrot.lane.b32.xlu0 %v3160, 22
        %v4140 = vpop.permute.xlu0 %4139
        %4141 = vrot.lane.b32.xlu0 %v3161, 22
        %v4142 = vpop.permute.xlu0 %4141
        %v4143 = vsel %vm1358, %v4136, %v4138
        %v4144 = vsel %vm1358, %v4138, %v4140
        %v4145 = vsel %vm1358, %v4140, %v4142
        %v4147 = vsel %vm378, %v4134, 0
        %v4150 = vsel %vm382, %v4143, 0
        %v4153 = vsel %vm382, %v4144, 0
        %v4156 = vsel %vm382, %v4145, 0
        %4158 = vmatprep.subr.bf16.mxu0 0
        %4159 = vmatpush1.bf16.msra.mxu0 0
        %4160 = vmatprep.subr.bf16.mxu0 0
        %4161 = vmatpush1.bf16.msra.mxu0 0
        %4162 = vmatprep.subr.bf16.mxu0 0
        %4163 = vmatpush1.bf16.msra.mxu0 0
        %4164 = vmatprep.subr.bf16.mxu0 0
        %4165 = vmatpush1.bf16.msra.mxu0 0
        %4166 = vmatprep.subr.bf16.mxu0 0
        %4167 = vmatpush1.bf16.msra.mxu0 0
        %4168 = vmatprep.subr.bf16.mxu0 0
        %4169 = vmatpush1.bf16.msra.mxu0 0
        %4170 = vmatprep.subr.bf16.mxu0 0
        %4171 = vmatpush1.bf16.msra.mxu0 0
        %4172 = vmatprep.subr.bf16.mxu0 %v4153
        %4173 = vmatpush1.bf16.msra.mxu0 %v4150
        %4174 = vmatprep.subr.bf16.mxu0 0
        %4175 = vmatpush2.bf16.msra.mxu0 0
        %4176 = vmatprep.subr.bf16.mxu0 0
        %4177 = vmatpush2.bf16.msra.mxu0 0
        %4178 = vmatprep.subr.bf16.mxu0 0
        %4179 = vmatpush2.bf16.msra.mxu0 0
        %4180 = vmatprep.subr.bf16.mxu0 0
        %4181 = vmatpush2.bf16.msra.mxu0 0
        %4182 = vmatprep.subr.bf16.mxu0 0
        %4183 = vmatpush2.bf16.msra.mxu0 0
        %4184 = vmatprep.subr.bf16.mxu0 0
        %4185 = vmatpush2.bf16.msra.mxu0 0
        %4186 = vmatprep.subr.bf16.mxu0 0
        %4187 = vmatpush2.bf16.msra.mxu0 0
        %4188 = vmatprep.subr.bf16.mxu0 0
        %4189 = vmatpush2.bf16.msra.mxu0 0
        %4190 = vmatprep.mubr.bf16.mxu0 0
        %4191 = vmatmul.mubr.bf16.gmra.mxu0 %v4147
        %v4192 = vpop.f32.mrf.mxu0
        %v4193 = vadd.f32 0.0, %v4192
        %v4194 = vpop.f32.mrf.mxu0
        %v4195 = vadd.f32 0.0, %v4194
        %v4196 = vpop.f32.mrf.mxu0
        %v4197 = vpop.f32.mrf.mxu0
        %4198 = vdwg.mxu0
        %4199 = vmatprep.subr.bf16.mxu0 0
        %4200 = vmatpush1.bf16.msra.mxu0 0
        %4201 = vmatprep.subr.bf16.mxu0 0
        %4202 = vmatpush1.bf16.msra.mxu0 0
        %4203 = vmatprep.subr.bf16.mxu0 0
        %4204 = vmatpush1.bf16.msra.mxu0 0
        %4205 = vmatprep.subr.bf16.mxu0 0
        %4206 = vmatpush1.bf16.msra.mxu0 0
        %4207 = vmatprep.subr.bf16.mxu0 0
        %4208 = vmatpush1.bf16.msra.mxu0 0
        %4209 = vmatprep.subr.bf16.mxu0 0
        %4210 = vmatpush1.bf16.msra.mxu0 0
        %4211 = vmatprep.subr.bf16.mxu0 0
        %4212 = vmatpush1.bf16.msra.mxu0 0
        %4213 = vmatprep.subr.bf16.mxu0 0
        %4214 = vmatpush1.bf16.msra.mxu0 %v4156
        %4215 = vmatprep.subr.bf16.mxu0 0
        %4216 = vmatpush2.bf16.msra.mxu0 0
        %4217 = vmatprep.subr.bf16.mxu0 0
        %4218 = vmatpush2.bf16.msra.mxu0 0
        %4219 = vmatprep.subr.bf16.mxu0 0
        %4220 = vmatpush2.bf16.msra.mxu0 0
        %4221 = vmatprep.subr.bf16.mxu0 0
        %4222 = vmatpush2.bf16.msra.mxu0 0
        %4223 = vmatprep.subr.bf16.mxu0 0
        %4224 = vmatpush2.bf16.msra.mxu0 0
        %4225 = vmatprep.subr.bf16.mxu0 0
        %4226 = vmatpush2.bf16.msra.mxu0 0
        %4227 = vmatprep.subr.bf16.mxu0 0
        %4228 = vmatpush2.bf16.msra.mxu0 0
        %4229 = vmatprep.subr.bf16.mxu0 0
        %4230 = vmatpush2.bf16.msra.mxu0 0
        %4231 = vmatprep.mubr.bf16.mxu0 0
        %4232 = vmatmul.mubr.bf16.gmra.mxu0 %v4147
        %v4233 = vpop.f32.mrf.mxu0
        %v4234 = vadd.f32 0.0, %v4233
        %v4235 = vpop.f32.mrf.mxu0
        %v4236 = vpop.f32.mrf.mxu0
        %v4237 = vpop.f32.mrf.mxu0
        %4238 = vdwg.mxu0
        %v4239 = vadd.f32 %v4130, %v4193
        %v4240 = vadd.f32 %v4131, %v4195
        %v4241 = vadd.f32 %v4132, %v4234
        %4242 = vrot.lane.b32.xlu0 %v3149, 48
        %v4243 = vpop.permute.xlu0 %4242
        %4244 = vrot.lane.b32.xlu0 %v3158, 2
        %v4245 = vpop.permute.xlu0 %4244
        %4246 = vrot.lane.b32.xlu0 %v3159, 2
        %v4247 = vpop.permute.xlu0 %4246
        %4248 = vrot.lane.b32.xlu0 %v3160, 2
        %v4249 = vpop.permute.xlu0 %4248
        %4250 = vrot.lane.b32.xlu0 %v3161, 2
        %v4251 = vpop.permute.xlu0 %4250
        %v4252 = vsel %vm1468, %v4245, %v4247
        %v4253 = vsel %vm1468, %v4247, %v4249
        %v4254 = vsel %vm1468, %v4249, %v4251
        %v4256 = vsel %vm378, %v4243, 0
        %v4259 = vsel %vm382, %v4252, 0
        %v4262 = vsel %vm382, %v4253, 0
        %v4265 = vsel %vm382, %v4254, 0
        %4267 = vmatprep.subr.bf16.mxu0 0
        %4268 = vmatpush1.bf16.msra.mxu0 0
        %4269 = vmatprep.subr.bf16.mxu0 0
        %4270 = vmatpush1.bf16.msra.mxu0 0
        %4271 = vmatprep.subr.bf16.mxu0 0
        %4272 = vmatpush1.bf16.msra.mxu0 0
        %4273 = vmatprep.subr.bf16.mxu0 0
        %4274 = vmatpush1.bf16.msra.mxu0 0
        %4275 = vmatprep.subr.bf16.mxu0 0
        %4276 = vmatpush1.bf16.msra.mxu0 0
        %4277 = vmatprep.subr.bf16.mxu0 0
        %4278 = vmatpush1.bf16.msra.mxu0 0
        %4279 = vmatprep.subr.bf16.mxu0 0
        %4280 = vmatpush1.bf16.msra.mxu0 0
        %4281 = vmatprep.subr.bf16.mxu0 %v4262
        %4282 = vmatpush1.bf16.msra.mxu0 %v4259
        %4283 = vmatprep.subr.bf16.mxu0 0
        %4284 = vmatpush2.bf16.msra.mxu0 0
        %4285 = vmatprep.subr.bf16.mxu0 0
        %4286 = vmatpush2.bf16.msra.mxu0 0
        %4287 = vmatprep.subr.bf16.mxu0 0
        %4288 = vmatpush2.bf16.msra.mxu0 0
        %4289 = vmatprep.subr.bf16.mxu0 0
        %4290 = vmatpush2.bf16.msra.mxu0 0
        %4291 = vmatprep.subr.bf16.mxu0 0
        %4292 = vmatpush2.bf16.msra.mxu0 0
        %4293 = vmatprep.subr.bf16.mxu0 0
        %4294 = vmatpush2.bf16.msra.mxu0 0
        %4295 = vmatprep.subr.bf16.mxu0 0
        %4296 = vmatpush2.bf16.msra.mxu0 0
        %4297 = vmatprep.subr.bf16.mxu0 0
        %4298 = vmatpush2.bf16.msra.mxu0 0
        %4299 = vmatprep.mubr.bf16.mxu0 0
        %4300 = vmatmul.mubr.bf16.gmra.mxu0 %v4256
        %v4301 = vpop.f32.mrf.mxu0
        %v4302 = vadd.f32 0.0, %v4301
        %v4303 = vpop.f32.mrf.mxu0
        %v4304 = vadd.f32 0.0, %v4303
        %v4305 = vpop.f32.mrf.mxu0
        %v4306 = vpop.f32.mrf.mxu0
        %4307 = vdwg.mxu0
        %4308 = vmatprep.subr.bf16.mxu0 0
        %4309 = vmatpush1.bf16.msra.mxu0 0
        %4310 = vmatprep.subr.bf16.mxu0 0
        %4311 = vmatpush1.bf16.msra.mxu0 0
        %4312 = vmatprep.subr.bf16.mxu0 0
        %4313 = vmatpush1.bf16.msra.mxu0 0
        %4314 = vmatprep.subr.bf16.mxu0 0
        %4315 = vmatpush1.bf16.msra.mxu0 0
        %4316 = vmatprep.subr.bf16.mxu0 0
        %4317 = vmatpush1.bf16.msra.mxu0 0
        %4318 = vmatprep.subr.bf16.mxu0 0
        %4319 = vmatpush1.bf16.msra.mxu0 0
        %4320 = vmatprep.subr.bf16.mxu0 0
        %4321 = vmatpush1.bf16.msra.mxu0 0
        %4322 = vmatprep.subr.bf16.mxu0 0
        %4323 = vmatpush1.bf16.msra.mxu0 %v4265
        %4324 = vmatprep.subr.bf16.mxu0 0
        %4325 = vmatpush2.bf16.msra.mxu0 0
        %4326 = vmatprep.subr.bf16.mxu0 0
        %4327 = vmatpush2.bf16.msra.mxu0 0
        %4328 = vmatprep.subr.bf16.mxu0 0
        %4329 = vmatpush2.bf16.msra.mxu0 0
        %4330 = vmatprep.subr.bf16.mxu0 0
        %4331 = vmatpush2.bf16.msra.mxu0 0
        %4332 = vmatprep.subr.bf16.mxu0 0
        %4333 = vmatpush2.bf16.msra.mxu0 0
        %4334 = vmatprep.subr.bf16.mxu0 0
        %4335 = vmatpush2.bf16.msra.mxu0 0
        %4336 = vmatprep.subr.bf16.mxu0 0
        %4337 = vmatpush2.bf16.msra.mxu0 0
        %4338 = vmatprep.subr.bf16.mxu0 0
        %4339 = vmatpush2.bf16.msra.mxu0 0
        %4340 = vmatprep.mubr.bf16.mxu0 0
        %4341 = vmatmul.mubr.bf16.gmra.mxu0 %v4256
        %v4342 = vpop.f32.mrf.mxu0
        %v4343 = vadd.f32 0.0, %v4342
        %v4344 = vpop.f32.mrf.mxu0
        %v4345 = vpop.f32.mrf.mxu0
        %v4346 = vpop.f32.mrf.mxu0
        %4347 = vdwg.mxu0
        %v4348 = vadd.f32 %v4239, %v4302
        %v4349 = vadd.f32 %v4240, %v4304
        %v4350 = vadd.f32 %v4241, %v4343
        %4351 = vrot.lane.b32.xlu0 %v3149, 40
        %v4352 = vpop.permute.xlu0 %4351
        %4353 = vrot.lane.b32.xlu0 %v3158, 1
        %v4354 = vpop.permute.xlu0 %4353
        %4355 = vrot.lane.b32.xlu0 %v3159, 1
        %v4356 = vpop.permute.xlu0 %4355
        %4357 = vrot.lane.b32.xlu0 %v3160, 1
        %v4358 = vpop.permute.xlu0 %4357
        %4359 = vrot.lane.b32.xlu0 %v3161, 1
        %v4360 = vpop.permute.xlu0 %4359
        %v4361 = vsel %vm1578, %v4354, %v4356
        %v4362 = vsel %vm1578, %v4356, %v4358
        %v4363 = vsel %vm1578, %v4358, %v4360
        %v4365 = vsel %vm378, %v4352, 0
        %v4368 = vsel %vm382, %v4361, 0
        %v4371 = vsel %vm382, %v4362, 0
        %v4374 = vsel %vm382, %v4363, 0
        %4376 = vmatprep.subr.bf16.mxu0 0
        %4377 = vmatpush1.bf16.msra.mxu0 0
        %4378 = vmatprep.subr.bf16.mxu0 0
        %4379 = vmatpush1.bf16.msra.mxu0 0
        %4380 = vmatprep.subr.bf16.mxu0 0
        %4381 = vmatpush1.bf16.msra.mxu0 0
        %4382 = vmatprep.subr.bf16.mxu0 0
        %4383 = vmatpush1.bf16.msra.mxu0 0
        %4384 = vmatprep.subr.bf16.mxu0 0
        %4385 = vmatpush1.bf16.msra.mxu0 0
        %4386 = vmatprep.subr.bf16.mxu0 0
        %4387 = vmatpush1.bf16.msra.mxu0 0
        %4388 = vmatprep.subr.bf16.mxu0 0
        %4389 = vmatpush1.bf16.msra.mxu0 0
        %4390 = vmatprep.subr.bf16.mxu0 %v4371
        %4391 = vmatpush1.bf16.msra.mxu0 %v4368
        %4392 = vmatprep.subr.bf16.mxu0 0
        %4393 = vmatpush2.bf16.msra.mxu0 0
        %4394 = vmatprep.subr.bf16.mxu0 0
        %4395 = vmatpush2.bf16.msra.mxu0 0
        %4396 = vmatprep.subr.bf16.mxu0 0
        %4397 = vmatpush2.bf16.msra.mxu0 0
        %4398 = vmatprep.subr.bf16.mxu0 0
        %4399 = vmatpush2.bf16.msra.mxu0 0
        %4400 = vmatprep.subr.bf16.mxu0 0
        %4401 = vmatpush2.bf16.msra.mxu0 0
        %4402 = vmatprep.subr.bf16.mxu0 0
        %4403 = vmatpush2.bf16.msra.mxu0 0
        %4404 = vmatprep.subr.bf16.mxu0 0
        %4405 = vmatpush2.bf16.msra.mxu0 0
        %4406 = vmatprep.subr.bf16.mxu0 0
        %4407 = vmatpush2.bf16.msra.mxu0 0
        %4408 = vmatprep.mubr.bf16.mxu0 0
        %4409 = vmatmul.mubr.bf16.gmra.mxu0 %v4365
        %v4410 = vpop.f32.mrf.mxu0
        %v4411 = vadd.f32 0.0, %v4410
        %v4412 = vpop.f32.mrf.mxu0
        %v4413 = vadd.f32 0.0, %v4412
        %v4414 = vpop.f32.mrf.mxu0
        %v4415 = vpop.f32.mrf.mxu0
        %4416 = vdwg.mxu0
        %4417 = vmatprep.subr.bf16.mxu0 0
        %4418 = vmatpush1.bf16.msra.mxu0 0
        %4419 = vmatprep.subr.bf16.mxu0 0
        %4420 = vmatpush1.bf16.msra.mxu0 0
        %4421 = vmatprep.subr.bf16.mxu0 0
        %4422 = vmatpush1.bf16.msra.mxu0 0
        %4423 = vmatprep.subr.bf16.mxu0 0
        %4424 = vmatpush1.bf16.msra.mxu0 0
        %4425 = vmatprep.subr.bf16.mxu0 0
        %4426 = vmatpush1.bf16.msra.mxu0 0
        %4427 = vmatprep.subr.bf16.mxu0 0
        %4428 = vmatpush1.bf16.msra.mxu0 0
        %4429 = vmatprep.subr.bf16.mxu0 0
        %4430 = vmatpush1.bf16.msra.mxu0 0
        %4431 = vmatprep.subr.bf16.mxu0 0
        %4432 = vmatpush1.bf16.msra.mxu0 %v4374
        %4433 = vmatprep.subr.bf16.mxu0 0
        %4434 = vmatpush2.bf16.msra.mxu0 0
        %4435 = vmatprep.subr.bf16.mxu0 0
        %4436 = vmatpush2.bf16.msra.mxu0 0
        %4437 = vmatprep.subr.bf16.mxu0 0
        %4438 = vmatpush2.bf16.msra.mxu0 0
        %4439 = vmatprep.subr.bf16.mxu0 0
        %4440 = vmatpush2.bf16.msra.mxu0 0
        %4441 = vmatprep.subr.bf16.mxu0 0
        %4442 = vmatpush2.bf16.msra.mxu0 0
        %4443 = vmatprep.subr.bf16.mxu0 0
        %4444 = vmatpush2.bf16.msra.mxu0 0
        %4445 = vmatprep.subr.bf16.mxu0 0
        %4446 = vmatpush2.bf16.msra.mxu0 0
        %4447 = vmatprep.subr.bf16.mxu0 0
        %4448 = vmatpush2.bf16.msra.mxu0 0
        %4449 = vmatprep.mubr.bf16.mxu0 0
        %4450 = vmatmul.mubr.bf16.gmra.mxu0 %v4365
        %v4451 = vpop.f32.mrf.mxu0
        %v4452 = vadd.f32 0.0, %v4451
        %v4453 = vpop.f32.mrf.mxu0
        %v4454 = vpop.f32.mrf.mxu0
        %v4455 = vpop.f32.mrf.mxu0
        %4456 = vdwg.mxu0
        %v4457 = vadd.f32 %v4348, %v4411
        %v4458 = vadd.f32 %v4349, %v4413
        %v4459 = vadd.f32 %v4350, %v4452
        %4460 = vrot.lane.b32.xlu0 %v3149, 32
        %v4461 = vpop.permute.xlu0 %4460
        %v4463 = vsel %vm378, %v4461, 0
        %v4466 = vsel %vm382, %v3159, 0
        %v4469 = vsel %vm382, %v3160, 0
        %v4472 = vsel %vm382, %v3161, 0
        %4474 = vmatprep.subr.bf16.mxu0 0
        %4475 = vmatpush1.bf16.msra.mxu0 0
        %4476 = vmatprep.subr.bf16.mxu0 0
        %4477 = vmatpush1.bf16.msra.mxu0 0
        %4478 = vmatprep.subr.bf16.mxu0 0
        %4479 = vmatpush1.bf16.msra.mxu0 0
        %4480 = vmatprep.subr.bf16.mxu0 0
        %4481 = vmatpush1.bf16.msra.mxu0 0
        %4482 = vmatprep.subr.bf16.mxu0 0
        %4483 = vmatpush1.bf16.msra.mxu0 0
        %4484 = vmatprep.subr.bf16.mxu0 0
        %4485 = vmatpush1.bf16.msra.mxu0 0
        %4486 = vmatprep.subr.bf16.mxu0 0
        %4487 = vmatpush1.bf16.msra.mxu0 0
        %4488 = vmatprep.subr.bf16.mxu0 %v4469
        %4489 = vmatpush1.bf16.msra.mxu0 %v4466
        %4490 = vmatprep.subr.bf16.mxu0 0
        %4491 = vmatpush2.bf16.msra.mxu0 0
        %4492 = vmatprep.subr.bf16.mxu0 0
        %4493 = vmatpush2.bf16.msra.mxu0 0
        %4494 = vmatprep.subr.bf16.mxu0 0
        %4495 = vmatpush2.bf16.msra.mxu0 0
        %4496 = vmatprep.subr.bf16.mxu0 0
        %4497 = vmatpush2.bf16.msra.mxu0 0
        %4498 = vmatprep.subr.bf16.mxu0 0
        %4499 = vmatpush2.bf16.msra.mxu0 0
        %4500 = vmatprep.subr.bf16.mxu0 0
        %4501 = vmatpush2.bf16.msra.mxu0 0
        %4502 = vmatprep.subr.bf16.mxu0 0
        %4503 = vmatpush2.bf16.msra.mxu0 0
        %4504 = vmatprep.subr.bf16.mxu0 0
        %4505 = vmatpush2.bf16.msra.mxu0 0
        %4506 = vmatprep.mubr.bf16.mxu0 0
        %4507 = vmatmul.mubr.bf16.gmra.mxu0 %v4463
        %v4508 = vpop.f32.mrf.mxu0
        %v4509 = vadd.f32 0.0, %v4508
        %v4510 = vpop.f32.mrf.mxu0
        %v4511 = vadd.f32 0.0, %v4510
        %v4512 = vpop.f32.mrf.mxu0
        %v4513 = vpop.f32.mrf.mxu0
        %4514 = vdwg.mxu0
        %4515 = vmatprep.subr.bf16.mxu0 0
        %4516 = vmatpush1.bf16.msra.mxu0 0
        %4517 = vmatprep.subr.bf16.mxu0 0
        %4518 = vmatpush1.bf16.msra.mxu0 0
        %4519 = vmatprep.subr.bf16.mxu0 0
        %4520 = vmatpush1.bf16.msra.mxu0 0
        %4521 = vmatprep.subr.bf16.mxu0 0
        %4522 = vmatpush1.bf16.msra.mxu0 0
        %4523 = vmatprep.subr.bf16.mxu0 0
        %4524 = vmatpush1.bf16.msra.mxu0 0
        %4525 = vmatprep.subr.bf16.mxu0 0
        %4526 = vmatpush1.bf16.msra.mxu0 0
        %4527 = vmatprep.subr.bf16.mxu0 0
        %4528 = vmatpush1.bf16.msra.mxu0 0
        %4529 = vmatprep.subr.bf16.mxu0 0
        %4530 = vmatpush1.bf16.msra.mxu0 %v4472
        %4531 = vmatprep.subr.bf16.mxu0 0
        %4532 = vmatpush2.bf16.msra.mxu0 0
        %4533 = vmatprep.subr.bf16.mxu0 0
        %4534 = vmatpush2.bf16.msra.mxu0 0
        %4535 = vmatprep.subr.bf16.mxu0 0
        %4536 = vmatpush2.bf16.msra.mxu0 0
        %4537 = vmatprep.subr.bf16.mxu0 0
        %4538 = vmatpush2.bf16.msra.mxu0 0
        %4539 = vmatprep.subr.bf16.mxu0 0
        %4540 = vmatpush2.bf16.msra.mxu0 0
        %4541 = vmatprep.subr.bf16.mxu0 0
        %4542 = vmatpush2.bf16.msra.mxu0 0
        %4543 = vmatprep.subr.bf16.mxu0 0
        %4544 = vmatpush2.bf16.msra.mxu0 0
        %4545 = vmatprep.subr.bf16.mxu0 0
        %4546 = vmatpush2.bf16.msra.mxu0 0
        %4547 = vmatprep.mubr.bf16.mxu0 0
        %4548 = vmatmul.mubr.bf16.gmra.mxu0 %v4463
        %v4549 = vpop.f32.mrf.mxu0
        %v4550 = vadd.f32 0.0, %v4549
        %v4551 = vpop.f32.mrf.mxu0
        %v4552 = vpop.f32.mrf.mxu0
        %v4553 = vpop.f32.mrf.mxu0
        %4554 = vdwg.mxu0
        %v4555 = vadd.f32 %v4457, %v4509
        %v4556 = vadd.f32 %v4458, %v4511
        %v4557 = vadd.f32 %v4459, %v4550
        %4558 = vrot.lane.b32.xlu0 %v3149, 24
        %v4559 = vpop.permute.xlu0 %4558
        %v4561 = vunpack.c.l.b16 %v3145
        %v4562 = vpack.c.b16 %v4561, %v4561
        %4563 = vrot.lane.b32.xlu0 %v3159, 127
        %v4564 = vpop.permute.xlu0 %4563
        %4565 = vrot.lane.b32.xlu0 %v3160, 127
        %v4566 = vpop.permute.xlu0 %4565
        %4567 = vrot.lane.b32.xlu0 %v3161, 127
        %v4568 = vpop.permute.xlu0 %4567
        %4569 = vrot.lane.b32.xlu0 %v4562, 127
        %v4570 = vpop.permute.xlu0 %4569
        %v4571 = vsel %vm1789, %v4564, %v4566
        %v4572 = vsel %vm1789, %v4566, %v4568
        %v4573 = vsel %vm1789, %v4568, %v4570
        %v4575 = vsel %vm378, %v4559, 0
        %v4578 = vsel %vm382, %v4571, 0
        %v4581 = vsel %vm382, %v4572, 0
        %v4584 = vsel %vm382, %v4573, 0
        %4586 = vmatprep.subr.bf16.mxu0 0
        %4587 = vmatpush1.bf16.msra.mxu0 0
        %4588 = vmatprep.subr.bf16.mxu0 0
        %4589 = vmatpush1.bf16.msra.mxu0 0
        %4590 = vmatprep.subr.bf16.mxu0 0
        %4591 = vmatpush1.bf16.msra.mxu0 0
        %4592 = vmatprep.subr.bf16.mxu0 0
        %4593 = vmatpush1.bf16.msra.mxu0 0
        %4594 = vmatprep.subr.bf16.mxu0 0
        %4595 = vmatpush1.bf16.msra.mxu0 0
        %4596 = vmatprep.subr.bf16.mxu0 0
        %4597 = vmatpush1.bf16.msra.mxu0 0
        %4598 = vmatprep.subr.bf16.mxu0 0
        %4599 = vmatpush1.bf16.msra.mxu0 0
        %4600 = vmatprep.subr.bf16.mxu0 %v4581
        %4601 = vmatpush1.bf16.msra.mxu0 %v4578
        %4602 = vmatprep.subr.bf16.mxu0 0
        %4603 = vmatpush2.bf16.msra.mxu0 0
        %4604 = vmatprep.subr.bf16.mxu0 0
        %4605 = vmatpush2.bf16.msra.mxu0 0
        %4606 = vmatprep.subr.bf16.mxu0 0
        %4607 = vmatpush2.bf16.msra.mxu0 0
        %4608 = vmatprep.subr.bf16.mxu0 0
        %4609 = vmatpush2.bf16.msra.mxu0 0
        %4610 = vmatprep.subr.bf16.mxu0 0
        %4611 = vmatpush2.bf16.msra.mxu0 0
        %4612 = vmatprep.subr.bf16.mxu0 0
        %4613 = vmatpush2.bf16.msra.mxu0 0
        %4614 = vmatprep.subr.bf16.mxu0 0
        %4615 = vmatpush2.bf16.msra.mxu0 0
        %4616 = vmatprep.subr.bf16.mxu0 0
        %4617 = vmatpush2.bf16.msra.mxu0 0
        %4618 = vmatprep.mubr.bf16.mxu0 0
        %4619 = vmatmul.mubr.bf16.gmra.mxu0 %v4575
        %v4620 = vpop.f32.mrf.mxu0
        %v4621 = vadd.f32 0.0, %v4620
        %v4622 = vpop.f32.mrf.mxu0
        %v4623 = vadd.f32 0.0, %v4622
        %v4624 = vpop.f32.mrf.mxu0
        %v4625 = vpop.f32.mrf.mxu0
        %4626 = vdwg.mxu0
        %4627 = vmatprep.subr.bf16.mxu0 0
        %4628 = vmatpush1.bf16.msra.mxu0 0
        %4629 = vmatprep.subr.bf16.mxu0 0
        %4630 = vmatpush1.bf16.msra.mxu0 0
        %4631 = vmatprep.subr.bf16.mxu0 0
        %4632 = vmatpush1.bf16.msra.mxu0 0
        %4633 = vmatprep.subr.bf16.mxu0 0
        %4634 = vmatpush1.bf16.msra.mxu0 0
        %4635 = vmatprep.subr.bf16.mxu0 0
        %4636 = vmatpush1.bf16.msra.mxu0 0
        %4637 = vmatprep.subr.bf16.mxu0 0
        %4638 = vmatpush1.bf16.msra.mxu0 0
        %4639 = vmatprep.subr.bf16.mxu0 0
        %4640 = vmatpush1.bf16.msra.mxu0 0
        %4641 = vmatprep.subr.bf16.mxu0 0
        %4642 = vmatpush1.bf16.msra.mxu0 %v4584
        %4643 = vmatprep.subr.bf16.mxu0 0
        %4644 = vmatpush2.bf16.msra.mxu0 0
        %4645 = vmatprep.subr.bf16.mxu0 0
        %4646 = vmatpush2.bf16.msra.mxu0 0
        %4647 = vmatprep.subr.bf16.mxu0 0
        %4648 = vmatpush2.bf16.msra.mxu0 0
        %4649 = vmatprep.subr.bf16.mxu0 0
        %4650 = vmatpush2.bf16.msra.mxu0 0
        %4651 = vmatprep.subr.bf16.mxu0 0
        %4652 = vmatpush2.bf16.msra.mxu0 0
        %4653 = vmatprep.subr.bf16.mxu0 0
        %4654 = vmatpush2.bf16.msra.mxu0 0
        %4655 = vmatprep.subr.bf16.mxu0 0
        %4656 = vmatpush2.bf16.msra.mxu0 0
        %4657 = vmatprep.subr.bf16.mxu0 0
        %4658 = vmatpush2.bf16.msra.mxu0 0
        %4659 = vmatprep.mubr.bf16.mxu0 0
        %4660 = vmatmul.mubr.bf16.gmra.mxu0 %v4575
        %v4661 = vpop.f32.mrf.mxu0
        %v4662 = vadd.f32 0.0, %v4661
        %v4663 = vpop.f32.mrf.mxu0
        %v4664 = vpop.f32.mrf.mxu0
        %v4665 = vpop.f32.mrf.mxu0
        %4666 = vdwg.mxu0
        %v4667 = vadd.f32 %v4555, %v4621
        %v4668 = vadd.f32 %v4556, %v4623
        %v4669 = vadd.f32 %v4557, %v4662
        %4670 = vrot.lane.b32.xlu0 %v3149, 16
        %v4671 = vpop.permute.xlu0 %4670
        %4672 = vrot.lane.b32.xlu0 %v3159, 126
        %v4673 = vpop.permute.xlu0 %4672
        %4674 = vrot.lane.b32.xlu0 %v3160, 126
        %v4675 = vpop.permute.xlu0 %4674
        %4676 = vrot.lane.b32.xlu0 %v3161, 126
        %v4677 = vpop.permute.xlu0 %4676
        %4678 = vrot.lane.b32.xlu0 %v4562, 126
        %v4679 = vpop.permute.xlu0 %4678
        %v4680 = vsel %vm1899, %v4673, %v4675
        %v4681 = vsel %vm1899, %v4675, %v4677
        %v4682 = vsel %vm1899, %v4677, %v4679
        %v4684 = vsel %vm378, %v4671, 0
        %v4687 = vsel %vm382, %v4680, 0
        %v4690 = vsel %vm382, %v4681, 0
        %v4693 = vsel %vm382, %v4682, 0
        %4695 = vmatprep.subr.bf16.mxu0 0
        %4696 = vmatpush1.bf16.msra.mxu0 0
        %4697 = vmatprep.subr.bf16.mxu0 0
        %4698 = vmatpush1.bf16.msra.mxu0 0
        %4699 = vmatprep.subr.bf16.mxu0 0
        %4700 = vmatpush1.bf16.msra.mxu0 0
        %4701 = vmatprep.subr.bf16.mxu0 0
        %4702 = vmatpush1.bf16.msra.mxu0 0
        %4703 = vmatprep.subr.bf16.mxu0 0
        %4704 = vmatpush1.bf16.msra.mxu0 0
        %4705 = vmatprep.subr.bf16.mxu0 0
        %4706 = vmatpush1.bf16.msra.mxu0 0
        %4707 = vmatprep.subr.bf16.mxu0 0
        %4708 = vmatpush1.bf16.msra.mxu0 0
        %4709 = vmatprep.subr.bf16.mxu0 %v4690
        %4710 = vmatpush1.bf16.msra.mxu0 %v4687
        %4711 = vmatprep.subr.bf16.mxu0 0
        %4712 = vmatpush2.bf16.msra.mxu0 0
        %4713 = vmatprep.subr.bf16.mxu0 0
        %4714 = vmatpush2.bf16.msra.mxu0 0
        %4715 = vmatprep.subr.bf16.mxu0 0
        %4716 = vmatpush2.bf16.msra.mxu0 0
        %4717 = vmatprep.subr.bf16.mxu0 0
        %4718 = vmatpush2.bf16.msra.mxu0 0
        %4719 = vmatprep.subr.bf16.mxu0 0
        %4720 = vmatpush2.bf16.msra.mxu0 0
        %4721 = vmatprep.subr.bf16.mxu0 0
        %4722 = vmatpush2.bf16.msra.mxu0 0
        %4723 = vmatprep.subr.bf16.mxu0 0
        %4724 = vmatpush2.bf16.msra.mxu0 0
        %4725 = vmatprep.subr.bf16.mxu0 0
        %4726 = vmatpush2.bf16.msra.mxu0 0
        %4727 = vmatprep.mubr.bf16.mxu0 0
        %4728 = vmatmul.mubr.bf16.gmra.mxu0 %v4684
        %v4729 = vpop.f32.mrf.mxu0
        %v4730 = vadd.f32 0.0, %v4729
        %v4731 = vpop.f32.mrf.mxu0
        %v4732 = vadd.f32 0.0, %v4731
        %v4733 = vpop.f32.mrf.mxu0
        %v4734 = vpop.f32.mrf.mxu0
        %4735 = vdwg.mxu0
        %4736 = vmatprep.subr.bf16.mxu0 0
        %4737 = vmatpush1.bf16.msra.mxu0 0
        %4738 = vmatprep.subr.bf16.mxu0 0
        %4739 = vmatpush1.bf16.msra.mxu0 0
        %4740 = vmatprep.subr.bf16.mxu0 0
        %4741 = vmatpush1.bf16.msra.mxu0 0
        %4742 = vmatprep.subr.bf16.mxu0 0
        %4743 = vmatpush1.bf16.msra.mxu0 0
        %4744 = vmatprep.subr.bf16.mxu0 0
        %4745 = vmatpush1.bf16.msra.mxu0 0
        %4746 = vmatprep.subr.bf16.mxu0 0
        %4747 = vmatpush1.bf16.msra.mxu0 0
        %4748 = vmatprep.subr.bf16.mxu0 0
        %4749 = vmatpush1.bf16.msra.mxu0 0
        %4750 = vmatprep.subr.bf16.mxu0 0
        %4751 = vmatpush1.bf16.msra.mxu0 %v4693
        %4752 = vmatprep.subr.bf16.mxu0 0
        %4753 = vmatpush2.bf16.msra.mxu0 0
        %4754 = vmatprep.subr.bf16.mxu0 0
        %4755 = vmatpush2.bf16.msra.mxu0 0
        %4756 = vmatprep.subr.bf16.mxu0 0
        %4757 = vmatpush2.bf16.msra.mxu0 0
        %4758 = vmatprep.subr.bf16.mxu0 0
        %4759 = vmatpush2.bf16.msra.mxu0 0
        %4760 = vmatprep.subr.bf16.mxu0 0
        %4761 = vmatpush2.bf16.msra.mxu0 0
        %4762 = vmatprep.subr.bf16.mxu0 0
        %4763 = vmatpush2.bf16.msra.mxu0 0
        %4764 = vmatprep.subr.bf16.mxu0 0
        %4765 = vmatpush2.bf16.msra.mxu0 0
        %4766 = vmatprep.subr.bf16.mxu0 0
        %4767 = vmatpush2.bf16.msra.mxu0 0
        %4768 = vmatprep.mubr.bf16.mxu0 0
        %4769 = vmatmul.mubr.bf16.gmra.mxu0 %v4684
        %v4770 = vpop.f32.mrf.mxu0
        %v4771 = vadd.f32 0.0, %v4770
        %v4772 = vpop.f32.mrf.mxu0
        %v4773 = vpop.f32.mrf.mxu0
        %v4774 = vpop.f32.mrf.mxu0
        %4775 = vdwg.mxu0
        %v4776 = vadd.f32 %v4667, %v4730
        %v4777 = vadd.f32 %v4668, %v4732
        %v4778 = vadd.f32 %v4669, %v4771
        %4779 = vrot.lane.b32.xlu0 %v3149, 8
        %v4780 = vpop.permute.xlu0 %4779
        %4781 = vrot.lane.b32.xlu0 %v3159, 106
        %v4782 = vpop.permute.xlu0 %4781
        %4783 = vrot.lane.b32.xlu0 %v3160, 106
        %v4784 = vpop.permute.xlu0 %4783
        %4785 = vrot.lane.b32.xlu0 %v3161, 106
        %v4786 = vpop.permute.xlu0 %4785
        %4787 = vrot.lane.b32.xlu0 %v4562, 106
        %v4788 = vpop.permute.xlu0 %4787
        %v4789 = vsel %vm2009, %v4782, %v4784
        %v4790 = vsel %vm2009, %v4784, %v4786
        %v4791 = vsel %vm2009, %v4786, %v4788
        %v4793 = vsel %vm378, %v4780, 0
        %v4796 = vsel %vm382, %v4789, 0
        %v4799 = vsel %vm382, %v4790, 0
        %v4802 = vsel %vm382, %v4791, 0
        %4804 = vmatprep.subr.bf16.mxu0 0
        %4805 = vmatpush1.bf16.msra.mxu0 0
        %4806 = vmatprep.subr.bf16.mxu0 0
        %4807 = vmatpush1.bf16.msra.mxu0 0
        %4808 = vmatprep.subr.bf16.mxu0 0
        %4809 = vmatpush1.bf16.msra.mxu0 0
        %4810 = vmatprep.subr.bf16.mxu0 0
        %4811 = vmatpush1.bf16.msra.mxu0 0
        %4812 = vmatprep.subr.bf16.mxu0 0
        %4813 = vmatpush1.bf16.msra.mxu0 0
        %4814 = vmatprep.subr.bf16.mxu0 0
        %4815 = vmatpush1.bf16.msra.mxu0 0
        %4816 = vmatprep.subr.bf16.mxu0 0
        %4817 = vmatpush1.bf16.msra.mxu0 0
        %4818 = vmatprep.subr.bf16.mxu0 %v4799
        %4819 = vmatpush1.bf16.msra.mxu0 %v4796
        %4820 = vmatprep.subr.bf16.mxu0 0
        %4821 = vmatpush2.bf16.msra.mxu0 0
        %4822 = vmatprep.subr.bf16.mxu0 0
        %4823 = vmatpush2.bf16.msra.mxu0 0
        %4824 = vmatprep.subr.bf16.mxu0 0
        %4825 = vmatpush2.bf16.msra.mxu0 0
        %4826 = vmatprep.subr.bf16.mxu0 0
        %4827 = vmatpush2.bf16.msra.mxu0 0
        %4828 = vmatprep.subr.bf16.mxu0 0
        %4829 = vmatpush2.bf16.msra.mxu0 0
        %4830 = vmatprep.subr.bf16.mxu0 0
        %4831 = vmatpush2.bf16.msra.mxu0 0
        %4832 = vmatprep.subr.bf16.mxu0 0
        %4833 = vmatpush2.bf16.msra.mxu0 0
        %4834 = vmatprep.subr.bf16.mxu0 0
        %4835 = vmatpush2.bf16.msra.mxu0 0
        %4836 = vmatprep.mubr.bf16.mxu0 0
        %4837 = vmatmul.mubr.bf16.gmra.mxu0 %v4793
        %v4838 = vpop.f32.mrf.mxu0
        %v4839 = vadd.f32 0.0, %v4838
        %v4840 = vpop.f32.mrf.mxu0
        %v4841 = vadd.f32 0.0, %v4840
        %v4842 = vpop.f32.mrf.mxu0
        %v4843 = vpop.f32.mrf.mxu0
        %4844 = vdwg.mxu0
        %4845 = vmatprep.subr.bf16.mxu0 0
        %4846 = vmatpush1.bf16.msra.mxu0 0
        %4847 = vmatprep.subr.bf16.mxu0 0
        %4848 = vmatpush1.bf16.msra.mxu0 0
        %4849 = vmatprep.subr.bf16.mxu0 0
        %4850 = vmatpush1.bf16.msra.mxu0 0
        %4851 = vmatprep.subr.bf16.mxu0 0
        %4852 = vmatpush1.bf16.msra.mxu0 0
        %4853 = vmatprep.subr.bf16.mxu0 0
        %4854 = vmatpush1.bf16.msra.mxu0 0
        %4855 = vmatprep.subr.bf16.mxu0 0
        %4856 = vmatpush1.bf16.msra.mxu0 0
        %4857 = vmatprep.subr.bf16.mxu0 0
        %4858 = vmatpush1.bf16.msra.mxu0 0
        %4859 = vmatprep.subr.bf16.mxu0 0
        %4860 = vmatpush1.bf16.msra.mxu0 %v4802
        %4861 = vmatprep.subr.bf16.mxu0 0
        %4862 = vmatpush2.bf16.msra.mxu0 0
        %4863 = vmatprep.subr.bf16.mxu0 0
        %4864 = vmatpush2.bf16.msra.mxu0 0
        %4865 = vmatprep.subr.bf16.mxu0 0
        %4866 = vmatpush2.bf16.msra.mxu0 0
        %4867 = vmatprep.subr.bf16.mxu0 0
        %4868 = vmatpush2.bf16.msra.mxu0 0
        %4869 = vmatprep.subr.bf16.mxu0 0
        %4870 = vmatpush2.bf16.msra.mxu0 0
        %4871 = vmatprep.subr.bf16.mxu0 0
        %4872 = vmatpush2.bf16.msra.mxu0 0
        %4873 = vmatprep.subr.bf16.mxu0 0
        %4874 = vmatpush2.bf16.msra.mxu0 0
        %4875 = vmatprep.subr.bf16.mxu0 0
        %4876 = vmatpush2.bf16.msra.mxu0 0
        %4877 = vmatprep.mubr.bf16.mxu0 0
        %4878 = vmatmul.mubr.bf16.gmra.mxu0 %v4793
        %v4879 = vpop.f32.mrf.mxu0
        %v4880 = vadd.f32 0.0, %v4879
        %v4881 = vpop.f32.mrf.mxu0
        %v4882 = vpop.f32.mrf.mxu0
        %v4883 = vpop.f32.mrf.mxu0
        %4884 = vdwg.mxu0
        %v4885 = vadd.f32 %v4776, %v4839
        %v4886 = vadd.f32 %v4777, %v4841
        %v4887 = vadd.f32 %v4778, %v4880
        %v4888 = vunpack.c.h.b16 %v3146
        %v4889 = vpack.c.b16 %v4888, %v4888
        %4890 = vrot.lane.b32.xlu0 %v3159, 105
        %v4891 = vpop.permute.xlu0 %4890
        %4892 = vrot.lane.b32.xlu0 %v3160, 105
        %v4893 = vpop.permute.xlu0 %4892
        %4894 = vrot.lane.b32.xlu0 %v3161, 105
        %v4895 = vpop.permute.xlu0 %4894
        %4896 = vrot.lane.b32.xlu0 %v4562, 105
        %v4897 = vpop.permute.xlu0 %4896
        %v4898 = vsel %vm2119, %v4891, %v4893
        %v4899 = vsel %vm2119, %v4893, %v4895
        %v4900 = vsel %vm2119, %v4895, %v4897
        %v4902 = vsel %vm378, %v4889, 0
        %v4905 = vsel %vm382, %v4898, 0
        %v4908 = vsel %vm382, %v4899, 0
        %v4911 = vsel %vm382, %v4900, 0
        %4913 = vmatprep.subr.bf16.mxu0 0
        %4914 = vmatpush1.bf16.msra.mxu0 0
        %4915 = vmatprep.subr.bf16.mxu0 0
        %4916 = vmatpush1.bf16.msra.mxu0 0
        %4917 = vmatprep.subr.bf16.mxu0 0
        %4918 = vmatpush1.bf16.msra.mxu0 0
        %4919 = vmatprep.subr.bf16.mxu0 0
        %4920 = vmatpush1.bf16.msra.mxu0 0
        %4921 = vmatprep.subr.bf16.mxu0 0
        %4922 = vmatpush1.bf16.msra.mxu0 0
        %4923 = vmatprep.subr.bf16.mxu0 0
        %4924 = vmatpush1.bf16.msra.mxu0 0
        %4925 = vmatprep.subr.bf16.mxu0 0
        %4926 = vmatpush1.bf16.msra.mxu0 0
        %4927 = vmatprep.subr.bf16.mxu0 %v4908
        %4928 = vmatpush1.bf16.msra.mxu0 %v4905
        %4929 = vmatprep.subr.bf16.mxu0 0
        %4930 = vmatpush2.bf16.msra.mxu0 0
        %4931 = vmatprep.subr.bf16.mxu0 0
        %4932 = vmatpush2.bf16.msra.mxu0 0
        %4933 = vmatprep.subr.bf16.mxu0 0
        %4934 = vmatpush2.bf16.msra.mxu0 0
        %4935 = vmatprep.subr.bf16.mxu0 0
        %4936 = vmatpush2.bf16.msra.mxu0 0
        %4937 = vmatprep.subr.bf16.mxu0 0
        %4938 = vmatpush2.bf16.msra.mxu0 0
        %4939 = vmatprep.subr.bf16.mxu0 0
        %4940 = vmatpush2.bf16.msra.mxu0 0
        %4941 = vmatprep.subr.bf16.mxu0 0
        %4942 = vmatpush2.bf16.msra.mxu0 0
        %4943 = vmatprep.subr.bf16.mxu0 0
        %4944 = vmatpush2.bf16.msra.mxu0 0
        %4945 = vmatprep.mubr.bf16.mxu0 0
        %4946 = vmatmul.mubr.bf16.gmra.mxu0 %v4902
        %v4947 = vpop.f32.mrf.mxu0
        %v4948 = vadd.f32 0.0, %v4947
        %v4949 = vpop.f32.mrf.mxu0
        %v4950 = vadd.f32 0.0, %v4949
        %v4951 = vpop.f32.mrf.mxu0
        %v4952 = vpop.f32.mrf.mxu0
        %4953 = vdwg.mxu0
        %4954 = vmatprep.subr.bf16.mxu0 0
        %4955 = vmatpush1.bf16.msra.mxu0 0
        %4956 = vmatprep.subr.bf16.mxu0 0
        %4957 = vmatpush1.bf16.msra.mxu0 0
        %4958 = vmatprep.subr.bf16.mxu0 0
        %4959 = vmatpush1.bf16.msra.mxu0 0
        %4960 = vmatprep.subr.bf16.mxu0 0
        %4961 = vmatpush1.bf16.msra.mxu0 0
        %4962 = vmatprep.subr.bf16.mxu0 0
        %4963 = vmatpush1.bf16.msra.mxu0 0
        %4964 = vmatprep.subr.bf16.mxu0 0
        %4965 = vmatpush1.bf16.msra.mxu0 0
        %4966 = vmatprep.subr.bf16.mxu0 0
        %4967 = vmatpush1.bf16.msra.mxu0 0
        %4968 = vmatprep.subr.bf16.mxu0 0
        %4969 = vmatpush1.bf16.msra.mxu0 %v4911
        %4970 = vmatprep.subr.bf16.mxu0 0
        %4971 = vmatpush2.bf16.msra.mxu0 0
        %4972 = vmatprep.subr.bf16.mxu0 0
        %4973 = vmatpush2.bf16.msra.mxu0 0
        %4974 = vmatprep.subr.bf16.mxu0 0
        %4975 = vmatpush2.bf16.msra.mxu0 0
        %4976 = vmatprep.subr.bf16.mxu0 0
        %4977 = vmatpush2.bf16.msra.mxu0 0
        %4978 = vmatprep.subr.bf16.mxu0 0
        %4979 = vmatpush2.bf16.msra.mxu0 0
        %4980 = vmatprep.subr.bf16.mxu0 0
        %4981 = vmatpush2.bf16.msra.mxu0 0
        %4982 = vmatprep.subr.bf16.mxu0 0
        %4983 = vmatpush2.bf16.msra.mxu0 0
        %4984 = vmatprep.subr.bf16.mxu0 0
        %4985 = vmatpush2.bf16.msra.mxu0 0
        %4986 = vmatprep.mubr.bf16.mxu0 0
        %4987 = vmatmul.mubr.bf16.gmra.mxu0 %v4902
        %v4988 = vpop.f32.mrf.mxu0
        %v4989 = vadd.f32 0.0, %v4988
        %v4990 = vpop.f32.mrf.mxu0
        %v4991 = vpop.f32.mrf.mxu0
        %v4992 = vpop.f32.mrf.mxu0
        %4993 = vdwg.mxu0
        %v4994 = vadd.f32 %v4885, %v4948
        %v4995 = vadd.f32 %v4886, %v4950
        %v4996 = vadd.f32 %v4887, %v4989
        %4997 = vrot.lane.b32.xlu0 %v4889, 120
        %v4998 = vpop.permute.xlu0 %4997
        %4999 = vrot.lane.b32.xlu0 %v3159, 104
        %v5000 = vpop.permute.xlu0 %4999
        %5001 = vrot.lane.b32.xlu0 %v3160, 104
        %v5002 = vpop.permute.xlu0 %5001
        %5003 = vrot.lane.b32.xlu0 %v3161, 104
        %v5004 = vpop.permute.xlu0 %5003
        %5005 = vrot.lane.b32.xlu0 %v4562, 104
        %v5006 = vpop.permute.xlu0 %5005
        %v5007 = vsel %vm2229, %v5000, %v5002
        %v5008 = vsel %vm2229, %v5002, %v5004
        %v5009 = vsel %vm2229, %v5004, %v5006
        %v5011 = vsel %vm378, %v4998, 0
        %v5014 = vsel %vm382, %v5007, 0
        %v5017 = vsel %vm382, %v5008, 0
        %v5020 = vsel %vm382, %v5009, 0
        %5022 = vmatprep.subr.bf16.mxu0 0
        %5023 = vmatpush1.bf16.msra.mxu0 0
        %5024 = vmatprep.subr.bf16.mxu0 0
        %5025 = vmatpush1.bf16.msra.mxu0 0
        %5026 = vmatprep.subr.bf16.mxu0 0
        %5027 = vmatpush1.bf16.msra.mxu0 0
        %5028 = vmatprep.subr.bf16.mxu0 0
        %5029 = vmatpush1.bf16.msra.mxu0 0
        %5030 = vmatprep.subr.bf16.mxu0 0
        %5031 = vmatpush1.bf16.msra.mxu0 0
        %5032 = vmatprep.subr.bf16.mxu0 0
        %5033 = vmatpush1.bf16.msra.mxu0 0
        %5034 = vmatprep.subr.bf16.mxu0 0
        %5035 = vmatpush1.bf16.msra.mxu0 0
        %5036 = vmatprep.subr.bf16.mxu0 %v5017
        %5037 = vmatpush1.bf16.msra.mxu0 %v5014
        %5038 = vmatprep.subr.bf16.mxu0 0
        %5039 = vmatpush2.bf16.msra.mxu0 0
        %5040 = vmatprep.subr.bf16.mxu0 0
        %5041 = vmatpush2.bf16.msra.mxu0 0
        %5042 = vmatprep.subr.bf16.mxu0 0
        %5043 = vmatpush2.bf16.msra.mxu0 0
        %5044 = vmatprep.subr.bf16.mxu0 0
        %5045 = vmatpush2.bf16.msra.mxu0 0
        %5046 = vmatprep.subr.bf16.mxu0 0
        %5047 = vmatpush2.bf16.msra.mxu0 0
        %5048 = vmatprep.subr.bf16.mxu0 0
        %5049 = vmatpush2.bf16.msra.mxu0 0
        %5050 = vmatprep.subr.bf16.mxu0 0
        %5051 = vmatpush2.bf16.msra.mxu0 0
        %5052 = vmatprep.subr.bf16.mxu0 0
        %5053 = vmatpush2.bf16.msra.mxu0 0
        %5054 = vmatprep.mubr.bf16.mxu0 0
        %5055 = vmatmul.mubr.bf16.gmra.mxu0 %v5011
        %v5056 = vpop.f32.mrf.mxu0
        %v5057 = vadd.f32 0.0, %v5056
        %v5058 = vpop.f32.mrf.mxu0
        %v5059 = vadd.f32 0.0, %v5058
        %v5060 = vpop.f32.mrf.mxu0
        %v5061 = vpop.f32.mrf.mxu0
        %5062 = vdwg.mxu0
        %5063 = vmatprep.subr.bf16.mxu0 0
        %5064 = vmatpush1.bf16.msra.mxu0 0
        %5065 = vmatprep.subr.bf16.mxu0 0
        %5066 = vmatpush1.bf16.msra.mxu0 0
        %5067 = vmatprep.subr.bf16.mxu0 0
        %5068 = vmatpush1.bf16.msra.mxu0 0
        %5069 = vmatprep.subr.bf16.mxu0 0
        %5070 = vmatpush1.bf16.msra.mxu0 0
        %5071 = vmatprep.subr.bf16.mxu0 0
        %5072 = vmatpush1.bf16.msra.mxu0 0
        %5073 = vmatprep.subr.bf16.mxu0 0
        %5074 = vmatpush1.bf16.msra.mxu0 0
        %5075 = vmatprep.subr.bf16.mxu0 0
        %5076 = vmatpush1.bf16.msra.mxu0 0
        %5077 = vmatprep.subr.bf16.mxu0 0
        %5078 = vmatpush1.bf16.msra.mxu0 %v5020
        %5079 = vmatprep.subr.bf16.mxu0 0
        %5080 = vmatpush2.bf16.msra.mxu0 0
        %5081 = vmatprep.subr.bf16.mxu0 0
        %5082 = vmatpush2.bf16.msra.mxu0 0
        %5083 = vmatprep.subr.bf16.mxu0 0
        %5084 = vmatpush2.bf16.msra.mxu0 0
        %5085 = vmatprep.subr.bf16.mxu0 0
        %5086 = vmatpush2.bf16.msra.mxu0 0
        %5087 = vmatprep.subr.bf16.mxu0 0
        %5088 = vmatpush2.bf16.msra.mxu0 0
        %5089 = vmatprep.subr.bf16.mxu0 0
        %5090 = vmatpush2.bf16.msra.mxu0 0
        %5091 = vmatprep.subr.bf16.mxu0 0
        %5092 = vmatpush2.bf16.msra.mxu0 0
        %5093 = vmatprep.subr.bf16.mxu0 0
        %5094 = vmatpush2.bf16.msra.mxu0 0
        %5095 = vmatprep.mubr.bf16.mxu0 0
        %5096 = vmatmul.mubr.bf16.gmra.mxu0 %v5011
        %v5097 = vpop.f32.mrf.mxu0
        %v5098 = vadd.f32 0.0, %v5097
        %v5099 = vpop.f32.mrf.mxu0
        %v5100 = vpop.f32.mrf.mxu0
        %v5101 = vpop.f32.mrf.mxu0
        %5102 = vdwg.mxu0
        %v5103 = vadd.f32 %v4994, %v5057
        %v5104 = vadd.f32 %v4995, %v5059
        %v5105 = vadd.f32 %v4996, %v5098
        %5106 = vrot.lane.b32.xlu0 %v4889, 112
        %v5107 = vpop.permute.xlu0 %5106
        %5108 = vrot.lane.b32.xlu0 %v3159, 103
        %v5109 = vpop.permute.xlu0 %5108
        %5110 = vrot.lane.b32.xlu0 %v3160, 103
        %v5111 = vpop.permute.xlu0 %5110
        %5112 = vrot.lane.b32.xlu0 %v3161, 103
        %v5113 = vpop.permute.xlu0 %5112
        %5114 = vrot.lane.b32.xlu0 %v4562, 103
        %v5115 = vpop.permute.xlu0 %5114
        %v5116 = vsel %vm2339, %v5109, %v5111
        %v5117 = vsel %vm2339, %v5111, %v5113
        %v5118 = vsel %vm2339, %v5113, %v5115
        %v5120 = vsel %vm378, %v5107, 0
        %v5123 = vsel %vm382, %v5116, 0
        %v5126 = vsel %vm382, %v5117, 0
        %v5129 = vsel %vm382, %v5118, 0
        %5131 = vmatprep.subr.bf16.mxu0 0
        %5132 = vmatpush1.bf16.msra.mxu0 0
        %5133 = vmatprep.subr.bf16.mxu0 0
        %5134 = vmatpush1.bf16.msra.mxu0 0
        %5135 = vmatprep.subr.bf16.mxu0 0
        %5136 = vmatpush1.bf16.msra.mxu0 0
        %5137 = vmatprep.subr.bf16.mxu0 0
        %5138 = vmatpush1.bf16.msra.mxu0 0
        %5139 = vmatprep.subr.bf16.mxu0 0
        %5140 = vmatpush1.bf16.msra.mxu0 0
        %5141 = vmatprep.subr.bf16.mxu0 0
        %5142 = vmatpush1.bf16.msra.mxu0 0
        %5143 = vmatprep.subr.bf16.mxu0 0
        %5144 = vmatpush1.bf16.msra.mxu0 0
        %5145 = vmatprep.subr.bf16.mxu0 %v5126
        %5146 = vmatpush1.bf16.msra.mxu0 %v5123
        %5147 = vmatprep.subr.bf16.mxu0 0
        %5148 = vmatpush2.bf16.msra.mxu0 0
        %5149 = vmatprep.subr.bf16.mxu0 0
        %5150 = vmatpush2.bf16.msra.mxu0 0
        %5151 = vmatprep.subr.bf16.mxu0 0
        %5152 = vmatpush2.bf16.msra.mxu0 0
        %5153 = vmatprep.subr.bf16.mxu0 0
        %5154 = vmatpush2.bf16.msra.mxu0 0
        %5155 = vmatprep.subr.bf16.mxu0 0
        %5156 = vmatpush2.bf16.msra.mxu0 0
        %5157 = vmatprep.subr.bf16.mxu0 0
        %5158 = vmatpush2.bf16.msra.mxu0 0
        %5159 = vmatprep.subr.bf16.mxu0 0
        %5160 = vmatpush2.bf16.msra.mxu0 0
        %5161 = vmatprep.subr.bf16.mxu0 0
        %5162 = vmatpush2.bf16.msra.mxu0 0
        %5163 = vmatprep.mubr.bf16.mxu0 0
        %5164 = vmatmul.mubr.bf16.gmra.mxu0 %v5120
        %v5165 = vpop.f32.mrf.mxu0
        %v5166 = vadd.f32 0.0, %v5165
        %v5167 = vpop.f32.mrf.mxu0
        %v5168 = vadd.f32 0.0, %v5167
        %v5169 = vpop.f32.mrf.mxu0
        %v5170 = vpop.f32.mrf.mxu0
        %5171 = vdwg.mxu0
        %5172 = vmatprep.subr.bf16.mxu0 0
        %5173 = vmatpush1.bf16.msra.mxu0 0
        %5174 = vmatprep.subr.bf16.mxu0 0
        %5175 = vmatpush1.bf16.msra.mxu0 0
        %5176 = vmatprep.subr.bf16.mxu0 0
        %5177 = vmatpush1.bf16.msra.mxu0 0
        %5178 = vmatprep.subr.bf16.mxu0 0
        %5179 = vmatpush1.bf16.msra.mxu0 0
        %5180 = vmatprep.subr.bf16.mxu0 0
        %5181 = vmatpush1.bf16.msra.mxu0 0
        %5182 = vmatprep.subr.bf16.mxu0 0
        %5183 = vmatpush1.bf16.msra.mxu0 0
        %5184 = vmatprep.subr.bf16.mxu0 0
        %5185 = vmatpush1.bf16.msra.mxu0 0
        %5186 = vmatprep.subr.bf16.mxu0 0
        %5187 = vmatpush1.bf16.msra.mxu0 %v5129
        %5188 = vmatprep.subr.bf16.mxu0 0
        %5189 = vmatpush2.bf16.msra.mxu0 0
        %5190 = vmatprep.subr.bf16.mxu0 0
        %5191 = vmatpush2.bf16.msra.mxu0 0
        %5192 = vmatprep.subr.bf16.mxu0 0
        %5193 = vmatpush2.bf16.msra.mxu0 0
        %5194 = vmatprep.subr.bf16.mxu0 0
        %5195 = vmatpush2.bf16.msra.mxu0 0
        %5196 = vmatprep.subr.bf16.mxu0 0
        %5197 = vmatpush2.bf16.msra.mxu0 0
        %5198 = vmatprep.subr.bf16.mxu0 0
        %5199 = vmatpush2.bf16.msra.mxu0 0
        %5200 = vmatprep.subr.bf16.mxu0 0
        %5201 = vmatpush2.bf16.msra.mxu0 0
        %5202 = vmatprep.subr.bf16.mxu0 0
        %5203 = vmatpush2.bf16.msra.mxu0 0
        %5204 = vmatprep.mubr.bf16.mxu0 0
        %5205 = vmatmul.mubr.bf16.gmra.mxu0 %v5120
        %v5206 = vpop.f32.mrf.mxu0
        %v5207 = vadd.f32 0.0, %v5206
        %v5208 = vpop.f32.mrf.mxu0
        %v5209 = vpop.f32.mrf.mxu0
        %v5210 = vpop.f32.mrf.mxu0
        %5211 = vdwg.mxu0
        %v5212 = vadd.f32 %v5103, %v5166
        %v5213 = vadd.f32 %v5104, %v5168
        %v5214 = vadd.f32 %v5105, %v5207
        %5215 = vrot.lane.b32.xlu0 %v4889, 104
        %v5216 = vpop.permute.xlu0 %5215
        %5217 = vrot.lane.b32.xlu0 %v3159, 102
        %v5218 = vpop.permute.xlu0 %5217
        %5219 = vrot.lane.b32.xlu0 %v3160, 102
        %v5220 = vpop.permute.xlu0 %5219
        %5221 = vrot.lane.b32.xlu0 %v3161, 102
        %v5222 = vpop.permute.xlu0 %5221
        %5223 = vrot.lane.b32.xlu0 %v4562, 102
        %v5224 = vpop.permute.xlu0 %5223
        %v5225 = vsel %vm2449, %v5218, %v5220
        %v5226 = vsel %vm2449, %v5220, %v5222
        %v5227 = vsel %vm2449, %v5222, %v5224
        %v5229 = vsel %vm378, %v5216, 0
        %v5232 = vsel %vm382, %v5225, 0
        %v5235 = vsel %vm382, %v5226, 0
        %v5238 = vsel %vm382, %v5227, 0
        %5240 = vmatprep.subr.bf16.mxu0 0
        %5241 = vmatpush1.bf16.msra.mxu0 0
        %5242 = vmatprep.subr.bf16.mxu0 0
        %5243 = vmatpush1.bf16.msra.mxu0 0
        %5244 = vmatprep.subr.bf16.mxu0 0
        %5245 = vmatpush1.bf16.msra.mxu0 0
        %5246 = vmatprep.subr.bf16.mxu0 0
        %5247 = vmatpush1.bf16.msra.mxu0 0
        %5248 = vmatprep.subr.bf16.mxu0 0
        %5249 = vmatpush1.bf16.msra.mxu0 0
        %5250 = vmatprep.subr.bf16.mxu0 0
        %5251 = vmatpush1.bf16.msra.mxu0 0
        %5252 = vmatprep.subr.bf16.mxu0 0
        %5253 = vmatpush1.bf16.msra.mxu0 0
        %5254 = vmatprep.subr.bf16.mxu0 %v5235
        %5255 = vmatpush1.bf16.msra.mxu0 %v5232
        %5256 = vmatprep.subr.bf16.mxu0 0
        %5257 = vmatpush2.bf16.msra.mxu0 0
        %5258 = vmatprep.subr.bf16.mxu0 0
        %5259 = vmatpush2.bf16.msra.mxu0 0
        %5260 = vmatprep.subr.bf16.mxu0 0
        %5261 = vmatpush2.bf16.msra.mxu0 0
        %5262 = vmatprep.subr.bf16.mxu0 0
        %5263 = vmatpush2.bf16.msra.mxu0 0
        %5264 = vmatprep.subr.bf16.mxu0 0
        %5265 = vmatpush2.bf16.msra.mxu0 0
        %5266 = vmatprep.subr.bf16.mxu0 0
        %5267 = vmatpush2.bf16.msra.mxu0 0
        %5268 = vmatprep.subr.bf16.mxu0 0
        %5269 = vmatpush2.bf16.msra.mxu0 0
        %5270 = vmatprep.subr.bf16.mxu0 0
        %5271 = vmatpush2.bf16.msra.mxu0 0
        %5272 = vmatprep.mubr.bf16.mxu0 0
        %5273 = vmatmul.mubr.bf16.gmra.mxu0 %v5229
        %v5274 = vpop.f32.mrf.mxu0
        %v5275 = vadd.f32 0.0, %v5274
        %v5276 = vpop.f32.mrf.mxu0
        %v5277 = vadd.f32 0.0, %v5276
        %v5278 = vpop.f32.mrf.mxu0
        %v5279 = vpop.f32.mrf.mxu0
        %5280 = vdwg.mxu0
        %5281 = vmatprep.subr.bf16.mxu0 0
        %5282 = vmatpush1.bf16.msra.mxu0 0
        %5283 = vmatprep.subr.bf16.mxu0 0
        %5284 = vmatpush1.bf16.msra.mxu0 0
        %5285 = vmatprep.subr.bf16.mxu0 0
        %5286 = vmatpush1.bf16.msra.mxu0 0
        %5287 = vmatprep.subr.bf16.mxu0 0
        %5288 = vmatpush1.bf16.msra.mxu0 0
        %5289 = vmatprep.subr.bf16.mxu0 0
        %5290 = vmatpush1.bf16.msra.mxu0 0
        %5291 = vmatprep.subr.bf16.mxu0 0
        %5292 = vmatpush1.bf16.msra.mxu0 0
        %5293 = vmatprep.subr.bf16.mxu0 0
        %5294 = vmatpush1.bf16.msra.mxu0 0
        %5295 = vmatprep.subr.bf16.mxu0 0
        %5296 = vmatpush1.bf16.msra.mxu0 %v5238
        %5297 = vmatprep.subr.bf16.mxu0 0
        %5298 = vmatpush2.bf16.msra.mxu0 0
        %5299 = vmatprep.subr.bf16.mxu0 0
        %5300 = vmatpush2.bf16.msra.mxu0 0
        %5301 = vmatprep.subr.bf16.mxu0 0
        %5302 = vmatpush2.bf16.msra.mxu0 0
        %5303 = vmatprep.subr.bf16.mxu0 0
        %5304 = vmatpush2.bf16.msra.mxu0 0
        %5305 = vmatprep.subr.bf16.mxu0 0
        %5306 = vmatpush2.bf16.msra.mxu0 0
        %5307 = vmatprep.subr.bf16.mxu0 0
        %5308 = vmatpush2.bf16.msra.mxu0 0
        %5309 = vmatprep.subr.bf16.mxu0 0
        %5310 = vmatpush2.bf16.msra.mxu0 0
        %5311 = vmatprep.subr.bf16.mxu0 0
        %5312 = vmatpush2.bf16.msra.mxu0 0
        %5313 = vmatprep.mubr.bf16.mxu0 0
        %5314 = vmatmul.mubr.bf16.gmra.mxu0 %v5229
        %v5315 = vpop.f32.mrf.mxu0
        %v5316 = vadd.f32 0.0, %v5315
        %v5317 = vpop.f32.mrf.mxu0
        %v5318 = vpop.f32.mrf.mxu0
        %v5319 = vpop.f32.mrf.mxu0
        %5320 = vdwg.mxu0
        %v5321 = vadd.f32 %v5212, %v5275
        %v5322 = vadd.f32 %v5213, %v5277
        %v5323 = vadd.f32 %v5214, %v5316
        %5324 = vrot.lane.b32.xlu0 %v4889, 96
        %v5325 = vpop.permute.xlu0 %5324
        %5326 = vrot.lane.b32.xlu0 %v3159, 82
        %v5327 = vpop.permute.xlu0 %5326
        %5328 = vrot.lane.b32.xlu0 %v3160, 82
        %v5329 = vpop.permute.xlu0 %5328
        %5330 = vrot.lane.b32.xlu0 %v3161, 82
        %v5331 = vpop.permute.xlu0 %5330
        %5332 = vrot.lane.b32.xlu0 %v4562, 82
        %v5333 = vpop.permute.xlu0 %5332
        %v5334 = vsel %vm2559, %v5327, %v5329
        %v5335 = vsel %vm2559, %v5329, %v5331
        %v5336 = vsel %vm2559, %v5331, %v5333
        %v5338 = vsel %vm378, %v5325, 0
        %v5341 = vsel %vm382, %v5334, 0
        %v5344 = vsel %vm382, %v5335, 0
        %v5347 = vsel %vm382, %v5336, 0
        %5349 = vmatprep.subr.bf16.mxu0 0
        %5350 = vmatpush1.bf16.msra.mxu0 0
        %5351 = vmatprep.subr.bf16.mxu0 0
        %5352 = vmatpush1.bf16.msra.mxu0 0
        %5353 = vmatprep.subr.bf16.mxu0 0
        %5354 = vmatpush1.bf16.msra.mxu0 0
        %5355 = vmatprep.subr.bf16.mxu0 0
        %5356 = vmatpush1.bf16.msra.mxu0 0
        %5357 = vmatprep.subr.bf16.mxu0 0
        %5358 = vmatpush1.bf16.msra.mxu0 0
        %5359 = vmatprep.subr.bf16.mxu0 0
        %5360 = vmatpush1.bf16.msra.mxu0 0
        %5361 = vmatprep.subr.bf16.mxu0 0
        %5362 = vmatpush1.bf16.msra.mxu0 0
        %5363 = vmatprep.subr.bf16.mxu0 %v5344
        %5364 = vmatpush1.bf16.msra.mxu0 %v5341
        %5365 = vmatprep.subr.bf16.mxu0 0
        %5366 = vmatpush2.bf16.msra.mxu0 0
        %5367 = vmatprep.subr.bf16.mxu0 0
        %5368 = vmatpush2.bf16.msra.mxu0 0
        %5369 = vmatprep.subr.bf16.mxu0 0
        %5370 = vmatpush2.bf16.msra.mxu0 0
        %5371 = vmatprep.subr.bf16.mxu0 0
        %5372 = vmatpush2.bf16.msra.mxu0 0
        %5373 = vmatprep.subr.bf16.mxu0 0
        %5374 = vmatpush2.bf16.msra.mxu0 0
        %5375 = vmatprep.subr.bf16.mxu0 0
        %5376 = vmatpush2.bf16.msra.mxu0 0
        %5377 = vmatprep.subr.bf16.mxu0 0
        %5378 = vmatpush2.bf16.msra.mxu0 0
        %5379 = vmatprep.subr.bf16.mxu0 0
        %5380 = vmatpush2.bf16.msra.mxu0 0
        %5381 = vmatprep.mubr.bf16.mxu0 0
        %5382 = vmatmul.mubr.bf16.gmra.mxu0 %v5338
        %v5383 = vpop.f32.mrf.mxu0
        %v5384 = vadd.f32 0.0, %v5383
        %v5385 = vpop.f32.mrf.mxu0
        %v5386 = vadd.f32 0.0, %v5385
        %v5387 = vpop.f32.mrf.mxu0
        %v5388 = vpop.f32.mrf.mxu0
        %5389 = vdwg.mxu0
        %5390 = vmatprep.subr.bf16.mxu0 0
        %5391 = vmatpush1.bf16.msra.mxu0 0
        %5392 = vmatprep.subr.bf16.mxu0 0
        %5393 = vmatpush1.bf16.msra.mxu0 0
        %5394 = vmatprep.subr.bf16.mxu0 0
        %5395 = vmatpush1.bf16.msra.mxu0 0
        %5396 = vmatprep.subr.bf16.mxu0 0
        %5397 = vmatpush1.bf16.msra.mxu0 0
        %5398 = vmatprep.subr.bf16.mxu0 0
        %5399 = vmatpush1.bf16.msra.mxu0 0
        %5400 = vmatprep.subr.bf16.mxu0 0
        %5401 = vmatpush1.bf16.msra.mxu0 0
        %5402 = vmatprep.subr.bf16.mxu0 0
        %5403 = vmatpush1.bf16.msra.mxu0 0
        %5404 = vmatprep.subr.bf16.mxu0 0
        %5405 = vmatpush1.bf16.msra.mxu0 %v5347
        %5406 = vmatprep.subr.bf16.mxu0 0
        %5407 = vmatpush2.bf16.msra.mxu0 0
        %5408 = vmatprep.subr.bf16.mxu0 0
        %5409 = vmatpush2.bf16.msra.mxu0 0
        %5410 = vmatprep.subr.bf16.mxu0 0
        %5411 = vmatpush2.bf16.msra.mxu0 0
        %5412 = vmatprep.subr.bf16.mxu0 0
        %5413 = vmatpush2.bf16.msra.mxu0 0
        %5414 = vmatprep.subr.bf16.mxu0 0
        %5415 = vmatpush2.bf16.msra.mxu0 0
        %5416 = vmatprep.subr.bf16.mxu0 0
        %5417 = vmatpush2.bf16.msra.mxu0 0
        %5418 = vmatprep.subr.bf16.mxu0 0
        %5419 = vmatpush2.bf16.msra.mxu0 0
        %5420 = vmatprep.subr.bf16.mxu0 0
        %5421 = vmatpush2.bf16.msra.mxu0 0
        %5422 = vmatprep.mubr.bf16.mxu0 0
        %5423 = vmatmul.mubr.bf16.gmra.mxu0 %v5338
        %v5424 = vpop.f32.mrf.mxu0
        %v5425 = vadd.f32 0.0, %v5424
        %v5426 = vpop.f32.mrf.mxu0
        %v5427 = vpop.f32.mrf.mxu0
        %v5428 = vpop.f32.mrf.mxu0
        %5429 = vdwg.mxu0
        %v5430 = vadd.f32 %v5321, %v5384
        %v5431 = vadd.f32 %v5322, %v5386
        %v5432 = vadd.f32 %v5323, %v5425
        %5433 = vrot.lane.b32.xlu0 %v4889, 88
        %v5434 = vpop.permute.xlu0 %5433
        %5435 = vrot.lane.b32.xlu0 %v3159, 81
        %v5436 = vpop.permute.xlu0 %5435
        %5437 = vrot.lane.b32.xlu0 %v3160, 81
        %v5438 = vpop.permute.xlu0 %5437
        %5439 = vrot.lane.b32.xlu0 %v3161, 81
        %v5440 = vpop.permute.xlu0 %5439
        %5441 = vrot.lane.b32.xlu0 %v4562, 81
        %v5442 = vpop.permute.xlu0 %5441
        %v5443 = vsel %vm2669, %v5436, %v5438
        %v5444 = vsel %vm2669, %v5438, %v5440
        %v5445 = vsel %vm2669, %v5440, %v5442
        %v5447 = vsel %vm378, %v5434, 0
        %v5450 = vsel %vm382, %v5443, 0
        %v5453 = vsel %vm382, %v5444, 0
        %v5456 = vsel %vm382, %v5445, 0
        %5458 = vmatprep.subr.bf16.mxu0 0
        %5459 = vmatpush1.bf16.msra.mxu0 0
        %5460 = vmatprep.subr.bf16.mxu0 0
        %5461 = vmatpush1.bf16.msra.mxu0 0
        %5462 = vmatprep.subr.bf16.mxu0 0
        %5463 = vmatpush1.bf16.msra.mxu0 0
        %5464 = vmatprep.subr.bf16.mxu0 0
        %5465 = vmatpush1.bf16.msra.mxu0 0
        %5466 = vmatprep.subr.bf16.mxu0 0
        %5467 = vmatpush1.bf16.msra.mxu0 0
        %5468 = vmatprep.subr.bf16.mxu0 0
        %5469 = vmatpush1.bf16.msra.mxu0 0
        %5470 = vmatprep.subr.bf16.mxu0 0
        %5471 = vmatpush1.bf16.msra.mxu0 0
        %5472 = vmatprep.subr.bf16.mxu0 %v5453
        %5473 = vmatpush1.bf16.msra.mxu0 %v5450
        %5474 = vmatprep.subr.bf16.mxu0 0
        %5475 = vmatpush2.bf16.msra.mxu0 0
        %5476 = vmatprep.subr.bf16.mxu0 0
        %5477 = vmatpush2.bf16.msra.mxu0 0
        %5478 = vmatprep.subr.bf16.mxu0 0
        %5479 = vmatpush2.bf16.msra.mxu0 0
        %5480 = vmatprep.subr.bf16.mxu0 0
        %5481 = vmatpush2.bf16.msra.mxu0 0
        %5482 = vmatprep.subr.bf16.mxu0 0
        %5483 = vmatpush2.bf16.msra.mxu0 0
        %5484 = vmatprep.subr.bf16.mxu0 0
        %5485 = vmatpush2.bf16.msra.mxu0 0
        %5486 = vmatprep.subr.bf16.mxu0 0
        %5487 = vmatpush2.bf16.msra.mxu0 0
        %5488 = vmatprep.subr.bf16.mxu0 0
        %5489 = vmatpush2.bf16.msra.mxu0 0
        %5490 = vmatprep.mubr.bf16.mxu0 0
        %5491 = vmatmul.mubr.bf16.gmra.mxu0 %v5447
        %v5492 = vpop.f32.mrf.mxu0
        %v5493 = vadd.f32 0.0, %v5492
        %v5494 = vpop.f32.mrf.mxu0
        %v5495 = vadd.f32 0.0, %v5494
        %v5496 = vpop.f32.mrf.mxu0
        %v5497 = vpop.f32.mrf.mxu0
        %5498 = vdwg.mxu0
        %5499 = vmatprep.subr.bf16.mxu0 0
        %5500 = vmatpush1.bf16.msra.mxu0 0
        %5501 = vmatprep.subr.bf16.mxu0 0
        %5502 = vmatpush1.bf16.msra.mxu0 0
        %5503 = vmatprep.subr.bf16.mxu0 0
        %5504 = vmatpush1.bf16.msra.mxu0 0
        %5505 = vmatprep.subr.bf16.mxu0 0
        %5506 = vmatpush1.bf16.msra.mxu0 0
        %5507 = vmatprep.subr.bf16.mxu0 0
        %5508 = vmatpush1.bf16.msra.mxu0 0
        %5509 = vmatprep.subr.bf16.mxu0 0
        %5510 = vmatpush1.bf16.msra.mxu0 0
        %5511 = vmatprep.subr.bf16.mxu0 0
        %5512 = vmatpush1.bf16.msra.mxu0 0
        %5513 = vmatprep.subr.bf16.mxu0 0
        %5514 = vmatpush1.bf16.msra.mxu0 %v5456
        %5515 = vmatprep.subr.bf16.mxu0 0
        %5516 = vmatpush2.bf16.msra.mxu0 0
        %5517 = vmatprep.subr.bf16.mxu0 0
        %5518 = vmatpush2.bf16.msra.mxu0 0
        %5519 = vmatprep.subr.bf16.mxu0 0
        %5520 = vmatpush2.bf16.msra.mxu0 0
        %5521 = vmatprep.subr.bf16.mxu0 0
        %5522 = vmatpush2.bf16.msra.mxu0 0
        %5523 = vmatprep.subr.bf16.mxu0 0
        %5524 = vmatpush2.bf16.msra.mxu0 0
        %5525 = vmatprep.subr.bf16.mxu0 0
        %5526 = vmatpush2.bf16.msra.mxu0 0
        %5527 = vmatprep.subr.bf16.mxu0 0
        %5528 = vmatpush2.bf16.msra.mxu0 0
        %5529 = vmatprep.subr.bf16.mxu0 0
        %5530 = vmatpush2.bf16.msra.mxu0 0
        %5531 = vmatprep.mubr.bf16.mxu0 0
        %5532 = vmatmul.mubr.bf16.gmra.mxu0 %v5447
        %v5533 = vpop.f32.mrf.mxu0
        %v5534 = vadd.f32 0.0, %v5533
        %v5535 = vpop.f32.mrf.mxu0
        %v5536 = vpop.f32.mrf.mxu0
        %v5537 = vpop.f32.mrf.mxu0
        %5538 = vdwg.mxu0
        %v5539 = vadd.f32 %v5430, %v5493
        %v5540 = vadd.f32 %v5431, %v5495
        %v5541 = vadd.f32 %v5432, %v5534
        %5542 = vrot.lane.b32.xlu0 %v4889, 80
        %v5543 = vpop.permute.xlu0 %5542
        %5544 = vrot.lane.b32.xlu0 %v3159, 80
        %v5545 = vpop.permute.xlu0 %5544
        %5546 = vrot.lane.b32.xlu0 %v3160, 80
        %v5547 = vpop.permute.xlu0 %5546
        %5548 = vrot.lane.b32.xlu0 %v3161, 80
        %v5549 = vpop.permute.xlu0 %5548
        %5550 = vrot.lane.b32.xlu0 %v4562, 80
        %v5551 = vpop.permute.xlu0 %5550
        %v5552 = vsel %vm2779, %v5545, %v5547
        %v5553 = vsel %vm2779, %v5547, %v5549
        %v5554 = vsel %vm2779, %v5549, %v5551
        %v5556 = vsel %vm378, %v5543, 0
        %v5559 = vsel %vm382, %v5552, 0
        %v5562 = vsel %vm382, %v5553, 0
        %v5565 = vsel %vm382, %v5554, 0
        %5567 = vmatprep.subr.bf16.mxu0 0
        %5568 = vmatpush1.bf16.msra.mxu0 0
        %5569 = vmatprep.subr.bf16.mxu0 0
        %5570 = vmatpush1.bf16.msra.mxu0 0
        %5571 = vmatprep.subr.bf16.mxu0 0
        %5572 = vmatpush1.bf16.msra.mxu0 0
        %5573 = vmatprep.subr.bf16.mxu0 0
        %5574 = vmatpush1.bf16.msra.mxu0 0
        %5575 = vmatprep.subr.bf16.mxu0 0
        %5576 = vmatpush1.bf16.msra.mxu0 0
        %5577 = vmatprep.subr.bf16.mxu0 0
        %5578 = vmatpush1.bf16.msra.mxu0 0
        %5579 = vmatprep.subr.bf16.mxu0 0
        %5580 = vmatpush1.bf16.msra.mxu0 0
        %5581 = vmatprep.subr.bf16.mxu0 %v5562
        %5582 = vmatpush1.bf16.msra.mxu0 %v5559
        %5583 = vmatprep.subr.bf16.mxu0 0
        %5584 = vmatpush2.bf16.msra.mxu0 0
        %5585 = vmatprep.subr.bf16.mxu0 0
        %5586 = vmatpush2.bf16.msra.mxu0 0
        %5587 = vmatprep.subr.bf16.mxu0 0
        %5588 = vmatpush2.bf16.msra.mxu0 0
        %5589 = vmatprep.subr.bf16.mxu0 0
        %5590 = vmatpush2.bf16.msra.mxu0 0
        %5591 = vmatprep.subr.bf16.mxu0 0
        %5592 = vmatpush2.bf16.msra.mxu0 0
        %5593 = vmatprep.subr.bf16.mxu0 0
        %5594 = vmatpush2.bf16.msra.mxu0 0
        %5595 = vmatprep.subr.bf16.mxu0 0
        %5596 = vmatpush2.bf16.msra.mxu0 0
        %5597 = vmatprep.subr.bf16.mxu0 0
        %5598 = vmatpush2.bf16.msra.mxu0 0
        %5599 = vmatprep.mubr.bf16.mxu0 0
        %5600 = vmatmul.mubr.bf16.gmra.mxu0 %v5556
        %v5601 = vpop.f32.mrf.mxu0
        %v5602 = vadd.f32 0.0, %v5601
        %v5603 = vpop.f32.mrf.mxu0
        %v5604 = vadd.f32 0.0, %v5603
        %v5605 = vpop.f32.mrf.mxu0
        %v5606 = vpop.f32.mrf.mxu0
        %5607 = vdwg.mxu0
        %5608 = vmatprep.subr.bf16.mxu0 0
        %5609 = vmatpush1.bf16.msra.mxu0 0
        %5610 = vmatprep.subr.bf16.mxu0 0
        %5611 = vmatpush1.bf16.msra.mxu0 0
        %5612 = vmatprep.subr.bf16.mxu0 0
        %5613 = vmatpush1.bf16.msra.mxu0 0
        %5614 = vmatprep.subr.bf16.mxu0 0
        %5615 = vmatpush1.bf16.msra.mxu0 0
        %5616 = vmatprep.subr.bf16.mxu0 0
        %5617 = vmatpush1.bf16.msra.mxu0 0
        %5618 = vmatprep.subr.bf16.mxu0 0
        %5619 = vmatpush1.bf16.msra.mxu0 0
        %5620 = vmatprep.subr.bf16.mxu0 0
        %5621 = vmatpush1.bf16.msra.mxu0 0
        %5622 = vmatprep.subr.bf16.mxu0 0
        %5623 = vmatpush1.bf16.msra.mxu0 %v5565
        %5624 = vmatprep.subr.bf16.mxu0 0
        %5625 = vmatpush2.bf16.msra.mxu0 0
        %5626 = vmatprep.subr.bf16.mxu0 0
        %5627 = vmatpush2.bf16.msra.mxu0 0
        %5628 = vmatprep.subr.bf16.mxu0 0
        %5629 = vmatpush2.bf16.msra.mxu0 0
        %5630 = vmatprep.subr.bf16.mxu0 0
        %5631 = vmatpush2.bf16.msra.mxu0 0
        %5632 = vmatprep.subr.bf16.mxu0 0
        %5633 = vmatpush2.bf16.msra.mxu0 0
        %5634 = vmatprep.subr.bf16.mxu0 0
        %5635 = vmatpush2.bf16.msra.mxu0 0
        %5636 = vmatprep.subr.bf16.mxu0 0
        %5637 = vmatpush2.bf16.msra.mxu0 0
        %5638 = vmatprep.subr.bf16.mxu0 0
        %5639 = vmatpush2.bf16.msra.mxu0 0
        %5640 = vmatprep.mubr.bf16.mxu0 0
        %5641 = vmatmul.mubr.bf16.gmra.mxu0 %v5556
        %v5642 = vpop.f32.mrf.mxu0
        %v5643 = vadd.f32 0.0, %v5642
        %v5644 = vpop.f32.mrf.mxu0
        %v5645 = vpop.f32.mrf.mxu0
        %v5646 = vpop.f32.mrf.mxu0
        %5647 = vdwg.mxu0
        %v5648 = vadd.f32 %v5539, %v5602
        %v5649 = vadd.f32 %v5540, %v5604
        %v5650 = vadd.f32 %v5541, %v5643
        %5651 = vrot.lane.b32.xlu0 %v4889, 72
        %v5652 = vpop.permute.xlu0 %5651
        %5653 = vrot.lane.b32.xlu0 %v3159, 79
        %v5654 = vpop.permute.xlu0 %5653
        %5655 = vrot.lane.b32.xlu0 %v3160, 79
        %v5656 = vpop.permute.xlu0 %5655
        %5657 = vrot.lane.b32.xlu0 %v3161, 79
        %v5658 = vpop.permute.xlu0 %5657
        %5659 = vrot.lane.b32.xlu0 %v4562, 79
        %v5660 = vpop.permute.xlu0 %5659
        %v5661 = vsel %vm2889, %v5654, %v5656
        %v5662 = vsel %vm2889, %v5656, %v5658
        %v5663 = vsel %vm2889, %v5658, %v5660
        %v5665 = vsel %vm378, %v5652, 0
        %v5668 = vsel %vm382, %v5661, 0
        %v5671 = vsel %vm382, %v5662, 0
        %v5674 = vsel %vm382, %v5663, 0
        %5676 = vmatprep.subr.bf16.mxu0 0
        %5677 = vmatpush1.bf16.msra.mxu0 0
        %5678 = vmatprep.subr.bf16.mxu0 0
        %5679 = vmatpush1.bf16.msra.mxu0 0
        %5680 = vmatprep.subr.bf16.mxu0 0
        %5681 = vmatpush1.bf16.msra.mxu0 0
        %5682 = vmatprep.subr.bf16.mxu0 0
        %5683 = vmatpush1.bf16.msra.mxu0 0
        %5684 = vmatprep.subr.bf16.mxu0 0
        %5685 = vmatpush1.bf16.msra.mxu0 0
        %5686 = vmatprep.subr.bf16.mxu0 0
        %5687 = vmatpush1.bf16.msra.mxu0 0
        %5688 = vmatprep.subr.bf16.mxu0 0
        %5689 = vmatpush1.bf16.msra.mxu0 0
        %5690 = vmatprep.subr.bf16.mxu0 %v5671
        %5691 = vmatpush1.bf16.msra.mxu0 %v5668
        %5692 = vmatprep.subr.bf16.mxu0 0
        %5693 = vmatpush2.bf16.msra.mxu0 0
        %5694 = vmatprep.subr.bf16.mxu0 0
        %5695 = vmatpush2.bf16.msra.mxu0 0
        %5696 = vmatprep.subr.bf16.mxu0 0
        %5697 = vmatpush2.bf16.msra.mxu0 0
        %5698 = vmatprep.subr.bf16.mxu0 0
        %5699 = vmatpush2.bf16.msra.mxu0 0
        %5700 = vmatprep.subr.bf16.mxu0 0
        %5701 = vmatpush2.bf16.msra.mxu0 0
        %5702 = vmatprep.subr.bf16.mxu0 0
        %5703 = vmatpush2.bf16.msra.mxu0 0
        %5704 = vmatprep.subr.bf16.mxu0 0
        %5705 = vmatpush2.bf16.msra.mxu0 0
        %5706 = vmatprep.subr.bf16.mxu0 0
        %5707 = vmatpush2.bf16.msra.mxu0 0
        %5708 = vmatprep.mubr.bf16.mxu0 0
        %5709 = vmatmul.mubr.bf16.gmra.mxu0 %v5665
        %v5710 = vpop.f32.mrf.mxu0
        %v5711 = vadd.f32 0.0, %v5710
        %v5712 = vpop.f32.mrf.mxu0
        %v5713 = vadd.f32 0.0, %v5712
        %v5714 = vpop.f32.mrf.mxu0
        %v5715 = vpop.f32.mrf.mxu0
        %5716 = vdwg.mxu0
        %5717 = vmatprep.subr.bf16.mxu0 0
        %5718 = vmatpush1.bf16.msra.mxu0 0
        %5719 = vmatprep.subr.bf16.mxu0 0
        %5720 = vmatpush1.bf16.msra.mxu0 0
        %5721 = vmatprep.subr.bf16.mxu0 0
        %5722 = vmatpush1.bf16.msra.mxu0 0
        %5723 = vmatprep.subr.bf16.mxu0 0
        %5724 = vmatpush1.bf16.msra.mxu0 0
        %5725 = vmatprep.subr.bf16.mxu0 0
        %5726 = vmatpush1.bf16.msra.mxu0 0
        %5727 = vmatprep.subr.bf16.mxu0 0
        %5728 = vmatpush1.bf16.msra.mxu0 0
        %5729 = vmatprep.subr.bf16.mxu0 0
        %5730 = vmatpush1.bf16.msra.mxu0 0
        %5731 = vmatprep.subr.bf16.mxu0 0
        %5732 = vmatpush1.bf16.msra.mxu0 %v5674
        %5733 = vmatprep.subr.bf16.mxu0 0
        %5734 = vmatpush2.bf16.msra.mxu0 0
        %5735 = vmatprep.subr.bf16.mxu0 0
        %5736 = vmatpush2.bf16.msra.mxu0 0
        %5737 = vmatprep.subr.bf16.mxu0 0
        %5738 = vmatpush2.bf16.msra.mxu0 0
        %5739 = vmatprep.subr.bf16.mxu0 0
        %5740 = vmatpush2.bf16.msra.mxu0 0
        %5741 = vmatprep.subr.bf16.mxu0 0
        %5742 = vmatpush2.bf16.msra.mxu0 0
        %5743 = vmatprep.subr.bf16.mxu0 0
        %5744 = vmatpush2.bf16.msra.mxu0 0
        %5745 = vmatprep.subr.bf16.mxu0 0
        %5746 = vmatpush2.bf16.msra.mxu0 0
        %5747 = vmatprep.subr.bf16.mxu0 0
        %5748 = vmatpush2.bf16.msra.mxu0 0
        %5749 = vmatprep.mubr.bf16.mxu0 0
        %5750 = vmatmul.mubr.bf16.gmra.mxu0 %v5665
        %v5751 = vpop.f32.mrf.mxu0
        %v5752 = vadd.f32 0.0, %v5751
        %v5753 = vpop.f32.mrf.mxu0
        %v5754 = vpop.f32.mrf.mxu0
        %v5755 = vpop.f32.mrf.mxu0
        %5756 = vdwg.mxu0
        %v5757 = vadd.f32 %v5648, %v5711
        %v5758 = vadd.f32 %v5649, %v5713
        %v5759 = vadd.f32 %v5650, %v5752
        %5760 = vrot.lane.b32.xlu0 %v4889, 64
        %v5761 = vpop.permute.xlu0 %5760
        %5762 = vrot.lane.b32.xlu0 %v3159, 78
        %v5763 = vpop.permute.xlu0 %5762
        %5764 = vrot.lane.b32.xlu0 %v3160, 78
        %v5765 = vpop.permute.xlu0 %5764
        %5766 = vrot.lane.b32.xlu0 %v3161, 78
        %v5767 = vpop.permute.xlu0 %5766
        %5768 = vrot.lane.b32.xlu0 %v4562, 78
        %v5769 = vpop.permute.xlu0 %5768
        %v5770 = vsel %vm2999, %v5763, %v5765
        %v5771 = vsel %vm2999, %v5765, %v5767
        %v5772 = vsel %vm2999, %v5767, %v5769
        %v5774 = vsel %vm378, %v5761, 0
        %v5777 = vsel %vm382, %v5770, 0
        %v5780 = vsel %vm382, %v5771, 0
        %v5783 = vsel %vm382, %v5772, 0
        %5785 = vmatprep.subr.bf16.mxu0 0
        %5786 = vmatpush1.bf16.msra.mxu0 0
        %5787 = vmatprep.subr.bf16.mxu0 0
        %5788 = vmatpush1.bf16.msra.mxu0 0
        %5789 = vmatprep.subr.bf16.mxu0 0
        %5790 = vmatpush1.bf16.msra.mxu0 0
        %5791 = vmatprep.subr.bf16.mxu0 0
        %5792 = vmatpush1.bf16.msra.mxu0 0
        %5793 = vmatprep.subr.bf16.mxu0 0
        %5794 = vmatpush1.bf16.msra.mxu0 0
        %5795 = vmatprep.subr.bf16.mxu0 0
        %5796 = vmatpush1.bf16.msra.mxu0 0
        %5797 = vmatprep.subr.bf16.mxu0 0
        %5798 = vmatpush1.bf16.msra.mxu0 0
        %5799 = vmatprep.subr.bf16.mxu0 %v5780
        %5800 = vmatpush1.bf16.msra.mxu0 %v5777
        %5801 = vmatprep.subr.bf16.mxu0 0
        %5802 = vmatpush2.bf16.msra.mxu0 0
        %5803 = vmatprep.subr.bf16.mxu0 0
        %5804 = vmatpush2.bf16.msra.mxu0 0
        %5805 = vmatprep.subr.bf16.mxu0 0
        %5806 = vmatpush2.bf16.msra.mxu0 0
        %5807 = vmatprep.subr.bf16.mxu0 0
        %5808 = vmatpush2.bf16.msra.mxu0 0
        %5809 = vmatprep.subr.bf16.mxu0 0
        %5810 = vmatpush2.bf16.msra.mxu0 0
        %5811 = vmatprep.subr.bf16.mxu0 0
        %5812 = vmatpush2.bf16.msra.mxu0 0
        %5813 = vmatprep.subr.bf16.mxu0 0
        %5814 = vmatpush2.bf16.msra.mxu0 0
        %5815 = vmatprep.subr.bf16.mxu0 0
        %5816 = vmatpush2.bf16.msra.mxu0 0
        %5817 = vmatprep.mubr.bf16.mxu0 0
        %5818 = vmatmul.mubr.bf16.gmra.mxu0 %v5774
        %v5819 = vpop.f32.mrf.mxu0
        %v5820 = vadd.f32 0.0, %v5819
        %v5821 = vpop.f32.mrf.mxu0
        %v5822 = vadd.f32 0.0, %v5821
        %v5823 = vpop.f32.mrf.mxu0
        %v5824 = vpop.f32.mrf.mxu0
        %5825 = vdwg.mxu0
        %5826 = vmatprep.subr.bf16.mxu0 0
        %5827 = vmatpush1.bf16.msra.mxu0 0
        %5828 = vmatprep.subr.bf16.mxu0 0
        %5829 = vmatpush1.bf16.msra.mxu0 0
        %5830 = vmatprep.subr.bf16.mxu0 0
        %5831 = vmatpush1.bf16.msra.mxu0 0
        %5832 = vmatprep.subr.bf16.mxu0 0
        %5833 = vmatpush1.bf16.msra.mxu0 0
        %5834 = vmatprep.subr.bf16.mxu0 0
        %5835 = vmatpush1.bf16.msra.mxu0 0
        %5836 = vmatprep.subr.bf16.mxu0 0
        %5837 = vmatpush1.bf16.msra.mxu0 0
        %5838 = vmatprep.subr.bf16.mxu0 0
        %5839 = vmatpush1.bf16.msra.mxu0 0
        %5840 = vmatprep.subr.bf16.mxu0 0
        %5841 = vmatpush1.bf16.msra.mxu0 %v5783
        %5842 = vmatprep.subr.bf16.mxu0 0
        %5843 = vmatpush2.bf16.msra.mxu0 0
        %5844 = vmatprep.subr.bf16.mxu0 0
        %5845 = vmatpush2.bf16.msra.mxu0 0
        %5846 = vmatprep.subr.bf16.mxu0 0
        %5847 = vmatpush2.bf16.msra.mxu0 0
        %5848 = vmatprep.subr.bf16.mxu0 0
        %5849 = vmatpush2.bf16.msra.mxu0 0
        %5850 = vmatprep.subr.bf16.mxu0 0
        %5851 = vmatpush2.bf16.msra.mxu0 0
        %5852 = vmatprep.subr.bf16.mxu0 0
        %5853 = vmatpush2.bf16.msra.mxu0 0
        %5854 = vmatprep.subr.bf16.mxu0 0
        %5855 = vmatpush2.bf16.msra.mxu0 0
        %5856 = vmatprep.subr.bf16.mxu0 0
        %5857 = vmatpush2.bf16.msra.mxu0 0
        %5858 = vmatprep.mubr.bf16.mxu0 0
        %5859 = vmatmul.mubr.bf16.gmra.mxu0 %v5774
        %v5860 = vpop.f32.mrf.mxu0
        %v5861 = vadd.f32 0.0, %v5860
        %v5862 = vpop.f32.mrf.mxu0
        %v5863 = vpop.f32.mrf.mxu0
        %v5864 = vpop.f32.mrf.mxu0
        %5865 = vdwg.mxu0
        %v5866 = vadd.f32 %v5757, %v5820
        %v5867 = vadd.f32 %v5758, %v5822
        %v5868 = vadd.f32 %v5759, %v5861
        %v5869 = vld [vmem:[#allocation11] sm:$0xff]
        %5871 = vset.pattern.permute.xlu0 0
        %5872 = vperm.xlu0 %5871, %v5869
        %v5873 = vpop.permute.xlu0 %5872
        %v5875 = vadd.f32 %v5866, %v5873
        %v5876 = vadd.f32 %v5867, %v5873
        %v5877 = vadd.f32 %v5868, %v5873
        %v5878 = vrot.slane %v292, 4
        %v5879 = vrot.slane %v293, 4
        %vm5880 = vcmask 1043456
        %v5881 = vsel %vm5880, %v5878, %v5879
        %v5884 = vunpack.c.l.bf16 %v5881
        %v5885 = vunpack.c.h.bf16 %v5881
        %v5886 = vunpack.c.l.bf16 %v5879
        %v5887 = vadd.f32 %v5884, %v5875
        %v5888 = vadd.f32 %v5885, %v5876
        %v5889 = vadd.f32 %v5886, %v5877
        %v5890 = vmax.f32 %v5887, 0.0
        %v5891 = vmax.f32 %v5888, 0.0
        %v5892 = vmax.f32 %v5889, 0.0
        %5893 = vst [vmem:[%s290] sm:$0xff] %v5890
        %5894 = vst [vmem:[%s290 + $0x8] sm:$0xff] %v5891
        %5895 = vst [vmem:[%s290 + $0x10] sm:$0xff] %v5892
        %s5896 = sand.u32 %s142, 1
        %s5897 = scalar_lea.sflag [#allocation5], %s5896
        %s5898 = sand.u32 %s142, 1
        %s5899 = smul.addr %s5898, 24
        %s5900 = scalar_lea.vmem [#allocation12], %s5899
        // Predicated region
        $region61: #{tpu_custom_call.1} parent=39 // pred_check
          %p5901 = pneg %p152
        $region62: #{tpu_custom_call.1} parent=39 // pred_check_branch
          %5903 = sbr.rel (%p5901) target = $region64
        $region63: #{tpu_custom_call.1} parent=39 // pred_region
          %s5905 = ssub.s32 384, 384
          %5906 = vsyncadd %s5897, %s5905
          %s5907 = smul.addr %s24, 3
          %s5908 = smul.addr %s5907, 128
          %s5909 = scalar_lea.hbm %s5, %s5908
          %s5911 = sshll.u32 %s5900, 4
          %s5912 = int_to_ptr.vmem [resolvable:$true] %s5911
          %5914 = dma.vmem_to_hbm [thread:$0]  %s5912, 384, %s5909, %s5897
        $region64: #{tpu_custom_call.1} parent=39 // pred_fallthru
          _
      $region40: #{tpu_custom_call.1} parent=5 // pred_fallthru
        _
      %p5915 = scmp.le.s32.totalorder 2, %s19
      // Predicated region
      $region65: #{tpu_custom_call.1} parent=5 // pred_check
        %p5916 = pneg %p5915
      $region66: #{tpu_custom_call.1} parent=5 // pred_check_branch
        %5918 = sbr.rel (%p5916) target = $region68
      $region67: #{tpu_custom_call.1} parent=5 // pred_region
        %s5919 = ssub.s32 %s19, 2
        // Predicated region
        $region69: #{tpu_custom_call.1} parent=67 // pred_check
          %p5920 = pneg %p158
        $region70: #{tpu_custom_call.1} parent=67 // pred_check_branch
          %5922 = sbr.rel (%p5920) target = $region72
        $region71: #{tpu_custom_call.1} parent=67 // pred_region
          %s5923 = sand.u32 %s143, 1
          %s5924 = scalar_lea.sflag [#allocation5], %s5923
          %s5925 = sand.u32 %s143, 1
          %s5926 = smul.addr %s5925, 24
          %s5927 = scalar_lea.vmem [#allocation12], %s5926
          %5928 = dma.done %s5924, 384
        $region72: #{tpu_custom_call.1} parent=67 // pred_fallthru
          _
      $region68: #{tpu_custom_call.1} parent=5 // pred_fallthru
        _
    $region6: #{tpu_custom_call.1} parent=1 // loop_footer
      %s23 = sadd.s32 1, %s19
    $region7: #{tpu_custom_call.1} parent=1 // loop_footer_branch
      %18 = sbr.rel target = $region3
    $region8: #{tpu_custom_call.1} parent=1 // loop_exit
      _
    %5929 = vsyncpa [#allocation4], 1
    %s5930 = scalar_lea.sflag [#allocation4], 1
    %5931 = vsyncpa %s5930, 1
    %5932 = vsyncpa [#allocation7], 1
    %5933 = vsyncpa [#allocation10], 1
    %5934 = vsyncpa [#allocation5], 1
    %s5935 = scalar_lea.sflag [#allocation5], 1
    %5936 = vsyncpa %s5935, 1

</llo_original>
